<compile_context>
chip_gen: v7x
topology: tpu7x:2x2x1
jax: 0.10.0
libtpu: 0.0.40
codegen_flags: <defaults>
</compile_context>

<pallas_src>
import functools
import math

import jax
import jax.numpy as jnp
from jax.experimental import pallas as pl
from jax.experimental.pallas import tpu as pltpu


# ---------------------------- in-kernel helpers ------------------------------

def _layernorm(x, g, b, eps=1e-6):
    # eps=1e-6 matches LayerNorm(config.hidden_size, eps=1e-06) in vit_seg_modeling.
    mean = jnp.mean(x, axis=-1, keepdims=True)
    d = x - mean
    var = jnp.mean(d * d, axis=-1, keepdims=True)
    return d * jax.lax.rsqrt(var + eps) * g + b


def _gelu_tanh(x):
    # TODO(synk): PyTorch F.gelu defaults to the exact erf form; the tanh approximation
    # (deviation ~1e-3) is used to guarantee Mosaic lowering on all TPU generations.
    c = math.sqrt(2.0 / math.pi)
    return 0.5 * x * (1.0 + jnp.tanh(c * (x + 0.044715 * x * x * x)))


# ------------------------------ Pallas kernel --------------------------------

def _encoder_kernel(x_ref, ln1_g, ln1_b, wqkv, bqkv, wo, bo, ln2_g, ln2_b,
                    w1, b1, w2, b2, lnf_g, lnf_b, out_ref,
                    x_acc, ctx_scr, *, num_heads):
    """One layer step of the fused encoder. Grid = (batch, layer)."""
    layer = pl.program_id(1)
    n_layers = pl.num_programs(1)

    @pl.when(layer == 0)
    def _():
        x_acc[...] = x_ref[...].astype(jnp.float32)

    x = x_acc[...]                                            # (S, H) f32, VMEM-resident
    seq, hidden = x.shape
    head_dim = hidden // num_heads
    scale = 1.0 / math.sqrt(head_dim)

    # ---- attention sub-block: x = x + Wo(MHSA(LN1(x))) + bo ------------------
    xn = _layernorm(x, ln1_g[...], ln1_b[...])
    qkv = jnp.dot(xn.astype(jnp.bfloat16), wqkv[...],
                  preferred_element_type=jnp.float32) + bqkv[...]
    # Fold 1/sqrt(head_dim) into q; hoist full-width bf16 casts out of the head loop.
    q = (qkv[:, 0 * hidden:1 * hidden] * scale).astype(jnp.bfloat16)
    k = qkv[:, 1 * hidden:2 * hidden].astype(jnp.bfloat16)
    v = qkv[:, 2 * hidden:3 * hidden].astype(jnp.bfloat16)

    # Per-head softmax attention; each head's context is stored into a lane-contiguous
    # (S, H) VMEM scratch so the scores/probs live ranges end at the store and the
    # output projection runs as ONE full-K matmul afterwards.
    # TODO(synk): a fori_loop over heads would need dynamic sub-128 lane slices; with
    # num_heads=4 the static loop keeps only one head's (S,S) intermediates hot anyway.
    for h in range(num_heads):
        lo = h * head_dim
        q_h = q[:, lo:lo + head_dim]
        k_h = k[:, lo:lo + head_dim]
        v_h = v[:, lo:lo + head_dim]
        scores = jnp.einsum("qd,kd->qk", q_h, k_h,
                            preferred_element_type=jnp.float32)          # (S, S)
        m = jnp.max(scores, axis=-1, keepdims=True)
        p = jnp.exp(scores - m)
        denom = jnp.sum(p, axis=-1, keepdims=True)
        ctx_h = jnp.dot(p.astype(jnp.bfloat16), v_h,
                        preferred_element_type=jnp.float32)              # (S, hd)
        # Deferred softmax normalization: scale the (S, hd) context, not (S, S) probs.
        ctx_scr[:, lo:lo + head_dim] = ctx_h * pl.reciprocal(denom, approx=True)

    ctx = ctx_scr[...].astype(jnp.bfloat16)                               # (S, H)
    attn = jnp.dot(ctx, wo[...], preferred_element_type=jnp.float32) + bo[...]
    # attn_dropout / proj_dropout are identity in eval mode.
    x = x + attn

    # ---- MLP sub-block: x = x + FC2(GELU(FC1(LN2(x)))) -----------------------
    xn2 = _layernorm(x, ln2_g[...], ln2_b[...])
    h1 = jnp.dot(xn2.astype(jnp.bfloat16), w1[...],
                 preferred_element_type=jnp.float32) + b1[...]
    h1 = _gelu_tanh(h1)
    mlp = jnp.dot(h1.astype(jnp.bfloat16), w2[...],
                  preferred_element_type=jnp.float32) + b2[...]
    x = x + mlp

    x_acc[...] = x

    @pl.when(layer == n_layers - 1)
    def _():
        # Fused final encoder LayerNorm on the last layer step.
        out_ref[...] = _layernorm(x, lnf_g[...], lnf_b[...]).astype(out_ref.dtype)


# --------------------------- pallas_call wrapper ------------------------------

def encoder_forward(hidden_states, stacked, *, num_heads):
    """Encoder.forward: stack of Blocks + encoder_norm, fused into one pallas_call.

    Returns (encoded, attn_weights). vis=False path: attn_weights == [].
    """
    b, s, h = hidden_states.shape
    n_layers, _, m = stacked["w1"].shape

    def layer_spec(*tail):
        # Per-layer parameter: leading (L,) axis indexed by the layer grid axis.
        return pl.BlockSpec((None,) + tail,
                            lambda bi, li, _n=len(tail): (li,) + (0,) * _n)

    def const_spec(*shape):
        return pl.BlockSpec(shape, lambda bi, li, _n=len(shape): (0,) * _n)

    kernel = functools.partial(_encoder_kernel, num_heads=num_heads)
    encoded = pl.pallas_call(
        kernel,
        out_shape=jax.ShapeDtypeStruct((b, s, h), jnp.float32),
        grid=(b, n_layers),
        in_specs=[
            pl.BlockSpec((None, s, h), lambda bi, li: (bi, 0, 0)),  # x (per-batch tile)
            layer_spec(1, h), layer_spec(1, h),                     # attention_norm g,b
            layer_spec(h, 3 * h), layer_spec(1, 3 * h),             # fused q|k|v
            layer_spec(h, h), layer_spec(1, h),                     # attention out proj
            layer_spec(1, h), layer_spec(1, h),                     # ffn_norm g,b
            layer_spec(h, m), layer_spec(1, m),                     # fc1
            layer_spec(m, h), layer_spec(1, h),                     # fc2
            const_spec(1, h), const_spec(1, h),                     # encoder_norm g,b
        ],
        out_specs=pl.BlockSpec((None, s, h), lambda bi, li: (bi, 0, 0)),
        scratch_shapes=[
            pltpu.VMEM((s, h), jnp.float32),   # activation accumulator across layers
            pltpu.VMEM((s, h), jnp.float32),   # per-head context assembly buffer
        ],
        compiler_params=pltpu.CompilerParams(
            dimension_semantics=("parallel", "arbitrary")),
    )(
        hidden_states.astype(jnp.float32),
        stacked["ln1_g"], stacked["ln1_b"],
        stacked["wqkv"], stacked["bqkv"],
        stacked["wo"], stacked["bo"],
        stacked["ln2_g"], stacked["ln2_b"],
        stacked["w1"], stacked["b1"],
        stacked["w2"], stacked["b2"],
        stacked["lnf_g"], stacked["lnf_b"],
    )
    # TODO(synk): vis=True attention-weight outputs are not materialized (vis=False path).
    return encoded, []


def prepare_params(params):
    """Stack per-layer weights to (L, ...), pre-cast matmul weights to bf16 and
    pre-reshape biases/norm params once (no per-call converts/reshapes)."""
    layers = params["layers"]
    n_layers = len(layers)
    h = layers[0]["wqkv"].shape[0]
    m = layers[0]["w1"].shape[1]

    def stack(name, dtype, reshape=None):
        arr = jnp.stack([layers[i][name] for i in range(n_layers)], axis=0)
        if reshape is not None:
            arr = arr.reshape((n_layers,) + reshape)
        return arr.astype(dtype)

    return {
        "ln1_g": stack("ln1_g", jnp.float32, (1, h)),
        "ln1_b": stack("ln1_b", jnp.float32, (1, h)),
        "wqkv": stack("wqkv", jnp.bfloat16),
        "bqkv": stack("bqkv", jnp.float32, (1, 3 * h)),
        "wo": stack("wo", jnp.bfloat16),
        "bo": stack("bo", jnp.float32, (1, h)),
        "ln2_g": stack("ln2_g", jnp.float32, (1, h)),
        "ln2_b": stack("ln2_b", jnp.float32, (1, h)),
        "w1": stack("w1", jnp.bfloat16),
        "b1": stack("b1", jnp.float32, (1, m)),
        "w2": stack("w2", jnp.bfloat16),
        "b2": stack("b2", jnp.float32, (1, h)),
        "lnf_g": params["lnf_g"].reshape(1, h).astype(jnp.float32),
        "lnf_b": params["lnf_b"].reshape(1, h).astype(jnp.float32),
    }


# --------------------------- reference (pure jnp, f32) ------------------------

def encoder_reference(x, params, *, num_heads):
    hidden = x.shape[-1]
    hd = hidden // num_heads

    def ln(t, g, b, eps=1e-6):
        mu = t.mean(-1, keepdims=True)
        var = ((t - mu) ** 2).mean(-1, keepdims=True)
        return (t - mu) / jnp.sqrt(var + eps) * g + b

    for lp in params["layers"]:
        h0 = x
        xn = ln(x, lp["ln1_g"], lp["ln1_b"])
        qkv = xn @ lp["wqkv"] + lp["bqkv"]
        q, k, v = jnp.split(qkv, 3, axis=-1)

        def heads(t):
            b, s, _ = t.shape
            return t.reshape(b, s, num_heads, hd).transpose(0, 2, 1, 3)

        qh, kh, vh = heads(q), heads(k), heads(v)
        scores = jnp.einsum("bhqd,bhkd->bhqk", qh, kh) / math.sqrt(hd)
        probs = jax.nn.softmax(scores, axis=-1)
        ctx = jnp.einsum("bhqk,bhkd->bhqd", probs, vh)
        ctx = ctx.transpose(0, 2, 1, 3).reshape(x.shape)
        x = ctx @ lp["wo"] + lp["bo"] + h0

        h0 = x
        xn2 = ln(x, lp["ln2_g"], lp["ln2_b"])
        y = _gelu_tanh(xn2 @ lp["w1"] + lp["b1"])
        x = y @ lp["w2"] + lp["b2"] + h0
    return ln(x, params["lnf_g"], params["lnf_b"])


# ------------------------------- params init ----------------------------------

def init_params(key, hidden, mlp_dim, num_layers):
    keys = jax.random.split(key, num_layers + 1)
    layers = []
    for li in range(num_layers):
        ks = jax.random.split(keys[li], 12)

        def nrm(k, shape, scale):
            return scale * jax.random.normal(k, shape, jnp.float32)

        layers.append({
            "ln1_g": 1.0 + nrm(ks[0], (hidden,), 0.05),
            "ln1_b": nrm(ks[1], (hidden,), 0.05),
            "wqkv": nrm(ks[2], (hidden, 3 * hidden), 1.0 / math.sqrt(hidden)),
            "bqkv": nrm(ks[3], (3 * hidden,), 0.02),
            "wo": nrm(ks[4], (hidden, hidden), 1.0 / math.sqrt(hidden)),
            "bo": nrm(ks[5], (hidden,), 0.02),
            "ln2_g": 1.0 + nrm(ks[6], (hidden,), 0.05),
            "ln2_b": nrm(ks[7], (hidden,), 0.05),
            "w1": nrm(ks[8], (hidden, mlp_dim), 1.0 / math.sqrt(hidden)),
            "b1": nrm(ks[9], (mlp_dim,), 1e-3),
            "w2": nrm(ks[10], (mlp_dim, hidden), 1.0 / math.sqrt(mlp_dim)),
            "b2": nrm(ks[11], (hidden,), 1e-3),
        })
    kf = jax.random.split(keys[-1], 2)
    return {
        "layers": layers,
        "lnf_g": 1.0 + 0.05 * jax.random.normal(kf[0], (hidden,), jnp.float32),
        "lnf_b": 0.05 * jax.random.normal(kf[1], (hidden,), jnp.float32),
    }


if __name__ == "__main__":
    key = jax.random.PRNGKey(0)
    batch, seq, hidden = 2, 128, 128          # lane-dense: seq/hidden multiples of 128
    num_heads, mlp_dim, num_layers = 4, 256, 2

    k_x, k_p = jax.random.split(key)
    hidden_states = jax.random.normal(k_x, (batch, seq, hidden), jnp.float32)
    params = init_params(k_p, hidden, mlp_dim, num_layers)
    stacked = prepare_params(params)

    encoded, attn_weights = encoder_forward(hidden_states, stacked, num_heads=num_heads)
    encoded = jax.block_until_ready(encoded)

    assert encoded.shape == (batch, seq, hidden)
    assert attn_weights == []                  # vis=False path

    ref = encoder_reference(hidden_states, params, num_heads=num_heads)
    max_err = float(jnp.max(jnp.abs(encoded - ref)))
    assert max_err < 5e-2, f"max abs error vs f32 reference too large: {max_err}"
    print("KERNEL_OK")
</pallas_src>

<mosaic_0001>
module attributes {stable_mosaic.version = 11 : i64} {
  func.func @_encoder_kernel(%arg0: i32, %arg1: i32, %arg2: memref<1x128x128xf32, #tpu.memory_space<vmem>>, %arg3: memref<1x1x128xf32, #tpu.memory_space<vmem>>, %arg4: memref<1x1x128xf32, #tpu.memory_space<vmem>>, %arg5: memref<1x128x384xbf16, #tpu.memory_space<vmem>>, %arg6: memref<1x1x384xf32, #tpu.memory_space<vmem>>, %arg7: memref<1x128x128xbf16, #tpu.memory_space<vmem>>, %arg8: memref<1x1x128xf32, #tpu.memory_space<vmem>>, %arg9: memref<1x1x128xf32, #tpu.memory_space<vmem>>, %arg10: memref<1x1x128xf32, #tpu.memory_space<vmem>>, %arg11: memref<1x128x256xbf16, #tpu.memory_space<vmem>>, %arg12: memref<1x1x256xf32, #tpu.memory_space<vmem>>, %arg13: memref<1x256x128xbf16, #tpu.memory_space<vmem>>, %arg14: memref<1x1x128xf32, #tpu.memory_space<vmem>>, %arg15: memref<1x128xf32, #tpu.memory_space<vmem>>, %arg16: memref<1x128xf32, #tpu.memory_space<vmem>>, %arg17: memref<1x128x128xf32, #tpu.memory_space<vmem>>, %arg18: memref<128x128xf32, #tpu.memory_space<vmem>>, %arg19: memref<128x128xf32, #tpu.memory_space<vmem>>) attributes {dimension_semantics = [#tpu.dimension_semantics<parallel>, #tpu.dimension_semantics<arbitrary>], iteration_bounds = array<i64: 2, 2>, scalar_prefetch = 0 : i64, scratch_operands = 2 : i64, tpu.core_type = #tpu.core_type<tc>, window_params = [{transform_indices = @transform_0, window_bounds = array<i64: 1, 128, 128>}, {transform_indices = @transform_1, window_bounds = array<i64: 1, 1, 128>}, {transform_indices = @transform_2, window_bounds = array<i64: 1, 1, 128>}, {transform_indices = @transform_3, window_bounds = array<i64: 1, 128, 384>}, {transform_indices = @transform_4, window_bounds = array<i64: 1, 1, 384>}, {transform_indices = @transform_5, window_bounds = array<i64: 1, 128, 128>}, {transform_indices = @transform_6, window_bounds = array<i64: 1, 1, 128>}, {transform_indices = @transform_7, window_bounds = array<i64: 1, 1, 128>}, {transform_indices = @transform_8, window_bounds = array<i64: 1, 1, 128>}, {transform_indices = @transform_9, window_bounds = array<i64: 1, 128, 256>}, {transform_indices = @transform_10, window_bounds = array<i64: 1, 1, 256>}, {transform_indices = @transform_11, window_bounds = array<i64: 1, 256, 128>}, {transform_indices = @transform_12, window_bounds = array<i64: 1, 1, 128>}, {pipeline_mode = #tpu.pipeline_mode<synchronous>, transform_indices = @transform_13, window_bounds = array<i64: 1, 128>}, {pipeline_mode = #tpu.pipeline_mode<synchronous>, transform_indices = @transform_14, window_bounds = array<i64: 1, 128>}, {transform_indices = @transform_15, window_bounds = array<i64: 1, 128, 128>}]} {
    %c0_i32 = arith.constant 0 : i32
    %0 = arith.cmpi eq, %arg1, %c0_i32 : i32
    %1 = arith.extui %0 : i1 to i32
    %c0_i32_0 = arith.constant 0 : i32
    %2 = arith.cmpi ne, %1, %c0_i32_0 : i32
    scf.if %2 {
      %c0_82 = arith.constant 0 : index
      %c0_83 = arith.constant 0 : index
      %c0_84 = arith.constant 0 : index
      %180 = vector.load %arg2[%c0_82, %c0_83, %c0_84] : memref<1x128x128xf32, #tpu.memory_space<vmem>>, vector<1x128x128xf32>
      %181 = vector.shape_cast %180 : vector<1x128x128xf32> to vector<128x128xf32>
      %c0_85 = arith.constant 0 : index
      %c0_86 = arith.constant 0 : index
      %182 = vector.load %arg18[%c0_85, %c0_86] : memref<128x128xf32, #tpu.memory_space<vmem>>, vector<128x128xf32>
      tpu.vector_store %arg18[%c0_85, %c0_86], %181 {strides = array<i32>} : memref<128x128xf32, #tpu.memory_space<vmem>>, vector<128x128xf32>,
    } else {
    }
    %c0 = arith.constant 0 : index
    %c0_1 = arith.constant 0 : index
    %3 = vector.load %arg18[%c0, %c0_1] : memref<128x128xf32, #tpu.memory_space<vmem>>, vector<128x128xf32>
    %c0_2 = arith.constant 0 : index
    %c0_3 = arith.constant 0 : index
    %c0_4 = arith.constant 0 : index
    %4 = vector.load %arg3[%c0_2, %c0_3, %c0_4] : memref<1x1x128xf32, #tpu.memory_space<vmem>>, vector<1x1x128xf32>
    %5 = vector.shape_cast %4 : vector<1x1x128xf32> to vector<1x128xf32>
    %c0_5 = arith.constant 0 : index
    %c0_6 = arith.constant 0 : index
    %c0_7 = arith.constant 0 : index
    %6 = vector.load %arg4[%c0_5, %c0_6, %c0_7] : memref<1x1x128xf32, #tpu.memory_space<vmem>>, vector<1x1x128xf32>
    %7 = vector.shape_cast %6 : vector<1x1x128xf32> to vector<1x128xf32>
    %cst = arith.constant dense<0.000000e+00> : vector<128xf32>
    %8 = vector.multi_reduction <add>, %3, %cst [1] : vector<128x128xf32> to vector<128xf32>
    %9 = vector.shape_cast %8 : vector<128xf32> to vector<128x1xf32>
    %cst_8 = arith.constant 1.280000e+02 : f32
    %10 = vector.broadcast %cst_8 : f32 to vector<128x1xf32>
    %11 = arith.divf %9, %10 : vector<128x1xf32>
    %12 = vector.broadcast %11 : vector<128x1xf32> to vector<128x128xf32>
    %13 = arith.subf %3, %12 : vector<128x128xf32>
    %14 = arith.mulf %13, %13 : vector<128x128xf32>
    %cst_9 = arith.constant dense<0.000000e+00> : vector<128xf32>
    %15 = vector.multi_reduction <add>, %14, %cst_9 [1] : vector<128x128xf32> to vector<128xf32>
    %16 = vector.shape_cast %15 : vector<128xf32> to vector<128x1xf32>
    %cst_10 = arith.constant 1.280000e+02 : f32
    %17 = vector.broadcast %cst_10 : f32 to vector<128x1xf32>
    %18 = arith.divf %16, %17 : vector<128x1xf32>
    %cst_11 = arith.constant 9.99999997E-7 : f32
    %19 = vector.broadcast %cst_11 : f32 to vector<128x1xf32>
    %20 = arith.addf %18, %19 : vector<128x1xf32>
    %21 = math.rsqrt %20 : vector<128x1xf32>
    %22 = vector.broadcast %21 : vector<128x1xf32> to vector<128x128xf32>
    %23 = arith.mulf %13, %22 : vector<128x128xf32>
    %24 = vector.broadcast %5 : vector<1x128xf32> to vector<128x128xf32>
    %25 = arith.mulf %23, %24 : vector<128x128xf32>
    %26 = vector.broadcast %7 : vector<1x128xf32> to vector<128x128xf32>
    %27 = arith.addf %25, %26 : vector<128x128xf32>
    %28 = arith.truncf %27 : vector<128x128xf32> to vector<128x128xbf16>
    %c0_12 = arith.constant 0 : index
    %c0_13 = arith.constant 0 : index
    %c0_14 = arith.constant 0 : index
    %29 = vector.load %arg5[%c0_12, %c0_13, %c0_14] : memref<1x128x384xbf16, #tpu.memory_space<vmem>>, vector<1x128x384xbf16>
    %30 = vector.shape_cast %29 : vector<1x128x384xbf16> to vector<128x384xbf16>
    %cst_15 = arith.constant dense<0.000000e+00> : vector<128x384xf32>
    %31 = tpu.matmul %28, %30, %cst_15 {dimension_numbers = #tpu.dot_dimension_numbers<[1], [0], [0], [1], [0, 0, 1, 1], [], []>} : vector<128x128xbf16>, vector<128x384xbf16>, vector<128x384xf32> -> vector<128x384xf32>
    %c0_16 = arith.constant 0 : index
    %c0_17 = arith.constant 0 : index
    %c0_18 = arith.constant 0 : index
    %32 = vector.load %arg6[%c0_16, %c0_17, %c0_18] : memref<1x1x384xf32, #tpu.memory_space<vmem>>, vector<1x1x384xf32>
    %33 = vector.shape_cast %32 : vector<1x1x384xf32> to vector<1x384xf32>
    %34 = vector.broadcast %33 : vector<1x384xf32> to vector<128x384xf32>
    %35 = arith.addf %31, %34 : vector<128x384xf32>
    %36 = vector.extract_strided_slice %35 {offsets = [0, 0], sizes = [128, 128], strides = [1, 1]} : vector<128x384xf32> to vector<128x128xf32>
    %cst_19 = arith.constant 0.176776692 : f32
    %37 = vector.broadcast %cst_19 : f32 to vector<128x128xf32>
    %38 = arith.mulf %36, %37 : vector<128x128xf32>
    %39 = arith.truncf %38 : vector<128x128xf32> to vector<128x128xbf16>
    %40 = vector.extract_strided_slice %35 {offsets = [0, 128], sizes = [128, 128], strides = [1, 1]} : vector<128x384xf32> to vector<128x128xf32>
    %41 = arith.truncf %40 : vector<128x128xf32> to vector<128x128xbf16>
    %42 = vector.extract_strided_slice %35 {offsets = [0, 256], sizes = [128, 128], strides = [1, 1]} : vector<128x384xf32> to vector<128x128xf32>
    %43 = arith.truncf %42 : vector<128x128xf32> to vector<128x128xbf16>
    %44 = vector.extract_strided_slice %39 {offsets = [0, 0], sizes = [128, 32], strides = [1, 1]} : vector<128x128xbf16> to vector<128x32xbf16>
    %45 = vector.extract_strided_slice %41 {offsets = [0, 0], sizes = [128, 32], strides = [1, 1]} : vector<128x128xbf16> to vector<128x32xbf16>
    %46 = vector.extract_strided_slice %43 {offsets = [0, 0], sizes = [128, 32], strides = [1, 1]} : vector<128x128xbf16> to vector<128x32xbf16>
    "tpu.trace_start"() <{level = 10 : i32, message = "qd,kd->qk"}> : () -> ()
    %cst_20 = arith.constant dense<0.000000e+00> : vector<128x128xf32>
    %47 = tpu.matmul %44, %45, %cst_20 {dimension_numbers = #tpu.dot_dimension_numbers<[1], [1], [0], [0], [0, 0, 1, 0], [], []>} : vector<128x32xbf16>, vector<128x32xbf16>, vector<128x128xf32> -> vector<128x128xf32>
    "tpu.trace_stop"() : () -> ()
    %cst_21 = arith.constant dense<0xFF800000> : vector<128xf32>
    %48 = vector.multi_reduction <maximumf>, %47, %cst_21 [1] : vector<128x128xf32> to vector<128xf32>
    %49 = vector.shape_cast %48 : vector<128xf32> to vector<128x1xf32>
    %50 = vector.broadcast %49 : vector<128x1xf32> to vector<128x128xf32>
    %51 = arith.subf %47, %50 : vector<128x128xf32>
    %52 = math.exp %51 : vector<128x128xf32>
    %cst_22 = arith.constant dense<0.000000e+00> : vector<128xf32>
    %53 = vector.multi_reduction <add>, %52, %cst_22 [1] : vector<128x128xf32> to vector<128xf32>
    %54 = vector.shape_cast %53 : vector<128xf32> to vector<128x1xf32>
    %55 = arith.truncf %52 : vector<128x128xf32> to vector<128x128xbf16>
    %cst_23 = arith.constant dense<0.000000e+00> : vector<128x32xf32>
    %56 = tpu.matmul %55, %46, %cst_23 {dimension_numbers = #tpu.dot_dimension_numbers<[1], [0], [0], [1], [0, 0, 1, 1], [], []>} : vector<128x128xbf16>, vector<128x32xbf16>, vector<128x32xf32> -> vector<128x32xf32>
    %57 = tpu.reciprocal %54 {approx = true} : vector<128x1xf32> -> vector<128x1xf32>
    %58 = vector.broadcast %57 : vector<128x1xf32> to vector<128x32xf32>
    %59 = arith.mulf %56, %58 : vector<128x32xf32>
    %c0_24 = arith.constant 0 : index
    %c0_25 = arith.constant 0 : index
    %60 = vector.load %arg19[%c0_24, %c0_25] : memref<128x128xf32, #tpu.memory_space<vmem>>, vector<128x32xf32>
    tpu.vector_store %arg19[%c0_24, %c0_25], %59 {strides = array<i32>} : memref<128x128xf32, #tpu.memory_space<vmem>>, vector<128x32xf32>,
    %61 = vector.extract_strided_slice %39 {offsets = [0, 32], sizes = [128, 32], strides = [1, 1]} : vector<128x128xbf16> to vector<128x32xbf16>
    %62 = vector.extract_strided_slice %41 {offsets = [0, 32], sizes = [128, 32], strides = [1, 1]} : vector<128x128xbf16> to vector<128x32xbf16>
    %63 = vector.extract_strided_slice %43 {offsets = [0, 32], sizes = [128, 32], strides = [1, 1]} : vector<128x128xbf16> to vector<128x32xbf16>
    "tpu.trace_start"() <{level = 10 : i32, message = "qd,kd->qk"}> : () -> ()
    %cst_26 = arith.constant dense<0.000000e+00> : vector<128x128xf32>
    %64 = tpu.matmul %61, %62, %cst_26 {dimension_numbers = #tpu.dot_dimension_numbers<[1], [1], [0], [0], [0, 0, 1, 0], [], []>} : vector<128x32xbf16>, vector<128x32xbf16>, vector<128x128xf32> -> vector<128x128xf32>
    "tpu.trace_stop"() : () -> ()
    %cst_27 = arith.constant dense<0xFF800000> : vector<128xf32>
    %65 = vector.multi_reduction <maximumf>, %64, %cst_27 [1] : vector<128x128xf32> to vector<128xf32>
    %66 = vector.shape_cast %65 : vector<128xf32> to vector<128x1xf32>
    %67 = vector.broadcast %66 : vector<128x1xf32> to vector<128x128xf32>
    %68 = arith.subf %64, %67 : vector<128x128xf32>
    %69 = math.exp %68 : vector<128x128xf32>
    %cst_28 = arith.constant dense<0.000000e+00> : vector<128xf32>
    %70 = vector.multi_reduction <add>, %69, %cst_28 [1] : vector<128x128xf32> to vector<128xf32>
    %71 = vector.shape_cast %70 : vector<128xf32> to vector<128x1xf32>
    %72 = arith.truncf %69 : vector<128x128xf32> to vector<128x128xbf16>
    %cst_29 = arith.constant dense<0.000000e+00> : vector<128x32xf32>
    %73 = tpu.matmul %72, %63, %cst_29 {dimension_numbers = #tpu.dot_dimension_numbers<[1], [0], [0], [1], [0, 0, 1, 1], [], []>} : vector<128x128xbf16>, vector<128x32xbf16>, vector<128x32xf32> -> vector<128x32xf32>
    %74 = tpu.reciprocal %71 {approx = true} : vector<128x1xf32> -> vector<128x1xf32>
    %75 = vector.broadcast %74 : vector<128x1xf32> to vector<128x32xf32>
    %76 = arith.mulf %73, %75 : vector<128x32xf32>
    %c0_30 = arith.constant 0 : index
    %c32 = arith.constant 32 : index
    %77 = vector.load %arg19[%c0_30, %c32] : memref<128x128xf32, #tpu.memory_space<vmem>>, vector<128x32xf32>
    tpu.vector_store %arg19[%c0_30, %c32], %76 {strides = array<i32>} : memref<128x128xf32, #tpu.memory_space<vmem>>, vector<128x32xf32>,
    %78 = vector.extract_strided_slice %39 {offsets = [0, 64], sizes = [128, 32], strides = [1, 1]} : vector<128x128xbf16> to vector<128x32xbf16>
    %79 = vector.extract_strided_slice %41 {offsets = [0, 64], sizes = [128, 32], strides = [1, 1]} : vector<128x128xbf16> to vector<128x32xbf16>
    %80 = vector.extract_strided_slice %43 {offsets = [0, 64], sizes = [128, 32], strides = [1, 1]} : vector<128x128xbf16> to vector<128x32xbf16>
    "tpu.trace_start"() <{level = 10 : i32, message = "qd,kd->qk"}> : () -> ()
    %cst_31 = arith.constant dense<0.000000e+00> : vector<128x128xf32>
    %81 = tpu.matmul %78, %79, %cst_31 {dimension_numbers = #tpu.dot_dimension_numbers<[1], [1], [0], [0], [0, 0, 1, 0], [], []>} : vector<128x32xbf16>, vector<128x32xbf16>, vector<128x128xf32> -> vector<128x128xf32>
    "tpu.trace_stop"() : () -> ()
    %cst_32 = arith.constant dense<0xFF800000> : vector<128xf32>
    %82 = vector.multi_reduction <maximumf>, %81, %cst_32 [1] : vector<128x128xf32> to vector<128xf32>
    %83 = vector.shape_cast %82 : vector<128xf32> to vector<128x1xf32>
    %84 = vector.broadcast %83 : vector<128x1xf32> to vector<128x128xf32>
    %85 = arith.subf %81, %84 : vector<128x128xf32>
    %86 = math.exp %85 : vector<128x128xf32>
    %cst_33 = arith.constant dense<0.000000e+00> : vector<128xf32>
    %87 = vector.multi_reduction <add>, %86, %cst_33 [1] : vector<128x128xf32> to vector<128xf32>
    %88 = vector.shape_cast %87 : vector<128xf32> to vector<128x1xf32>
    %89 = arith.truncf %86 : vector<128x128xf32> to vector<128x128xbf16>
    %cst_34 = arith.constant dense<0.000000e+00> : vector<128x32xf32>
    %90 = tpu.matmul %89, %80, %cst_34 {dimension_numbers = #tpu.dot_dimension_numbers<[1], [0], [0], [1], [0, 0, 1, 1], [], []>} : vector<128x128xbf16>, vector<128x32xbf16>, vector<128x32xf32> -> vector<128x32xf32>
    %91 = tpu.reciprocal %88 {approx = true} : vector<128x1xf32> -> vector<128x1xf32>
    %92 = vector.broadcast %91 : vector<128x1xf32> to vector<128x32xf32>
    %93 = arith.mulf %90, %92 : vector<128x32xf32>
    %c0_35 = arith.constant 0 : index
    %c64 = arith.constant 64 : index
    %94 = vector.load %arg19[%c0_35, %c64] : memref<128x128xf32, #tpu.memory_space<vmem>>, vector<128x32xf32>
    tpu.vector_store %arg19[%c0_35, %c64], %93 {strides = array<i32>} : memref<128x128xf32, #tpu.memory_space<vmem>>, vector<128x32xf32>,
    %95 = vector.extract_strided_slice %39 {offsets = [0, 96], sizes = [128, 32], strides = [1, 1]} : vector<128x128xbf16> to vector<128x32xbf16>
    %96 = vector.extract_strided_slice %41 {offsets = [0, 96], sizes = [128, 32], strides = [1, 1]} : vector<128x128xbf16> to vector<128x32xbf16>
    %97 = vector.extract_strided_slice %43 {offsets = [0, 96], sizes = [128, 32], strides = [1, 1]} : vector<128x128xbf16> to vector<128x32xbf16>
    "tpu.trace_start"() <{level = 10 : i32, message = "qd,kd->qk"}> : () -> ()
    %cst_36 = arith.constant dense<0.000000e+00> : vector<128x128xf32>
    %98 = tpu.matmul %95, %96, %cst_36 {dimension_numbers = #tpu.dot_dimension_numbers<[1], [1], [0], [0], [0, 0, 1, 0], [], []>} : vector<128x32xbf16>, vector<128x32xbf16>, vector<128x128xf32> -> vector<128x128xf32>
    "tpu.trace_stop"() : () -> ()
    %cst_37 = arith.constant dense<0xFF800000> : vector<128xf32>
    %99 = vector.multi_reduction <maximumf>, %98, %cst_37 [1] : vector<128x128xf32> to vector<128xf32>
    %100 = vector.shape_cast %99 : vector<128xf32> to vector<128x1xf32>
    %101 = vector.broadcast %100 : vector<128x1xf32> to vector<128x128xf32>
    %102 = arith.subf %98, %101 : vector<128x128xf32>
    %103 = math.exp %102 : vector<128x128xf32>
    %cst_38 = arith.constant dense<0.000000e+00> : vector<128xf32>
    %104 = vector.multi_reduction <add>, %103, %cst_38 [1] : vector<128x128xf32> to vector<128xf32>
    %105 = vector.shape_cast %104 : vector<128xf32> to vector<128x1xf32>
    %106 = arith.truncf %103 : vector<128x128xf32> to vector<128x128xbf16>
    %cst_39 = arith.constant dense<0.000000e+00> : vector<128x32xf32>
    %107 = tpu.matmul %106, %97, %cst_39 {dimension_numbers = #tpu.dot_dimension_numbers<[1], [0], [0], [1], [0, 0, 1, 1], [], []>} : vector<128x128xbf16>, vector<128x32xbf16>, vector<128x32xf32> -> vector<128x32xf32>
    %108 = tpu.reciprocal %105 {approx = true} : vector<128x1xf32> -> vector<128x1xf32>
    %109 = vector.broadcast %108 : vector<128x1xf32> to vector<128x32xf32>
    %110 = arith.mulf %107, %109 : vector<128x32xf32>
    %c0_40 = arith.constant 0 : index
    %c96 = arith.constant 96 : index
    %111 = vector.load %arg19[%c0_40, %c96] : memref<128x128xf32, #tpu.memory_space<vmem>>, vector<128x32xf32>
    tpu.vector_store %arg19[%c0_40, %c96], %110 {strides = array<i32>} : memref<128x128xf32, #tpu.memory_space<vmem>>, vector<128x32xf32>,
    %c0_41 = arith.constant 0 : index
    %c0_42 = arith.constant 0 : index
    %112 = vector.load %arg19[%c0_41, %c0_42] : memref<128x128xf32, #tpu.memory_space<vmem>>, vector<128x128xf32>
    %113 = arith.truncf %112 : vector<128x128xf32> to vector<128x128xbf16>
    %c0_43 = arith.constant 0 : index
    %c0_44 = arith.constant 0 : index
    %c0_45 = arith.constant 0 : index
    %114 = vector.load %arg7[%c0_43, %c0_44, %c0_45] : memref<1x128x128xbf16, #tpu.memory_space<vmem>>, vector<1x128x128xbf16>
    %115 = vector.shape_cast %114 : vector<1x128x128xbf16> to vector<128x128xbf16>
    %cst_46 = arith.constant dense<0.000000e+00> : vector<128x128xf32>
    %116 = tpu.matmul %113, %115, %cst_46 {dimension_numbers = #tpu.dot_dimension_numbers<[1], [0], [0], [1], [0, 0, 1, 1], [], []>} : vector<128x128xbf16>, vector<128x128xbf16>, vector<128x128xf32> -> vector<128x128xf32>
    %c0_47 = arith.constant 0 : index
    %c0_48 = arith.constant 0 : index
    %c0_49 = arith.constant 0 : index
    %117 = vector.load %arg8[%c0_47, %c0_48, %c0_49] : memref<1x1x128xf32, #tpu.memory_space<vmem>>, vector<1x1x128xf32>
    %118 = vector.shape_cast %117 : vector<1x1x128xf32> to vector<1x128xf32>
    %119 = vector.broadcast %118 : vector<1x128xf32> to vector<128x128xf32>
    %120 = arith.addf %116, %119 : vector<128x128xf32>
    %121 = arith.addf %3, %120 : vector<128x128xf32>
    %c0_50 = arith.constant 0 : index
    %c0_51 = arith.constant 0 : index
    %c0_52 = arith.constant 0 : index
    %122 = vector.load %arg9[%c0_50, %c0_51, %c0_52] : memref<1x1x128xf32, #tpu.memory_space<vmem>>, vector<1x1x128xf32>
    %123 = vector.shape_cast %122 : vector<1x1x128xf32> to vector<1x128xf32>
    %c0_53 = arith.constant 0 : index
    %c0_54 = arith.constant 0 : index
    %c0_55 = arith.constant 0 : index
    %124 = vector.load %arg10[%c0_53, %c0_54, %c0_55] : memref<1x1x128xf32, #tpu.memory_space<vmem>>, vector<1x1x128xf32>
    %125 = vector.shape_cast %124 : vector<1x1x128xf32> to vector<1x128xf32>
    %cst_56 = arith.constant dense<0.000000e+00> : vector<128xf32>
    %126 = vector.multi_reduction <add>, %121, %cst_56 [1] : vector<128x128xf32> to vector<128xf32>
    %127 = vector.shape_cast %126 : vector<128xf32> to vector<128x1xf32>
    %cst_57 = arith.constant 1.280000e+02 : f32
    %128 = vector.broadcast %cst_57 : f32 to vector<128x1xf32>
    %129 = arith.divf %127, %128 : vector<128x1xf32>
    %130 = vector.broadcast %129 : vector<128x1xf32> to vector<128x128xf32>
    %131 = arith.subf %121, %130 : vector<128x128xf32>
    %132 = arith.mulf %131, %131 : vector<128x128xf32>
    %cst_58 = arith.constant dense<0.000000e+00> : vector<128xf32>
    %133 = vector.multi_reduction <add>, %132, %cst_58 [1] : vector<128x128xf32> to vector<128xf32>
    %134 = vector.shape_cast %133 : vector<128xf32> to vector<128x1xf32>
    %cst_59 = arith.constant 1.280000e+02 : f32
    %135 = vector.broadcast %cst_59 : f32 to vector<128x1xf32>
    %136 = arith.divf %134, %135 : vector<128x1xf32>
    %cst_60 = arith.constant 9.99999997E-7 : f32
    %137 = vector.broadcast %cst_60 : f32 to vector<128x1xf32>
    %138 = arith.addf %136, %137 : vector<128x1xf32>
    %139 = math.rsqrt %138 : vector<128x1xf32>
    %140 = vector.broadcast %139 : vector<128x1xf32> to vector<128x128xf32>
    %141 = arith.mulf %131, %140 : vector<128x128xf32>
    %142 = vector.broadcast %123 : vector<1x128xf32> to vector<128x128xf32>
    %143 = arith.mulf %141, %142 : vector<128x128xf32>
    %144 = vector.broadcast %125 : vector<1x128xf32> to vector<128x128xf32>
    %145 = arith.addf %143, %144 : vector<128x128xf32>
    %146 = arith.truncf %145 : vector<128x128xf32> to vector<128x128xbf16>
    %c0_61 = arith.constant 0 : index
    %c0_62 = arith.constant 0 : index
    %c0_63 = arith.constant 0 : index
    %147 = vector.load %arg11[%c0_61, %c0_62, %c0_63] : memref<1x128x256xbf16, #tpu.memory_space<vmem>>, vector<1x128x256xbf16>
    %148 = vector.shape_cast %147 : vector<1x128x256xbf16> to vector<128x256xbf16>
    %cst_64 = arith.constant dense<0.000000e+00> : vector<128x256xf32>
    %149 = tpu.matmul %146, %148, %cst_64 {dimension_numbers = #tpu.dot_dimension_numbers<[1], [0], [0], [1], [0, 0, 1, 1], [], []>} : vector<128x128xbf16>, vector<128x256xbf16>, vector<128x256xf32> -> vector<128x256xf32>
    %c0_65 = arith.constant 0 : index
    %c0_66 = arith.constant 0 : index
    %c0_67 = arith.constant 0 : index
    %150 = vector.load %arg12[%c0_65, %c0_66, %c0_67] : memref<1x1x256xf32, #tpu.memory_space<vmem>>, vector<1x1x256xf32>
    %151 = vector.shape_cast %150 : vector<1x1x256xf32> to vector<1x256xf32>
    %152 = vector.broadcast %151 : vector<1x256xf32> to vector<128x256xf32>
    %153 = arith.addf %149, %152 : vector<128x256xf32>
    %cst_68 = arith.constant 5.000000e-01 : f32
    %154 = vector.broadcast %cst_68 : f32 to vector<128x256xf32>
    %155 = arith.mulf %154, %153 : vector<128x256xf32>
    %cst_69 = arith.constant 4.471500e-02 : f32
    %156 = vector.broadcast %cst_69 : f32 to vector<128x256xf32>
    %157 = arith.mulf %156, %153 : vector<128x256xf32>
    %158 = arith.mulf %157, %153 : vector<128x256xf32>
    %159 = arith.mulf %158, %153 : vector<128x256xf32>
    %160 = arith.addf %153, %159 : vector<128x256xf32>
    %cst_70 = arith.constant 0.797884583 : f32
    %161 = vector.broadcast %cst_70 : f32 to vector<128x256xf32>
    %162 = arith.mulf %161, %160 : vector<128x256xf32>
    %163 = math.tanh %162 : vector<128x256xf32>
    %cst_71 = arith.constant 1.000000e+00 : f32
    %164 = vector.broadcast %cst_71 : f32 to vector<128x256xf32>
    %165 = arith.addf %164, %163 : vector<128x256xf32>
    %166 = arith.mulf %155, %165 : vector<128x256xf32>
    %167 = arith.truncf %166 : vector<128x256xf32> to vector<128x256xbf16>
    %c0_72 = arith.constant 0 : index
    %c0_73 = arith.constant 0 : index
    %c0_74 = arith.constant 0 : index
    %168 = vector.load %arg13[%c0_72, %c0_73, %c0_74] : memref<1x256x128xbf16, #tpu.memory_space<vmem>>, vector<1x256x128xbf16>
    %169 = vector.shape_cast %168 : vector<1x256x128xbf16> to vector<256x128xbf16>
    %cst_75 = arith.constant dense<0.000000e+00> : vector<128x128xf32>
    %170 = tpu.matmul %167, %169, %cst_75 {dimension_numbers = #tpu.dot_dimension_numbers<[1], [0], [0], [1], [0, 0, 1, 1], [], []>} : vector<128x256xbf16>, vector<256x128xbf16>, vector<128x128xf32> -> vector<128x128xf32>
    %c0_76 = arith.constant 0 : index
    %c0_77 = arith.constant 0 : index
    %c0_78 = arith.constant 0 : index
    %171 = vector.load %arg14[%c0_76, %c0_77, %c0_78] : memref<1x1x128xf32, #tpu.memory_space<vmem>>, vector<1x1x128xf32>
    %172 = vector.shape_cast %171 : vector<1x1x128xf32> to vector<1x128xf32>
    %173 = vector.broadcast %172 : vector<1x128xf32> to vector<128x128xf32>
    %174 = arith.addf %170, %173 : vector<128x128xf32>
    %175 = arith.addf %121, %174 : vector<128x128xf32>
    %c0_79 = arith.constant 0 : index
    %c0_80 = arith.constant 0 : index
    %176 = vector.load %arg18[%c0_79, %c0_80] : memref<128x128xf32, #tpu.memory_space<vmem>>, vector<128x128xf32>
    tpu.vector_store %arg18[%c0_79, %c0_80], %175 {strides = array<i32>} : memref<128x128xf32, #tpu.memory_space<vmem>>, vector<128x128xf32>,
    %c1_i32 = arith.constant 1 : i32
    %177 = arith.cmpi eq, %arg1, %c1_i32 : i32
    %178 = arith.extui %177 : i1 to i32
    %c0_i32_81 = arith.constant 0 : i32
    %179 = arith.cmpi ne, %178, %c0_i32_81 : i32
    scf.if %179 {
      %c0_82 = arith.constant 0 : index
      %c0_83 = arith.constant 0 : index
      %180 = vector.load %arg15[%c0_82, %c0_83] : memref<1x128xf32, #tpu.memory_space<vmem>>, vector<1x128xf32>
      %c0_84 = arith.constant 0 : index
      %c0_85 = arith.constant 0 : index
      %181 = vector.load %arg16[%c0_84, %c0_85] : memref<1x128xf32, #tpu.memory_space<vmem>>, vector<1x128xf32>
      %cst_86 = arith.constant dense<0.000000e+00> : vector<128xf32>
      %182 = vector.multi_reduction <add>, %175, %cst_86 [1] : vector<128x128xf32> to vector<128xf32>
      %183 = vector.shape_cast %182 : vector<128xf32> to vector<128x1xf32>
      %cst_87 = arith.constant 1.280000e+02 : f32
      %184 = vector.broadcast %cst_87 : f32 to vector<128x1xf32>
      %185 = arith.divf %183, %184 : vector<128x1xf32>
      %186 = vector.broadcast %185 : vector<128x1xf32> to vector<128x128xf32>
      %187 = arith.subf %175, %186 : vector<128x128xf32>
      %188 = arith.mulf %187, %187 : vector<128x128xf32>
      %cst_88 = arith.constant dense<0.000000e+00> : vector<128xf32>
      %189 = vector.multi_reduction <add>, %188, %cst_88 [1] : vector<128x128xf32> to vector<128xf32>
      %190 = vector.shape_cast %189 : vector<128xf32> to vector<128x1xf32>
      %cst_89 = arith.constant 1.280000e+02 : f32
      %191 = vector.broadcast %cst_89 : f32 to vector<128x1xf32>
      %192 = arith.divf %190, %191 : vector<128x1xf32>
      %cst_90 = arith.constant 9.99999997E-7 : f32
      %193 = vector.broadcast %cst_90 : f32 to vector<128x1xf32>
      %194 = arith.addf %192, %193 : vector<128x1xf32>
      %195 = math.rsqrt %194 : vector<128x1xf32>
      %196 = vector.broadcast %195 : vector<128x1xf32> to vector<128x128xf32>
      %197 = arith.mulf %187, %196 : vector<128x128xf32>
      %198 = vector.broadcast %180 : vector<1x128xf32> to vector<128x128xf32>
      %199 = arith.mulf %197, %198 : vector<128x128xf32>
      %200 = vector.broadcast %181 : vector<1x128xf32> to vector<128x128xf32>
      %201 = arith.addf %199, %200 : vector<128x128xf32>
      %c0_91 = arith.constant 0 : index
      %c0_92 = arith.constant 0 : index
      %c0_93 = arith.constant 0 : index
      %202 = vector.load %arg17[%c0_91, %c0_92, %c0_93] : memref<1x128x128xf32, #tpu.memory_space<vmem>>, vector<1x128x128xf32>
      %203 = vector.shape_cast %202 : vector<1x128x128xf32> to vector<128x128xf32>
      %204 = vector.shape_cast %201 : vector<128x128xf32> to vector<1x128x128xf32>
      tpu.vector_store %arg17[%c0_91, %c0_92, %c0_93], %204 {strides = array<i32>} : memref<1x128x128xf32, #tpu.memory_space<vmem>>, vector<1x128x128xf32>,
    } else {
    }
    return
  }
  func.func @transform_0(%arg0: i32, %arg1: i32) -> (i32, i32, i32) {
    %c0_i32 = arith.constant 0 : i32
    %c0_i32_0 = arith.constant 0 : i32
    %c0_i32_1 = arith.constant 0 : i32
    return %arg0, %c0_i32, %c0_i32_0 : i32, i32, i32
  }
  func.func @transform_1(%arg0: i32, %arg1: i32) -> (i32, i32, i32) {
    %c0_i32 = arith.constant 0 : i32
    %c0_i32_0 = arith.constant 0 : i32
    %c0_i32_1 = arith.constant 0 : i32
    return %arg1, %c0_i32, %c0_i32_0 : i32, i32, i32
  }
  func.func @transform_2(%arg0: i32, %arg1: i32) -> (i32, i32, i32) {
    %c0_i32 = arith.constant 0 : i32
    %c0_i32_0 = arith.constant 0 : i32
    %c0_i32_1 = arith.constant 0 : i32
    return %arg1, %c0_i32, %c0_i32_0 : i32, i32, i32
  }
  func.func @transform_3(%arg0: i32, %arg1: i32) -> (i32, i32, i32) {
    %c0_i32 = arith.constant 0 : i32
    %c0_i32_0 = arith.constant 0 : i32
    %c0_i32_1 = arith.constant 0 : i32
    return %arg1, %c0_i32, %c0_i32_0 : i32, i32, i32
  }
  func.func @transform_4(%arg0: i32, %arg1: i32) -> (i32, i32, i32) {
    %c0_i32 = arith.constant 0 : i32
    %c0_i32_0 = arith.constant 0 : i32
    %c0_i32_1 = arith.constant 0 : i32
    return %arg1, %c0_i32, %c0_i32_0 : i32, i32, i32
  }
  func.func @transform_5(%arg0: i32, %arg1: i32) -> (i32, i32, i32) {
    %c0_i32 = arith.constant 0 : i32
    %c0_i32_0 = arith.constant 0 : i32
    %c0_i32_1 = arith.constant 0 : i32
    return %arg1, %c0_i32, %c0_i32_0 : i32, i32, i32
  }
  func.func @transform_6(%arg0: i32, %arg1: i32) -> (i32, i32, i32) {
    %c0_i32 = arith.constant 0 : i32
    %c0_i32_0 = arith.constant 0 : i32
    %c0_i32_1 = arith.constant 0 : i32
    return %arg1, %c0_i32, %c0_i32_0 : i32, i32, i32
  }
  func.func @transform_7(%arg0: i32, %arg1: i32) -> (i32, i32, i32) {
    %c0_i32 = arith.constant 0 : i32
    %c0_i32_0 = arith.constant 0 : i32
    %c0_i32_1 = arith.constant 0 : i32
    return %arg1, %c0_i32, %c0_i32_0 : i32, i32, i32
  }
  func.func @transform_8(%arg0: i32, %arg1: i32) -> (i32, i32, i32) {
    %c0_i32 = arith.constant 0 : i32
    %c0_i32_0 = arith.constant 0 : i32
    %c0_i32_1 = arith.constant 0 : i32
    return %arg1, %c0_i32, %c0_i32_0 : i32, i32, i32
  }
  func.func @transform_9(%arg0: i32, %arg1: i32) -> (i32, i32, i32) {
    %c0_i32 = arith.constant 0 : i32
    %c0_i32_0 = arith.constant 0 : i32
    %c0_i32_1 = arith.constant 0 : i32
    return %arg1, %c0_i32, %c0_i32_0 : i32, i32, i32
  }
  func.func @transform_10(%arg0: i32, %arg1: i32) -> (i32, i32, i32) {
    %c0_i32 = arith.constant 0 : i32
    %c0_i32_0 = arith.constant 0 : i32
    %c0_i32_1 = arith.constant 0 : i32
    return %arg1, %c0_i32, %c0_i32_0 : i32, i32, i32
  }
  func.func @transform_11(%arg0: i32, %arg1: i32) -> (i32, i32, i32) {
    %c0_i32 = arith.constant 0 : i32
    %c0_i32_0 = arith.constant 0 : i32
    %c0_i32_1 = arith.constant 0 : i32
    return %arg1, %c0_i32, %c0_i32_0 : i32, i32, i32
  }
  func.func @transform_12(%arg0: i32, %arg1: i32) -> (i32, i32, i32) {
    %c0_i32 = arith.constant 0 : i32
    %c0_i32_0 = arith.constant 0 : i32
    %c0_i32_1 = arith.constant 0 : i32
    return %arg1, %c0_i32, %c0_i32_0 : i32, i32, i32
  }
  func.func @transform_13(%arg0: i32, %arg1: i32) -> (i32, i32) {
    %c0_i32 = arith.constant 0 : i32
    %c0_i32_0 = arith.constant 0 : i32
    %c0_i32_1 = arith.constant 0 : i32
    return %c0_i32, %c0_i32_0 : i32, i32
  }
  func.func @transform_14(%arg0: i32, %arg1: i32) -> (i32, i32) {
    %c0_i32 = arith.constant 0 : i32
    %c0_i32_0 = arith.constant 0 : i32
    %c0_i32_1 = arith.constant 0 : i32
    return %c0_i32, %c0_i32_0 : i32, i32
  }
  func.func @transform_15(%arg0: i32, %arg1: i32) -> (i32, i32, i32) {
    %c0_i32 = arith.constant 0 : i32
    %c0_i32_0 = arith.constant 0 : i32
    %c0_i32_1 = arith.constant 0 : i32
    return %arg0, %c0_i32, %c0_i32_0 : i32, i32, i32
  }
}

</mosaic_0001>

<llo_original>
// kernel: tpu_custom_call.1
$region0: #{tpu_custom_call.1}
  #allocation0 [shape = 'u32[]', space=smem, size = 0x4, offset = 0x4, fixed_abs, tag = 'smem constant byte address 0x4 - core index']
  #allocation1 [shape = 'u32[144,128]{1,0:T(1,128)}', space=vmem, size = 0x12000, scoped, tag = 'internal scratch']
  #allocation2 [shape = 'f32[128,128]{1,0:T(8,128)}', space=vmem, size = 0x10000, scoped, tag = 'scratch operand']
  #allocation3 [shape = 'f32[128,128]{1,0:T(8,128)}', space=vmem, size = 0x10000, scoped, tag = 'scratch operand']
  %s0 = inlined_call_operand.hbm [shape: f32[2,128,128], index: 0, kind: input, shape index: {}]
  %s1 = inlined_call_operand.hbm [shape: f32[2,1,128], index: 1, kind: input, shape index: {}]
  %s2 = inlined_call_operand.hbm [shape: f32[2,1,128], index: 2, kind: input, shape index: {}]
  %s3 = inlined_call_operand.hbm [shape: bf16[2,128,384], index: 3, kind: input, shape index: {}]
  %s4 = inlined_call_operand.vmem [shape: f32[2,1,384], index: 4, kind: input, shape index: {}]
  %s5 = inlined_call_operand.hbm [shape: bf16[2,128,128], index: 5, kind: input, shape index: {}]
  %s6 = inlined_call_operand.vmem [shape: f32[2,1,128], index: 6, kind: input, shape index: {}]
  %s7 = inlined_call_operand.vmem [shape: f32[2,1,128], index: 7, kind: input, shape index: {}]
  %s8 = inlined_call_operand.vmem [shape: f32[2,1,128], index: 8, kind: input, shape index: {}]
  %s9 = inlined_call_operand.hbm [shape: bf16[2,128,256], index: 9, kind: input, shape index: {}]
  %s10 = inlined_call_operand.vmem [shape: f32[2,1,256], index: 10, kind: input, shape index: {}]
  %s11 = inlined_call_operand.hbm [shape: bf16[2,256,128], index: 11, kind: input, shape index: {}]
  %s12 = inlined_call_operand.vmem [shape: f32[2,1,128], index: 12, kind: input, shape index: {}]
  %s13 = inlined_call_operand.vmem [shape: f32[1,128], index: 13, kind: input, shape index: {}]
  %s14 = inlined_call_operand.vmem [shape: f32[1,128], index: 14, kind: input, shape index: {}]
  %s15 = inlined_call_operand.hbm [shape: f32[2,128,128], index: 15, kind: output, shape index: {}]
  %s16 = sld [smem:[#allocation0]]
  $region129: #{tpu_custom_call.1} parent=0
    _
  %s18 = ssub.s32 1, %s16
  %s19 = scalar_select 0, %s18, %s16
  $region1: #{tpu_custom_call.1} parent=0
    #allocation4 [shape = 'u8[131072]{0}', space=vmem, size = 0x20000, scoped, tag = 'input window, operand 0']
    #allocation5 [shape = 's32[2]{0}', space=sflag, size = 0x8, scoped, tag = 'scoped memory for tpu_custom_call.1']
    #allocation6 [shape = 's32[2]{0}', space=sflag, size = 0x8, scoped, tag = 'scoped memory for tpu_custom_call.1']
    #allocation7 [shape = 'u8[1024]{0}', space=vmem, size = 0x400, scoped, tag = 'input window, operand 1']
    #allocation8 [shape = 's32[2]{0}', space=sflag, size = 0x8, scoped, tag = 'scoped memory for tpu_custom_call.1']
    #allocation9 [shape = 'u8[1024]{0}', space=vmem, size = 0x400, scoped, tag = 'input window, operand 2']
    #allocation10 [shape = 'u8[196608]{0}', space=vmem, size = 0x30000, scoped, tag = 'input window, operand 3']
    #allocation11 [shape = 's32[2]{0}', space=sflag, size = 0x8, scoped, tag = 'scoped memory for tpu_custom_call.1']
    #allocation12 [shape = 'u8[65536]{0}', space=vmem, size = 0x10000, scoped, tag = 'input window, operand 5']
    #allocation13 [shape = 'u8[131072]{0}', space=vmem, size = 0x20000, scoped, tag = 'input window, operand 9']
    #allocation14 [shape = 's32[2]{0}', space=sflag, size = 0x8, scoped, tag = 'scoped memory for tpu_custom_call.1']
    #allocation15 [shape = 'u8[131072]{0}', space=vmem, size = 0x20000, scoped, tag = 'input window, operand 11']
    #allocation16 [shape = 'u8[131072]{0}', space=vmem, size = 0x20000, scoped, tag = 'output window, operand 0']
    %20 = vsyncpa [#allocation5], 0
    %s21 = scalar_lea.sflag [#allocation5], 1
    %22 = vsyncpa %s21, 0
    %23 = vsyncpa [#allocation8], 0
    %s24 = scalar_lea.sflag [#allocation8], 1
    %25 = vsyncpa %s24, 0
    %26 = vsyncpa [#allocation11], 0
    %s27 = scalar_lea.sflag [#allocation11], 1
    %28 = vsyncpa %s27, 0
    %29 = vsyncpa [#allocation14], 0
    %s30 = scalar_lea.sflag [#allocation14], 1
    %31 = vsyncpa %s30, 0
    %32 = vsyncpa [#allocation6], 0
    %s33 = scalar_lea.sflag [#allocation6], 1
    %34 = vsyncpa %s33, 0
    loop: start=0, step=1, limit=6
    $region2: #{tpu_custom_call.1} parent=1 // loop_pre_header
      _
    $region3: #{tpu_custom_call.1} parent=1 // loop_header
      %s36 = sphi 0, %s40
      %p37 = scmp.ge.s32.totalorder %s36, 6
      %s43 = sphi 0, %s55
      %s44 = sphi 0, %s51
      %s45 = sphi 0, %s43
      %s46 = sphi 0, %s44
      %s47 = sphi 0, %s45
      %s48 = sphi 0, %s46
      %s58 = sphi 0, %s60
      %s61 = sphi 0, %s58
      %s62 = sphi 0, %s61
      %s78 = sphi 0, %s62
      %s84 = sphi 0, %s86
      %s87 = sphi 0, %s84
      %s88 = sphi 0, %s87
      %s104 = sphi 0, %s88
      %s110 = sphi 0, %s112
      %s113 = sphi 0, %s110
      %s114 = sphi 0, %s113
      %s130 = sphi 0, %s114
      %s136 = sphi 0, %s138
      %s139 = sphi 0, %s136
      %s140 = sphi 0, %s139
      %s156 = sphi 0, %s140
      %s162 = sphi 0, %s164
      %s165 = sphi 0, %s162
      %s166 = sphi 0, %s165
      %s182 = sphi 0, %s166
      %s188 = sphi 0, %s190
      %s191 = sphi 0, %s188
      %s192 = sphi 0, %s191
      %s208 = sphi 0, %s192
      %s214 = sphi 0, %s216
      %s217 = sphi 0, %s214
      %s218 = sphi 0, %s217
      %s234 = sphi 0, %s218
      %s240 = sphi 0, %s242
      %s243 = sphi 0, %s240
      %s244 = sphi 0, %s243
      %s260 = sphi 0, %s244
      %s266 = sphi 0, %s268
      %s269 = sphi 0, %s266
      %s270 = sphi 0, %s269
      %s286 = sphi 0, %s270
      %s292 = sphi 0, %s294
      %s295 = sphi 0, %s292
      %s296 = sphi 0, %s295
      %s312 = sphi 0, %s296
      %s318 = sphi 0, %s320
      %s321 = sphi 0, %s318
      %s322 = sphi 0, %s321
      %s338 = sphi 0, %s322
      %s344 = sphi 0, %s346
      %s347 = sphi 0, %s344
      %s348 = sphi 0, %s347
      %s364 = sphi 0, %s348
      %s370 = sphi 0, %s372
      %s373 = sphi 0, %s370
      %s374 = sphi 0, %s373
      %s390 = sphi 0, %s374
      %s394 = sphi 0, %s394
      %s396 = sphi 0, %s394
      %s397 = sphi 0, %s396
      %s411 = sphi 0, %s397
      %s415 = sphi 0, %s415
      %s417 = sphi 0, %s415
      %s418 = sphi 0, %s417
      %s432 = sphi 0, %s418
      %s438 = sphi 0, %s440
      %s441 = sphi 0, %s438
      %s442 = sphi 0, %s441
      %s458 = sphi 0, %s442
    $region4: #{tpu_custom_call.1} parent=1 // loop_header_branch
      %39 = sbr.rel (%p37) target = $region8
    $region5: #{tpu_custom_call.1} parent=1 // loop_body
      %s41 = ssub.s32 %s36, 1
      %s42 = ssub.s32 %s36, 2
      %s49 = sadd.s32 1, %s44
      %p50 = scmp.ge.s32.totalorder %s49, 2
      %s51 = scalar_select %p50, 0, %s49
      %s52 = sadd.s32 1, %s43
      %s53 = scalar_select %p50, %s52, %s43
      %p54 = scmp.ge.s32.totalorder %s53, 2
      %s55 = scalar_select %p54, 0, %s53
      %s56 = ssub.s32 %s43, %s55
      %p57 = scmp.eq.s32.totalorder %s56, 0
      %s59 = sadd.s32 %s58, 1
      %s60 = scalar_select %p57, %s58, %s59
      %p63 = pneg %p57
      %p64 = scmp.eq.s32.totalorder %s36, 3
      %p65 = por %p63, %p64
      %p66 = scmp.ne.s32.totalorder %s58, %s61
      %p67 = scmp.eq.s32.totalorder %s36, 0
      %p68 = por %p66, %p67
      %p69 = scmp.ne.s32.totalorder %s58, %s61
      %p70 = scmp.eq.s32.totalorder %s41, 3
      %p71 = por %p69, %p70
      %p72 = scmp.ne.s32.totalorder %s61, %s62
      %p73 = scmp.eq.s32.totalorder %s41, 0
      %p74 = por %p72, %p73
      %p75 = scmp.ne.s32.totalorder %s61, %s62
      %p76 = scmp.eq.s32.totalorder %s42, 3
      %p77 = por %p75, %p76
      %p79 = scmp.ne.s32.totalorder %s62, %s78
      %p80 = scmp.eq.s32.totalorder %s42, 0
      %p81 = por %p79, %p80
      %s82 = ssub.s32 %s44, %s51
      %p83 = scmp.eq.s32.totalorder %s82, 0
      %s85 = sadd.s32 %s84, 1
      %s86 = scalar_select %p83, %s84, %s85
      %p89 = pneg %p83
      %p90 = scmp.eq.s32.totalorder %s36, 3
      %p91 = por %p89, %p90
      %p92 = scmp.ne.s32.totalorder %s84, %s87
      %p93 = scmp.eq.s32.totalorder %s36, 0
      %p94 = por %p92, %p93
      %p95 = scmp.ne.s32.totalorder %s84, %s87
      %p96 = scmp.eq.s32.totalorder %s41, 3
      %p97 = por %p95, %p96
      %p98 = scmp.ne.s32.totalorder %s87, %s88
      %p99 = scmp.eq.s32.totalorder %s41, 0
      %p100 = por %p98, %p99
      %p101 = scmp.ne.s32.totalorder %s87, %s88
      %p102 = scmp.eq.s32.totalorder %s42, 3
      %p103 = por %p101, %p102
      %p105 = scmp.ne.s32.totalorder %s88, %s104
      %p106 = scmp.eq.s32.totalorder %s42, 0
      %p107 = por %p105, %p106
      %s108 = ssub.s32 %s44, %s51
      %p109 = scmp.eq.s32.totalorder %s108, 0
      %s111 = sadd.s32 %s110, 1
      %s112 = scalar_select %p109, %s110, %s111
      %p115 = pneg %p109
      %p116 = scmp.eq.s32.totalorder %s36, 3
      %p117 = por %p115, %p116
      %p118 = scmp.ne.s32.totalorder %s110, %s113
      %p119 = scmp.eq.s32.totalorder %s36, 0
      %p120 = por %p118, %p119
      %p121 = scmp.ne.s32.totalorder %s110, %s113
      %p122 = scmp.eq.s32.totalorder %s41, 3
      %p123 = por %p121, %p122
      %p124 = scmp.ne.s32.totalorder %s113, %s114
      %p125 = scmp.eq.s32.totalorder %s41, 0
      %p126 = por %p124, %p125
      %p127 = scmp.ne.s32.totalorder %s113, %s114
      %p128 = scmp.eq.s32.totalorder %s42, 3
      %p129 = por %p127, %p128
      %p131 = scmp.ne.s32.totalorder %s114, %s130
      %p132 = scmp.eq.s32.totalorder %s42, 0
      %p133 = por %p131, %p132
      %s134 = ssub.s32 %s44, %s51
      %p135 = scmp.eq.s32.totalorder %s134, 0
      %s137 = sadd.s32 %s136, 1
      %s138 = scalar_select %p135, %s136, %s137
      %p141 = pneg %p135
      %p142 = scmp.eq.s32.totalorder %s36, 3
      %p143 = por %p141, %p142
      %p144 = scmp.ne.s32.totalorder %s136, %s139
      %p145 = scmp.eq.s32.totalorder %s36, 0
      %p146 = por %p144, %p145
      %p147 = scmp.ne.s32.totalorder %s136, %s139
      %p148 = scmp.eq.s32.totalorder %s41, 3
      %p149 = por %p147, %p148
      %p150 = scmp.ne.s32.totalorder %s139, %s140
      %p151 = scmp.eq.s32.totalorder %s41, 0
      %p152 = por %p150, %p151
      %p153 = scmp.ne.s32.totalorder %s139, %s140
      %p154 = scmp.eq.s32.totalorder %s42, 3
      %p155 = por %p153, %p154
      %p157 = scmp.ne.s32.totalorder %s140, %s156
      %p158 = scmp.eq.s32.totalorder %s42, 0
      %p159 = por %p157, %p158
      %s160 = ssub.s32 %s44, %s51
      %p161 = scmp.eq.s32.totalorder %s160, 0
      %s163 = sadd.s32 %s162, 1
      %s164 = scalar_select %p161, %s162, %s163
      %p167 = pneg %p161
      %p168 = scmp.eq.s32.totalorder %s36, 3
      %p169 = por %p167, %p168
      %p170 = scmp.ne.s32.totalorder %s162, %s165
      %p171 = scmp.eq.s32.totalorder %s36, 0
      %p172 = por %p170, %p171
      %p173 = scmp.ne.s32.totalorder %s162, %s165
      %p174 = scmp.eq.s32.totalorder %s41, 3
      %p175 = por %p173, %p174
      %p176 = scmp.ne.s32.totalorder %s165, %s166
      %p177 = scmp.eq.s32.totalorder %s41, 0
      %p178 = por %p176, %p177
      %p179 = scmp.ne.s32.totalorder %s165, %s166
      %p180 = scmp.eq.s32.totalorder %s42, 3
      %p181 = por %p179, %p180
      %p183 = scmp.ne.s32.totalorder %s166, %s182
      %p184 = scmp.eq.s32.totalorder %s42, 0
      %p185 = por %p183, %p184
      %s186 = ssub.s32 %s44, %s51
      %p187 = scmp.eq.s32.totalorder %s186, 0
      %s189 = sadd.s32 %s188, 1
      %s190 = scalar_select %p187, %s188, %s189
      %p193 = pneg %p187
      %p194 = scmp.eq.s32.totalorder %s36, 3
      %p195 = por %p193, %p194
      %p196 = scmp.ne.s32.totalorder %s188, %s191
      %p197 = scmp.eq.s32.totalorder %s36, 0
      %p198 = por %p196, %p197
      %p199 = scmp.ne.s32.totalorder %s188, %s191
      %p200 = scmp.eq.s32.totalorder %s41, 3
      %p201 = por %p199, %p200
      %p202 = scmp.ne.s32.totalorder %s191, %s192
      %p203 = scmp.eq.s32.totalorder %s41, 0
      %p204 = por %p202, %p203
      %p205 = scmp.ne.s32.totalorder %s191, %s192
      %p206 = scmp.eq.s32.totalorder %s42, 3
      %p207 = por %p205, %p206
      %p209 = scmp.ne.s32.totalorder %s192, %s208
      %p210 = scmp.eq.s32.totalorder %s42, 0
      %p211 = por %p209, %p210
      %s212 = ssub.s32 %s44, %s51
      %p213 = scmp.eq.s32.totalorder %s212, 0
      %s215 = sadd.s32 %s214, 1
      %s216 = scalar_select %p213, %s214, %s215
      %p219 = pneg %p213
      %p220 = scmp.eq.s32.totalorder %s36, 3
      %p221 = por %p219, %p220
      %p222 = scmp.ne.s32.totalorder %s214, %s217
      %p223 = scmp.eq.s32.totalorder %s36, 0
      %p224 = por %p222, %p223
      %p225 = scmp.ne.s32.totalorder %s214, %s217
      %p226 = scmp.eq.s32.totalorder %s41, 3
      %p227 = por %p225, %p226
      %p228 = scmp.ne.s32.totalorder %s217, %s218
      %p229 = scmp.eq.s32.totalorder %s41, 0
      %p230 = por %p228, %p229
      %p231 = scmp.ne.s32.totalorder %s217, %s218
      %p232 = scmp.eq.s32.totalorder %s42, 3
      %p233 = por %p231, %p232
      %p235 = scmp.ne.s32.totalorder %s218, %s234
      %p236 = scmp.eq.s32.totalorder %s42, 0
      %p237 = por %p235, %p236
      %s238 = ssub.s32 %s44, %s51
      %p239 = scmp.eq.s32.totalorder %s238, 0
      %s241 = sadd.s32 %s240, 1
      %s242 = scalar_select %p239, %s240, %s241
      %p245 = pneg %p239
      %p246 = scmp.eq.s32.totalorder %s36, 3
      %p247 = por %p245, %p246
      %p248 = scmp.ne.s32.totalorder %s240, %s243
      %p249 = scmp.eq.s32.totalorder %s36, 0
      %p250 = por %p248, %p249
      %p251 = scmp.ne.s32.totalorder %s240, %s243
      %p252 = scmp.eq.s32.totalorder %s41, 3
      %p253 = por %p251, %p252
      %p254 = scmp.ne.s32.totalorder %s243, %s244
      %p255 = scmp.eq.s32.totalorder %s41, 0
      %p256 = por %p254, %p255
      %p257 = scmp.ne.s32.totalorder %s243, %s244
      %p258 = scmp.eq.s32.totalorder %s42, 3
      %p259 = por %p257, %p258
      %p261 = scmp.ne.s32.totalorder %s244, %s260
      %p262 = scmp.eq.s32.totalorder %s42, 0
      %p263 = por %p261, %p262
      %s264 = ssub.s32 %s44, %s51
      %p265 = scmp.eq.s32.totalorder %s264, 0
      %s267 = sadd.s32 %s266, 1
      %s268 = scalar_select %p265, %s266, %s267
      %p271 = pneg %p265
      %p272 = scmp.eq.s32.totalorder %s36, 3
      %p273 = por %p271, %p272
      %p274 = scmp.ne.s32.totalorder %s266, %s269
      %p275 = scmp.eq.s32.totalorder %s36, 0
      %p276 = por %p274, %p275
      %p277 = scmp.ne.s32.totalorder %s266, %s269
      %p278 = scmp.eq.s32.totalorder %s41, 3
      %p279 = por %p277, %p278
      %p280 = scmp.ne.s32.totalorder %s269, %s270
      %p281 = scmp.eq.s32.totalorder %s41, 0
      %p282 = por %p280, %p281
      %p283 = scmp.ne.s32.totalorder %s269, %s270
      %p284 = scmp.eq.s32.totalorder %s42, 3
      %p285 = por %p283, %p284
      %p287 = scmp.ne.s32.totalorder %s270, %s286
      %p288 = scmp.eq.s32.totalorder %s42, 0
      %p289 = por %p287, %p288
      %s290 = ssub.s32 %s44, %s51
      %p291 = scmp.eq.s32.totalorder %s290, 0
      %s293 = sadd.s32 %s292, 1
      %s294 = scalar_select %p291, %s292, %s293
      %p297 = pneg %p291
      %p298 = scmp.eq.s32.totalorder %s36, 3
      %p299 = por %p297, %p298
      %p300 = scmp.ne.s32.totalorder %s292, %s295
      %p301 = scmp.eq.s32.totalorder %s36, 0
      %p302 = por %p300, %p301
      %p303 = scmp.ne.s32.totalorder %s292, %s295
      %p304 = scmp.eq.s32.totalorder %s41, 3
      %p305 = por %p303, %p304
      %p306 = scmp.ne.s32.totalorder %s295, %s296
      %p307 = scmp.eq.s32.totalorder %s41, 0
      %p308 = por %p306, %p307
      %p309 = scmp.ne.s32.totalorder %s295, %s296
      %p310 = scmp.eq.s32.totalorder %s42, 3
      %p311 = por %p309, %p310
      %p313 = scmp.ne.s32.totalorder %s296, %s312
      %p314 = scmp.eq.s32.totalorder %s42, 0
      %p315 = por %p313, %p314
      %s316 = ssub.s32 %s44, %s51
      %p317 = scmp.eq.s32.totalorder %s316, 0
      %s319 = sadd.s32 %s318, 1
      %s320 = scalar_select %p317, %s318, %s319
      %p323 = pneg %p317
      %p324 = scmp.eq.s32.totalorder %s36, 3
      %p325 = por %p323, %p324
      %p326 = scmp.ne.s32.totalorder %s318, %s321
      %p327 = scmp.eq.s32.totalorder %s36, 0
      %p328 = por %p326, %p327
      %p329 = scmp.ne.s32.totalorder %s318, %s321
      %p330 = scmp.eq.s32.totalorder %s41, 3
      %p331 = por %p329, %p330
      %p332 = scmp.ne.s32.totalorder %s321, %s322
      %p333 = scmp.eq.s32.totalorder %s41, 0
      %p334 = por %p332, %p333
      %p335 = scmp.ne.s32.totalorder %s321, %s322
      %p336 = scmp.eq.s32.totalorder %s42, 3
      %p337 = por %p335, %p336
      %p339 = scmp.ne.s32.totalorder %s322, %s338
      %p340 = scmp.eq.s32.totalorder %s42, 0
      %p341 = por %p339, %p340
      %s342 = ssub.s32 %s44, %s51
      %p343 = scmp.eq.s32.totalorder %s342, 0
      %s345 = sadd.s32 %s344, 1
      %s346 = scalar_select %p343, %s344, %s345
      %p349 = pneg %p343
      %p350 = scmp.eq.s32.totalorder %s36, 3
      %p351 = por %p349, %p350
      %p352 = scmp.ne.s32.totalorder %s344, %s347
      %p353 = scmp.eq.s32.totalorder %s36, 0
      %p354 = por %p352, %p353
      %p355 = scmp.ne.s32.totalorder %s344, %s347
      %p356 = scmp.eq.s32.totalorder %s41, 3
      %p357 = por %p355, %p356
      %p358 = scmp.ne.s32.totalorder %s347, %s348
      %p359 = scmp.eq.s32.totalorder %s41, 0
      %p360 = por %p358, %p359
      %p361 = scmp.ne.s32.totalorder %s347, %s348
      %p362 = scmp.eq.s32.totalorder %s42, 3
      %p363 = por %p361, %p362
      %p365 = scmp.ne.s32.totalorder %s348, %s364
      %p366 = scmp.eq.s32.totalorder %s42, 0
      %p367 = por %p365, %p366
      %s368 = ssub.s32 %s44, %s51
      %p369 = scmp.eq.s32.totalorder %s368, 0
      %s371 = sadd.s32 %s370, 1
      %s372 = scalar_select %p369, %s370, %s371
      %p375 = pneg %p369
      %p376 = scmp.eq.s32.totalorder %s36, 3
      %p377 = por %p375, %p376
      %p378 = scmp.ne.s32.totalorder %s370, %s373
      %p379 = scmp.eq.s32.totalorder %s36, 0
      %p380 = por %p378, %p379
      %p381 = scmp.ne.s32.totalorder %s370, %s373
      %p382 = scmp.eq.s32.totalorder %s41, 3
      %p383 = por %p381, %p382
      %p384 = scmp.ne.s32.totalorder %s373, %s374
      %p385 = scmp.eq.s32.totalorder %s41, 0
      %p386 = por %p384, %p385
      %p387 = scmp.ne.s32.totalorder %s373, %s374
      %p388 = scmp.eq.s32.totalorder %s42, 3
      %p389 = por %p387, %p388
      %p391 = scmp.ne.s32.totalorder %s374, %s390
      %p392 = scmp.eq.s32.totalorder %s42, 0
      %p393 = por %p391, %p392
      %s395 = sadd.s32 %s394, 1
      %p398 = scmp.eq.s32.totalorder %s36, 3
      %p399 = scmp.ne.s32.totalorder %s394, %s396
      %p400 = scmp.eq.s32.totalorder %s36, 0
      %p401 = por %p399, %p400
      %p402 = scmp.ne.s32.totalorder %s394, %s396
      %p403 = scmp.eq.s32.totalorder %s41, 3
      %p404 = por %p402, %p403
      %p405 = scmp.ne.s32.totalorder %s396, %s397
      %p406 = scmp.eq.s32.totalorder %s41, 0
      %p407 = por %p405, %p406
      %p408 = scmp.ne.s32.totalorder %s396, %s397
      %p409 = scmp.eq.s32.totalorder %s42, 3
      %p410 = por %p408, %p409
      %p412 = scmp.ne.s32.totalorder %s397, %s411
      %p413 = scmp.eq.s32.totalorder %s42, 0
      %p414 = por %p412, %p413
      %s416 = sadd.s32 %s415, 1
      %p419 = scmp.eq.s32.totalorder %s36, 3
      %p420 = scmp.ne.s32.totalorder %s415, %s417
      %p421 = scmp.eq.s32.totalorder %s36, 0
      %p422 = por %p420, %p421
      %p423 = scmp.ne.s32.totalorder %s415, %s417
      %p424 = scmp.eq.s32.totalorder %s41, 3
      %p425 = por %p423, %p424
      %p426 = scmp.ne.s32.totalorder %s417, %s418
      %p427 = scmp.eq.s32.totalorder %s41, 0
      %p428 = por %p426, %p427
      %p429 = scmp.ne.s32.totalorder %s417, %s418
      %p430 = scmp.eq.s32.totalorder %s42, 3
      %p431 = por %p429, %p430
      %p433 = scmp.ne.s32.totalorder %s418, %s432
      %p434 = scmp.eq.s32.totalorder %s42, 0
      %p435 = por %p433, %p434
      %s436 = ssub.s32 %s43, %s55
      %p437 = scmp.eq.s32.totalorder %s436, 0
      %s439 = sadd.s32 %s438, 1
      %s440 = scalar_select %p437, %s438, %s439
      %p443 = pneg %p437
      %p444 = scmp.eq.s32.totalorder %s36, 3
      %p445 = por %p443, %p444
      %p446 = scmp.ne.s32.totalorder %s438, %s441
      %p447 = scmp.eq.s32.totalorder %s36, 0
      %p448 = por %p446, %p447
      %p449 = scmp.ne.s32.totalorder %s438, %s441
      %p450 = scmp.eq.s32.totalorder %s41, 3
      %p451 = por %p449, %p450
      %p452 = scmp.ne.s32.totalorder %s441, %s442
      %p453 = scmp.eq.s32.totalorder %s41, 0
      %p454 = por %p452, %p453
      %p455 = scmp.ne.s32.totalorder %s441, %s442
      %p456 = scmp.eq.s32.totalorder %s42, 3
      %p457 = por %p455, %p456
      %p459 = scmp.ne.s32.totalorder %s442, %s458
      %p460 = scmp.eq.s32.totalorder %s42, 0
      %p461 = por %p459, %p460
      %p462 = scmp.le.s32.totalorder 1, %s36
      %p463 = scmp.lt.s32.totalorder %s36, 5
      %p464 = pnand %p462, %p463
      %p465 = pneg %p464
      // Predicated region
      $region9: #{tpu_custom_call.1} parent=5 // pred_check
        _
      $region10: #{tpu_custom_call.1} parent=5 // pred_check_branch
        %467 = sbr.rel (%p464) target = $region12
      $region11: #{tpu_custom_call.1} parent=5 // pred_region
        %s468 = ssub.s32 %s36, 1
        // Predicated region
        $region13: #{tpu_custom_call.1} parent=11 // pred_check
          %p469 = pneg %p407
        $region14: #{tpu_custom_call.1} parent=11 // pred_check_branch
          %471 = sbr.rel (%p469) target = $region16
        $region15: #{tpu_custom_call.1} parent=11 // pred_region
          _
        $region16: #{tpu_custom_call.1} parent=11 // pred_fallthru
          _
        // Predicated region
        $region17: #{tpu_custom_call.1} parent=11 // pred_check
          %p472 = pneg %p428
        $region18: #{tpu_custom_call.1} parent=11 // pred_check_branch
          %474 = sbr.rel (%p472) target = $region20
        $region19: #{tpu_custom_call.1} parent=11 // pred_region
          _
        $region20: #{tpu_custom_call.1} parent=11 // pred_fallthru
          _
      $region12: #{tpu_custom_call.1} parent=5 // pred_fallthru
        _
      %p475 = scmp.lt.s32.totalorder %s36, 4
      // Predicated region
      $region21: #{tpu_custom_call.1} parent=5 // pred_check
        %p476 = pneg %p475
      $region22: #{tpu_custom_call.1} parent=5 // pred_check_branch
        %478 = sbr.rel (%p476) target = $region24
      $region23: #{tpu_custom_call.1} parent=5 // pred_region
        // Predicated region
        $region25: #{tpu_custom_call.1} parent=23 // pred_check
          %p479 = pneg %p68
        $region26: #{tpu_custom_call.1} parent=23 // pred_check_branch
          %481 = sbr.rel (%p479) target = $region28
        $region27: #{tpu_custom_call.1} parent=23 // pred_region
          %s482 = sand.u32 %s58, 1
          %s483 = scalar_lea.sflag [#allocation5], %s482
          %s484 = sand.u32 %s58, 1
          %s485 = smul.addr %s484, 128
          %s486 = scalar_lea.vmem [#allocation4], %s485
          %s488 = ssub.s32 2048, 2048
          %489 = vsyncadd %s483, %s488
          %s490 = smul.addr %s43, 16
          %s491 = smul.addr %s490, 128
          %s492 = scalar_lea.hbm %s0, %s491
          %s493 = sshll.u32 %s486, 4
          %s494 = int_to_ptr.vmem [resolvable:$true] %s493
          %499 = dma.hbm_to_vmem [thread:$0]  %s492, 2048, %s494, %s483, 128, 128, 8
        $region28: #{tpu_custom_call.1} parent=23 // pred_fallthru
          _
        // Predicated region
        $region29: #{tpu_custom_call.1} parent=23 // pred_check
          %p500 = pneg %p94
        $region30: #{tpu_custom_call.1} parent=23 // pred_check_branch
          %502 = sbr.rel (%p500) target = $region32
        $region31: #{tpu_custom_call.1} parent=23 // pred_region
          %s503 = sand.u32 %s36, 1
          %s504 = scalar_lea.sflag [#allocation8], %s503
          %s505 = sand.u32 %s84, 1
          %s506 = scalar_lea.vmem [#allocation7], %s505
          %s508 = ssub.s32 16, 16
          %509 = vsyncadd %s504, %s508
          %s510 = smul.addr %s44, 16
          %s511 = scalar_lea.hbm %s1, %s510
          %s513 = sshll.u32 %s506, 4
          %s514 = int_to_ptr.vmem [resolvable:$true] %s513
          %516 = dma.hbm_to_vmem [thread:$0]  %s511, 16, %s514, %s504
        $region32: #{tpu_custom_call.1} parent=23 // pred_fallthru
          _
        // Predicated region
        $region33: #{tpu_custom_call.1} parent=23 // pred_check
          %p517 = pneg %p120
        $region34: #{tpu_custom_call.1} parent=23 // pred_check_branch
          %519 = sbr.rel (%p517) target = $region36
        $region35: #{tpu_custom_call.1} parent=23 // pred_region
          %s520 = sand.u32 %s36, 1
          %s521 = scalar_lea.sflag [#allocation8], %s520
          %s522 = sand.u32 %s110, 1
          %s523 = scalar_lea.vmem [#allocation9], %s522
          %s525 = ssub.s32 16, 16
          %526 = vsyncadd %s521, %s525
          %s527 = smul.addr %s44, 16
          %s528 = scalar_lea.hbm %s2, %s527
          %s530 = sshll.u32 %s523, 4
          %s531 = int_to_ptr.vmem [resolvable:$true] %s530
          %533 = dma.hbm_to_vmem [thread:$0]  %s528, 16, %s531, %s521
        $region36: #{tpu_custom_call.1} parent=23 // pred_fallthru
          _
        // Predicated region
        $region37: #{tpu_custom_call.1} parent=23 // pred_check
          %p534 = pneg %p146
        $region38: #{tpu_custom_call.1} parent=23 // pred_check_branch
          %536 = sbr.rel (%p534) target = $region40
        $region39: #{tpu_custom_call.1} parent=23 // pred_region
          %s537 = sand.u32 %s36, 1
          %s538 = scalar_lea.sflag [#allocation11], %s537
          %s539 = sand.u32 %s136, 1
          %s540 = smul.addr %s539, 192
          %s541 = scalar_lea.vmem [#allocation10], %s540
          %s543 = ssub.s32 3072, 3072
          %544 = vsyncadd %s538, %s543
          %s545 = smul.addr %s44, 48
          %s546 = smul.addr %s545, 64
          %s547 = scalar_lea.hbm %s3, %s546
          %s548 = sshll.u32 %s541, 4
          %s549 = int_to_ptr.vmem [resolvable:$true] %s548
          %554 = dma.hbm_to_vmem [thread:$0]  %s547, 3072, %s549, %s538, 192, 192, 12
        $region40: #{tpu_custom_call.1} parent=23 // pred_fallthru
          _
        // Predicated region
        $region41: #{tpu_custom_call.1} parent=23 // pred_check
          %p555 = pneg %p172
        $region42: #{tpu_custom_call.1} parent=23 // pred_check_branch
          %557 = sbr.rel (%p555) target = $region44
        $region43: #{tpu_custom_call.1} parent=23 // pred_region
          %p558 = scmp.lt.s32.totalorder %s44, 1
          %s559 = scalar_select %p558, %s44, 1
          %s560 = smul.addr %s559, 3
          %s561 = scalar_lea.vmem %s4, %s560
        $region44: #{tpu_custom_call.1} parent=23 // pred_fallthru
          _
        // Predicated region
        $region45: #{tpu_custom_call.1} parent=23 // pred_check
          %p562 = pneg %p198
        $region46: #{tpu_custom_call.1} parent=23 // pred_check_branch
          %564 = sbr.rel (%p562) target = $region48
        $region47: #{tpu_custom_call.1} parent=23 // pred_region
          %s565 = sand.u32 %s36, 1
          %s566 = scalar_lea.sflag [#allocation11], %s565
          %s567 = sand.u32 %s188, 1
          %s568 = smul.addr %s567, 64
          %s569 = scalar_lea.vmem [#allocation12], %s568
          %s571 = ssub.s32 1024, 1024
          %572 = vsyncadd %s566, %s571
          %s573 = smul.addr %s44, 16
          %s574 = smul.addr %s573, 64
          %s575 = scalar_lea.hbm %s5, %s574
          %s576 = sshll.u32 %s569, 4
          %s577 = int_to_ptr.vmem [resolvable:$true] %s576
          %582 = dma.hbm_to_vmem [thread:$0]  %s575, 1024, %s577, %s566, 64, 64, 4
        $region48: #{tpu_custom_call.1} parent=23 // pred_fallthru
          _
        // Predicated region
        $region49: #{tpu_custom_call.1} parent=23 // pred_check
          %p583 = pneg %p224
        $region50: #{tpu_custom_call.1} parent=23 // pred_check_branch
          %585 = sbr.rel (%p583) target = $region52
        $region51: #{tpu_custom_call.1} parent=23 // pred_region
          %p586 = scmp.lt.s32.totalorder %s44, 1
          %s587 = scalar_select %p586, %s44, 1
          %s588 = scalar_lea.vmem %s6, %s587
        $region52: #{tpu_custom_call.1} parent=23 // pred_fallthru
          _
        // Predicated region
        $region53: #{tpu_custom_call.1} parent=23 // pred_check
          %p589 = pneg %p250
        $region54: #{tpu_custom_call.1} parent=23 // pred_check_branch
          %591 = sbr.rel (%p589) target = $region56
        $region55: #{tpu_custom_call.1} parent=23 // pred_region
          %p592 = scmp.lt.s32.totalorder %s44, 1
          %s593 = scalar_select %p592, %s44, 1
          %s594 = scalar_lea.vmem %s7, %s593
        $region56: #{tpu_custom_call.1} parent=23 // pred_fallthru
          _
        // Predicated region
        $region57: #{tpu_custom_call.1} parent=23 // pred_check
          %p595 = pneg %p276
        $region58: #{tpu_custom_call.1} parent=23 // pred_check_branch
          %597 = sbr.rel (%p595) target = $region60
        $region59: #{tpu_custom_call.1} parent=23 // pred_region
          %p598 = scmp.lt.s32.totalorder %s44, 1
          %s599 = scalar_select %p598, %s44, 1
          %s600 = scalar_lea.vmem %s8, %s599
        $region60: #{tpu_custom_call.1} parent=23 // pred_fallthru
          _
        // Predicated region
        $region61: #{tpu_custom_call.1} parent=23 // pred_check
          %p601 = pneg %p302
        $region62: #{tpu_custom_call.1} parent=23 // pred_check_branch
          %603 = sbr.rel (%p601) target = $region64
        $region63: #{tpu_custom_call.1} parent=23 // pred_region
          %s604 = sand.u32 %s36, 1
          %s605 = scalar_lea.sflag [#allocation14], %s604
          %s606 = sand.u32 %s292, 1
          %s607 = smul.addr %s606, 128
          %s608 = scalar_lea.vmem [#allocation13], %s607
          %s610 = ssub.s32 2048, 2048
          %611 = vsyncadd %s605, %s610
          %s612 = smul.addr %s44, 32
          %s613 = smul.addr %s612, 64
          %s614 = scalar_lea.hbm %s9, %s613
          %s615 = sshll.u32 %s608, 4
          %s616 = int_to_ptr.vmem [resolvable:$true] %s615
          %621 = dma.hbm_to_vmem [thread:$0]  %s614, 2048, %s616, %s605, 128, 128, 8
        $region64: #{tpu_custom_call.1} parent=23 // pred_fallthru
          _
        // Predicated region
        $region65: #{tpu_custom_call.1} parent=23 // pred_check
          %p622 = pneg %p328
        $region66: #{tpu_custom_call.1} parent=23 // pred_check_branch
          %624 = sbr.rel (%p622) target = $region68
        $region67: #{tpu_custom_call.1} parent=23 // pred_region
          %p625 = scmp.lt.s32.totalorder %s44, 1
          %s626 = scalar_select %p625, %s44, 1
          %s627 = smul.addr %s626, 2
          %s628 = scalar_lea.vmem %s10, %s627
        $region68: #{tpu_custom_call.1} parent=23 // pred_fallthru
          _
        // Predicated region
        $region69: #{tpu_custom_call.1} parent=23 // pred_check
          %p629 = pneg %p354
        $region70: #{tpu_custom_call.1} parent=23 // pred_check_branch
          %631 = sbr.rel (%p629) target = $region72
        $region71: #{tpu_custom_call.1} parent=23 // pred_region
          %s632 = sand.u32 %s36, 1
          %s633 = scalar_lea.sflag [#allocation14], %s632
          %s634 = sand.u32 %s344, 1
          %s635 = smul.addr %s634, 128
          %s636 = scalar_lea.vmem [#allocation15], %s635
          %s638 = ssub.s32 2048, 2048
          %639 = vsyncadd %s633, %s638
          %s640 = smul.addr %s44, 32
          %s641 = smul.addr %s640, 64
          %s642 = scalar_lea.hbm %s11, %s641
          %s643 = sshll.u32 %s636, 4
          %s644 = int_to_ptr.vmem [resolvable:$true] %s643
          %649 = dma.hbm_to_vmem [thread:$0]  %s642, 2048, %s644, %s633, 64, 64, 4
        $region72: #{tpu_custom_call.1} parent=23 // pred_fallthru
          _
        // Predicated region
        $region73: #{tpu_custom_call.1} parent=23 // pred_check
          %p650 = pneg %p380
        $region74: #{tpu_custom_call.1} parent=23 // pred_check_branch
          %652 = sbr.rel (%p650) target = $region76
        $region75: #{tpu_custom_call.1} parent=23 // pred_region
          %p653 = scmp.lt.s32.totalorder %s44, 1
          %s654 = scalar_select %p653, %s44, 1
          %s655 = scalar_lea.vmem %s12, %s654
        $region76: #{tpu_custom_call.1} parent=23 // pred_fallthru
          _
      $region24: #{tpu_custom_call.1} parent=5 // pred_fallthru
        _
      %p656 = scmp.le.s32.totalorder 1, %s36
      %p657 = scmp.lt.s32.totalorder %s36, 5
      %p658 = pnand %p656, %p657
      %p659 = pneg %p658
      // Predicated region
      $region77: #{tpu_custom_call.1} parent=5 // pred_check
        _
      $region78: #{tpu_custom_call.1} parent=5 // pred_check_branch
        %661 = sbr.rel (%p658) target = $region80
      $region79: #{tpu_custom_call.1} parent=5 // pred_region
        %s662 = ssub.s32 %s36, 1
        %s663 = sand.u32 %s61, 1
        %s664 = scalar_lea.sflag [#allocation5], %s663
        %s665 = sand.u32 %s61, 1
        %s666 = smul.addr %s665, 128
        %s667 = scalar_lea.vmem [#allocation4], %s666
        // Predicated region
        $region81: #{tpu_custom_call.1} parent=79 // pred_check
          %p668 = pneg %p74
        $region82: #{tpu_custom_call.1} parent=79 // pred_check_branch
          %670 = sbr.rel (%p668) target = $region84
        $region83: #{tpu_custom_call.1} parent=79 // pred_region
          %671 = dma.done %s664, 2048
        $region84: #{tpu_custom_call.1} parent=79 // pred_fallthru
          _
        %s672 = sand.u32 %s41, 1
        %s673 = scalar_lea.sflag [#allocation8], %s672
        %s674 = sand.u32 %s87, 1
        %s675 = scalar_lea.vmem [#allocation7], %s674
        // Predicated region
        $region85: #{tpu_custom_call.1} parent=79 // pred_check
          %p676 = pneg %p100
        $region86: #{tpu_custom_call.1} parent=79 // pred_check_branch
          %678 = sbr.rel (%p676) target = $region88
        $region87: #{tpu_custom_call.1} parent=79 // pred_region
          %679 = dma.done %s673, 16
        $region88: #{tpu_custom_call.1} parent=79 // pred_fallthru
          _
        %s680 = sand.u32 %s41, 1
        %s681 = scalar_lea.sflag [#allocation8], %s680
        %s682 = sand.u32 %s113, 1
        %s683 = scalar_lea.vmem [#allocation9], %s682
        // Predicated region
        $region89: #{tpu_custom_call.1} parent=79 // pred_check
          %p684 = pneg %p126
        $region90: #{tpu_custom_call.1} parent=79 // pred_check_branch
          %686 = sbr.rel (%p684) target = $region92
        $region91: #{tpu_custom_call.1} parent=79 // pred_region
          %687 = dma.done %s681, 16
        $region92: #{tpu_custom_call.1} parent=79 // pred_fallthru
          _
        %s688 = sand.u32 %s41, 1
        %s689 = scalar_lea.sflag [#allocation11], %s688
        %s690 = sand.u32 %s139, 1
        %s691 = smul.addr %s690, 192
        %s692 = scalar_lea.vmem [#allocation10], %s691
        // Predicated region
        $region93: #{tpu_custom_call.1} parent=79 // pred_check
          %p693 = pneg %p152
        $region94: #{tpu_custom_call.1} parent=79 // pred_check_branch
          %695 = sbr.rel (%p693) target = $region96
        $region95: #{tpu_custom_call.1} parent=79 // pred_region
          %696 = dma.done %s689, 3072
        $region96: #{tpu_custom_call.1} parent=79 // pred_fallthru
          _
        %s697 = sand.u32 %s41, 1
        %s698 = scalar_lea.sflag [#allocation11], %s697
        %s699 = sand.u32 %s191, 1
        %s700 = smul.addr %s699, 64
        %s701 = scalar_lea.vmem [#allocation12], %s700
        // Predicated region
        $region97: #{tpu_custom_call.1} parent=79 // pred_check
          %p702 = pneg %p204
        $region98: #{tpu_custom_call.1} parent=79 // pred_check_branch
          %704 = sbr.rel (%p702) target = $region100
        $region99: #{tpu_custom_call.1} parent=79 // pred_region
          %705 = dma.done %s698, 1024
        $region100: #{tpu_custom_call.1} parent=79 // pred_fallthru
          _
        %s706 = sand.u32 %s41, 1
        %s707 = scalar_lea.sflag [#allocation14], %s706
        %s708 = sand.u32 %s295, 1
        %s709 = smul.addr %s708, 128
        %s710 = scalar_lea.vmem [#allocation13], %s709
        // Predicated region
        $region101: #{tpu_custom_call.1} parent=79 // pred_check
          %p711 = pneg %p308
        $region102: #{tpu_custom_call.1} parent=79 // pred_check_branch
          %713 = sbr.rel (%p711) target = $region104
        $region103: #{tpu_custom_call.1} parent=79 // pred_region
          %714 = dma.done %s707, 2048
        $region104: #{tpu_custom_call.1} parent=79 // pred_fallthru
          _
        %s715 = sand.u32 %s41, 1
        %s716 = scalar_lea.sflag [#allocation14], %s715
        %s717 = sand.u32 %s347, 1
        %s718 = smul.addr %s717, 128
        %s719 = scalar_lea.vmem [#allocation15], %s718
        // Predicated region
        $region105: #{tpu_custom_call.1} parent=79 // pred_check
          %p720 = pneg %p360
        $region106: #{tpu_custom_call.1} parent=79 // pred_check_branch
          %722 = sbr.rel (%p720) target = $region108
        $region107: #{tpu_custom_call.1} parent=79 // pred_region
          %723 = dma.done %s716, 2048
        $region108: #{tpu_custom_call.1} parent=79 // pred_fallthru
          _
        %s724 = sand.u32 %s61, 1
        %s725 = scalar_lea.sflag [#allocation5], %s724
        %s726 = sand.u32 %s61, 1
        %s727 = smul.addr %s726, 128
        %s728 = scalar_lea.vmem [#allocation4], %s727
        %p729 = pneg %p74
        %p730 = pneg %p71
        %s731 = sand.u32 %s41, 1
        %s732 = scalar_lea.sflag [#allocation8], %s731
        %s733 = sand.u32 %s87, 1
        %s734 = scalar_lea.vmem [#allocation7], %s733
        %p735 = pneg %p100
        %p736 = pneg %p97
        %s737 = sand.u32 %s41, 1
        %s738 = scalar_lea.sflag [#allocation8], %s737
        %s739 = sand.u32 %s113, 1
        %s740 = scalar_lea.vmem [#allocation9], %s739
        %p741 = pneg %p126
        %p742 = pneg %p123
        %s743 = sand.u32 %s41, 1
        %s744 = scalar_lea.sflag [#allocation11], %s743
        %s745 = sand.u32 %s139, 1
        %s746 = smul.addr %s745, 192
        %s747 = scalar_lea.vmem [#allocation10], %s746
        %p748 = pneg %p152
        %p749 = pneg %p149
        %p750 = scmp.lt.s32.totalorder %s46, 1
        %s751 = scalar_select %p750, %s46, 1
        %s752 = smul.addr %s751, 3
        %s753 = scalar_lea.vmem %s4, %s752
        %p754 = pneg %p178
        %p755 = pneg %p175
        %s756 = sand.u32 %s41, 1
        %s757 = scalar_lea.sflag [#allocation11], %s756
        %s758 = sand.u32 %s191, 1
        %s759 = smul.addr %s758, 64
        %s760 = scalar_lea.vmem [#allocation12], %s759
        %p761 = pneg %p204
        %p762 = pneg %p201
        %p763 = scmp.lt.s32.totalorder %s46, 1
        %s764 = scalar_select %p763, %s46, 1
        %s765 = scalar_lea.vmem %s6, %s764
        %p766 = pneg %p230
        %p767 = pneg %p227
        %p768 = scmp.lt.s32.totalorder %s46, 1
        %s769 = scalar_select %p768, %s46, 1
        %s770 = scalar_lea.vmem %s7, %s769
        %p771 = pneg %p256
        %p772 = pneg %p253
        %p773 = scmp.lt.s32.totalorder %s46, 1
        %s774 = scalar_select %p773, %s46, 1
        %s775 = scalar_lea.vmem %s8, %s774
        %p776 = pneg %p282
        %p777 = pneg %p279
        %s778 = sand.u32 %s41, 1
        %s779 = scalar_lea.sflag [#allocation14], %s778
        %s780 = sand.u32 %s295, 1
        %s781 = smul.addr %s780, 128
        %s782 = scalar_lea.vmem [#allocation13], %s781
        %p783 = pneg %p308
        %p784 = pneg %p305
        %p785 = scmp.lt.s32.totalorder %s46, 1
        %s786 = scalar_select %p785, %s46, 1
        %s787 = smul.addr %s786, 2
        %s788 = scalar_lea.vmem %s10, %s787
        %p789 = pneg %p334
        %p790 = pneg %p331
        %s791 = sand.u32 %s41, 1
        %s792 = scalar_lea.sflag [#allocation14], %s791
        %s793 = sand.u32 %s347, 1
        %s794 = smul.addr %s793, 128
        %s795 = scalar_lea.vmem [#allocation15], %s794
        %p796 = pneg %p360
        %p797 = pneg %p357
        %p798 = scmp.lt.s32.totalorder %s46, 1
        %s799 = scalar_select %p798, %s46, 1
        %s800 = scalar_lea.vmem %s12, %s799
        %p801 = pneg %p386
        %p802 = pneg %p383
        %p803 = pneg %p407
        %p804 = pneg %p404
        %p805 = pneg %p428
        %p806 = pneg %p425
        %p807 = pneg %p454
        %p808 = pneg %p451
        %s809 = sand.u32 %s441, 1
        %s810 = scalar_lea.sflag [#allocation6], %s809
        %s811 = sand.u32 %s441, 1
        %s812 = smul.addr %s811, 128
        %s813 = scalar_lea.vmem [#allocation16], %s812
        %p814 = scmp.lt.s32.totalorder %s46, 1
        %s815 = scalar_select %p814, %s46, 1
        %s816 = smul.addr %s815, 3
        %s817 = scalar_lea.vmem %s4, %s816
        %p818 = scmp.lt.s32.totalorder %s46, 1
        %s819 = scalar_select %p818, %s46, 1
        %s820 = scalar_lea.vmem %s6, %s819
        %p821 = scmp.lt.s32.totalorder %s46, 1
        %s822 = scalar_select %p821, %s46, 1
        %s823 = scalar_lea.vmem %s7, %s822
        %p824 = scmp.lt.s32.totalorder %s46, 1
        %s825 = scalar_select %p824, %s46, 1
        %s826 = scalar_lea.vmem %s8, %s825
        %p827 = scmp.lt.s32.totalorder %s46, 1
        %s828 = scalar_select %p827, %s46, 1
        %s829 = smul.addr %s828, 2
        %s830 = scalar_lea.vmem %s10, %s829
        %p831 = scmp.lt.s32.totalorder %s46, 1
        %s832 = scalar_select %p831, %s46, 1
        %s833 = scalar_lea.vmem %s12, %s832
        %p835 = scmp.eq.s32.totalorder %s46, 0
        // Predicated region
        $region109: #{tpu_custom_call.1} parent=79 // pred_check
          %p836 = pneg %p835
        $region110: #{tpu_custom_call.1} parent=79 // pred_check_branch
          %838 = sbr.rel (%p836) target = $region112
        $region111: #{tpu_custom_call.1} parent=79 // pred_region
          %v839 = vld [vmem:[%s667] sm:$0xff]
          %v840 = vld [vmem:[%s667 + $0x8] sm:$0xff]
          %v841 = vld [vmem:[%s667 + $0x10] sm:$0xff]
          %v842 = vld [vmem:[%s667 + $0x18] sm:$0xff]
          %v843 = vld [vmem:[%s667 + $0x20] sm:$0xff]
          %v844 = vld [vmem:[%s667 + $0x28] sm:$0xff]
          %v845 = vld [vmem:[%s667 + $0x30] sm:$0xff]
          %v846 = vld [vmem:[%s667 + $0x38] sm:$0xff]
          %v847 = vld [vmem:[%s667 + $0x40] sm:$0xff]
          %v848 = vld [vmem:[%s667 + $0x48] sm:$0xff]
          %v849 = vld [vmem:[%s667 + $0x50] sm:$0xff]
          %v850 = vld [vmem:[%s667 + $0x58] sm:$0xff]
          %v851 = vld [vmem:[%s667 + $0x60] sm:$0xff]
          %v852 = vld [vmem:[%s667 + $0x68] sm:$0xff]
          %v853 = vld [vmem:[%s667 + $0x70] sm:$0xff]
          %v854 = vld [vmem:[%s667 + $0x78] sm:$0xff]
          %855 = vst [vmem:[#allocation2] sm:$0xff] %v839
          %856 = vst [vmem:[#allocation2 + $0x8] sm:$0xff] %v840
          %857 = vst [vmem:[#allocation2 + $0x10] sm:$0xff] %v841
          %858 = vst [vmem:[#allocation2 + $0x18] sm:$0xff] %v842
          %859 = vst [vmem:[#allocation2 + $0x20] sm:$0xff] %v843
          %860 = vst [vmem:[#allocation2 + $0x28] sm:$0xff] %v844
          %861 = vst [vmem:[#allocation2 + $0x30] sm:$0xff] %v845
          %862 = vst [vmem:[#allocation2 + $0x38] sm:$0xff] %v846
          %863 = vst [vmem:[#allocation2 + $0x40] sm:$0xff] %v847
          %864 = vst [vmem:[#allocation2 + $0x48] sm:$0xff] %v848
          %865 = vst [vmem:[#allocation2 + $0x50] sm:$0xff] %v849
          %866 = vst [vmem:[#allocation2 + $0x58] sm:$0xff] %v850
          %867 = vst [vmem:[#allocation2 + $0x60] sm:$0xff] %v851
          %868 = vst [vmem:[#allocation2 + $0x68] sm:$0xff] %v852
          %869 = vst [vmem:[#allocation2 + $0x70] sm:$0xff] %v853
          %870 = vst [vmem:[#allocation2 + $0x78] sm:$0xff] %v854
        $region112: #{tpu_custom_call.1} parent=79 // pred_fallthru
          _
        %v871 = vld [vmem:[#allocation2] sm:$0xff]
        %v872 = vld [vmem:[#allocation2 + $0x8] sm:$0xff]
        %v873 = vld [vmem:[#allocation2 + $0x10] sm:$0xff]
        %v874 = vld [vmem:[#allocation2 + $0x18] sm:$0xff]
        %v875 = vld [vmem:[#allocation2 + $0x20] sm:$0xff]
        %v876 = vld [vmem:[#allocation2 + $0x28] sm:$0xff]
        %v877 = vld [vmem:[#allocation2 + $0x30] sm:$0xff]
        %v878 = vld [vmem:[#allocation2 + $0x38] sm:$0xff]
        %v879 = vld [vmem:[#allocation2 + $0x40] sm:$0xff]
        %v880 = vld [vmem:[#allocation2 + $0x48] sm:$0xff]
        %v881 = vld [vmem:[#allocation2 + $0x50] sm:$0xff]
        %v882 = vld [vmem:[#allocation2 + $0x58] sm:$0xff]
        %v883 = vld [vmem:[#allocation2 + $0x60] sm:$0xff]
        %v884 = vld [vmem:[#allocation2 + $0x68] sm:$0xff]
        %v885 = vld [vmem:[#allocation2 + $0x70] sm:$0xff]
        %v886 = vld [vmem:[#allocation2 + $0x78] sm:$0xff]
        %v887 = vld [vmem:[%s675] sm:$0x1]
        %v888 = vld [vmem:[%s683] sm:$0x1]
        %889 = vadd.xlane.f32.xlu0 %v871
        %v890 = vpop.xlane.xlu0 %889
        %891 = vadd.xlane.f32.xlu0 %v872
        %v892 = vpop.xlane.xlu0 %891
        %893 = vadd.xlane.f32.xlu0 %v873
        %v894 = vpop.xlane.xlu0 %893
        %895 = vadd.xlane.f32.xlu0 %v874
        %v896 = vpop.xlane.xlu0 %895
        %897 = vadd.xlane.f32.xlu0 %v875
        %v898 = vpop.xlane.xlu0 %897
        %899 = vadd.xlane.f32.xlu0 %v876
        %v900 = vpop.xlane.xlu0 %899
        %901 = vadd.xlane.f32.xlu0 %v877
        %v902 = vpop.xlane.xlu0 %901
        %903 = vadd.xlane.f32.xlu0 %v878
        %v904 = vpop.xlane.xlu0 %903
        %905 = vadd.xlane.f32.xlu0 %v879
        %v906 = vpop.xlane.xlu0 %905
        %907 = vadd.xlane.f32.xlu0 %v880
        %v908 = vpop.xlane.xlu0 %907
        %909 = vadd.xlane.f32.xlu0 %v881
        %v910 = vpop.xlane.xlu0 %909
        %911 = vadd.xlane.f32.xlu0 %v882
        %v912 = vpop.xlane.xlu0 %911
        %913 = vadd.xlane.f32.xlu0 %v883
        %v914 = vpop.xlane.xlu0 %913
        %915 = vadd.xlane.f32.xlu0 %v884
        %v916 = vpop.xlane.xlu0 %915
        %917 = vadd.xlane.f32.xlu0 %v885
        %v918 = vpop.xlane.xlu0 %917
        %919 = vadd.xlane.f32.xlu0 %v886
        %v920 = vpop.xlane.xlu0 %919
        %v921 = vrcp.pop 128.0
        %v922 = vmul.f32 %v890, %v921
        %v923 = vmul.f32 %v892, %v921
        %v924 = vmul.f32 %v894, %v921
        %v925 = vmul.f32 %v896, %v921
        %v926 = vmul.f32 %v898, %v921
        %v927 = vmul.f32 %v900, %v921
        %v928 = vmul.f32 %v902, %v921
        %v929 = vmul.f32 %v904, %v921
        %v930 = vmul.f32 %v906, %v921
        %v931 = vmul.f32 %v908, %v921
        %v932 = vmul.f32 %v910, %v921
        %v933 = vmul.f32 %v912, %v921
        %v934 = vmul.f32 %v914, %v921
        %v935 = vmul.f32 %v916, %v921
        %v936 = vmul.f32 %v918, %v921
        %v937 = vmul.f32 %v920, %v921
        %v938 = vsub.f32 %v871, %v922
        %v939 = vsub.f32 %v872, %v923
        %v940 = vsub.f32 %v873, %v924
        %v941 = vsub.f32 %v874, %v925
        %v942 = vsub.f32 %v875, %v926
        %v943 = vsub.f32 %v876, %v927
        %v944 = vsub.f32 %v877, %v928
        %v945 = vsub.f32 %v878, %v929
        %v946 = vsub.f32 %v879, %v930
        %v947 = vsub.f32 %v880, %v931
        %v948 = vsub.f32 %v881, %v932
        %v949 = vsub.f32 %v882, %v933
        %v950 = vsub.f32 %v883, %v934
        %v951 = vsub.f32 %v884, %v935
        %v952 = vsub.f32 %v885, %v936
        %v953 = vsub.f32 %v886, %v937
        %v954 = vmul.f32 %v938, %v938
        %v955 = vmul.f32 %v939, %v939
        %v956 = vmul.f32 %v940, %v940
        %v957 = vmul.f32 %v941, %v941
        %v958 = vmul.f32 %v942, %v942
        %v959 = vmul.f32 %v943, %v943
        %v960 = vmul.f32 %v944, %v944
        %v961 = vmul.f32 %v945, %v945
        %v962 = vmul.f32 %v946, %v946
        %v963 = vmul.f32 %v947, %v947
        %v964 = vmul.f32 %v948, %v948
        %v965 = vmul.f32 %v949, %v949
        %v966 = vmul.f32 %v950, %v950
        %v967 = vmul.f32 %v951, %v951
        %v968 = vmul.f32 %v952, %v952
        %v969 = vmul.f32 %v953, %v953
        %970 = vadd.xlane.f32.xlu0 %v954
        %v971 = vpop.xlane.xlu0 %970
        %972 = vadd.xlane.f32.xlu0 %v955
        %v973 = vpop.xlane.xlu0 %972
        %974 = vadd.xlane.f32.xlu0 %v956
        %v975 = vpop.xlane.xlu0 %974
        %976 = vadd.xlane.f32.xlu0 %v957
        %v977 = vpop.xlane.xlu0 %976
        %978 = vadd.xlane.f32.xlu0 %v958
        %v979 = vpop.xlane.xlu0 %978
        %980 = vadd.xlane.f32.xlu0 %v959
        %v981 = vpop.xlane.xlu0 %980
        %982 = vadd.xlane.f32.xlu0 %v960
        %v983 = vpop.xlane.xlu0 %982
        %984 = vadd.xlane.f32.xlu0 %v961
        %v985 = vpop.xlane.xlu0 %984
        %986 = vadd.xlane.f32.xlu0 %v962
        %v987 = vpop.xlane.xlu0 %986
        %988 = vadd.xlane.f32.xlu0 %v963
        %v989 = vpop.xlane.xlu0 %988
        %990 = vadd.xlane.f32.xlu0 %v964
        %v991 = vpop.xlane.xlu0 %990
        %992 = vadd.xlane.f32.xlu0 %v965
        %v993 = vpop.xlane.xlu0 %992
        %994 = vadd.xlane.f32.xlu0 %v966
        %v995 = vpop.xlane.xlu0 %994
        %996 = vadd.xlane.f32.xlu0 %v967
        %v997 = vpop.xlane.xlu0 %996
        %998 = vadd.xlane.f32.xlu0 %v968
        %v999 = vpop.xlane.xlu0 %998
        %1000 = vadd.xlane.f32.xlu0 %v969
        %v1001 = vpop.xlane.xlu0 %1000
        %v1002 = vmul.f32 %v971, %v921
        %v1003 = vmul.f32 %v973, %v921
        %v1004 = vmul.f32 %v975, %v921
        %v1005 = vmul.f32 %v977, %v921
        %v1006 = vmul.f32 %v979, %v921
        %v1007 = vmul.f32 %v981, %v921
        %v1008 = vmul.f32 %v983, %v921
        %v1009 = vmul.f32 %v985, %v921
        %v1010 = vmul.f32 %v987, %v921
        %v1011 = vmul.f32 %v989, %v921
        %v1012 = vmul.f32 %v991, %v921
        %v1013 = vmul.f32 %v993, %v921
        %v1014 = vmul.f32 %v995, %v921
        %v1015 = vmul.f32 %v997, %v921
        %v1016 = vmul.f32 %v999, %v921
        %v1017 = vmul.f32 %v1001, %v921
        %v1018 = vadd.f32 %v1002, 1e-06
        %v1019 = vadd.f32 %v1003, 1e-06
        %v1020 = vadd.f32 %v1004, 1e-06
        %v1021 = vadd.f32 %v1005, 1e-06
        %v1022 = vadd.f32 %v1006, 1e-06
        %v1023 = vadd.f32 %v1007, 1e-06
        %v1024 = vadd.f32 %v1008, 1e-06
        %v1025 = vadd.f32 %v1009, 1e-06
        %v1026 = vadd.f32 %v1010, 1e-06
        %v1027 = vadd.f32 %v1011, 1e-06
        %v1028 = vadd.f32 %v1012, 1e-06
        %v1029 = vadd.f32 %v1013, 1e-06
        %v1030 = vadd.f32 %v1014, 1e-06
        %v1031 = vadd.f32 %v1015, 1e-06
        %v1032 = vadd.f32 %v1016, 1e-06
        %v1033 = vadd.f32 %v1017, 1e-06
        %v1034 = vrsqrt.pop %v1018
        %v1035 = vrsqrt.pop %v1019
        %v1036 = vrsqrt.pop %v1020
        %v1037 = vrsqrt.pop %v1021
        %v1038 = vrsqrt.pop %v1022
        %v1039 = vrsqrt.pop %v1023
        %v1040 = vrsqrt.pop %v1024
        %v1041 = vrsqrt.pop %v1025
        %v1042 = vrsqrt.pop %v1026
        %v1043 = vrsqrt.pop %v1027
        %v1044 = vrsqrt.pop %v1028
        %v1045 = vrsqrt.pop %v1029
        %v1046 = vrsqrt.pop %v1030
        %v1047 = vrsqrt.pop %v1031
        %v1048 = vrsqrt.pop %v1032
        %v1049 = vrsqrt.pop %v1033
        %v1050 = vmul.f32 %v938, %v1034
        %v1051 = vmul.f32 %v939, %v1035
        %v1052 = vmul.f32 %v940, %v1036
        %v1053 = vmul.f32 %v941, %v1037
        %v1054 = vmul.f32 %v942, %v1038
        %v1055 = vmul.f32 %v943, %v1039
        %v1056 = vmul.f32 %v944, %v1040
        %v1057 = vmul.f32 %v945, %v1041
        %v1058 = vmul.f32 %v946, %v1042
        %v1059 = vmul.f32 %v947, %v1043
        %v1060 = vmul.f32 %v948, %v1044
        %v1061 = vmul.f32 %v949, %v1045
        %v1062 = vmul.f32 %v950, %v1046
        %v1063 = vmul.f32 %v951, %v1047
        %v1064 = vmul.f32 %v952, %v1048
        %v1065 = vmul.f32 %v953, %v1049
        %v1067 = vlaneseq
        %v1068 = vshrl.u32 %v1067, 7
        %v1069 = vsub.s32 0, %v1068
        %v1070 = vrot.slane %v887, %v1069
        %v1072 = vmul.f32 %v1050, %v1070
        %v1073 = vmul.f32 %v1051, %v1070
        %v1074 = vmul.f32 %v1052, %v1070
        %v1075 = vmul.f32 %v1053, %v1070
        %v1076 = vmul.f32 %v1054, %v1070
        %v1077 = vmul.f32 %v1055, %v1070
        %v1078 = vmul.f32 %v1056, %v1070
        %v1079 = vmul.f32 %v1057, %v1070
        %v1080 = vmul.f32 %v1058, %v1070
        %v1081 = vmul.f32 %v1059, %v1070
        %v1082 = vmul.f32 %v1060, %v1070
        %v1083 = vmul.f32 %v1061, %v1070
        %v1084 = vmul.f32 %v1062, %v1070
        %v1085 = vmul.f32 %v1063, %v1070
        %v1086 = vmul.f32 %v1064, %v1070
        %v1087 = vmul.f32 %v1065, %v1070
        %v1089 = vlaneseq
        %v1090 = vshrl.u32 %v1089, 7
        %v1091 = vsub.s32 0, %v1090
        %v1092 = vrot.slane %v888, %v1091
        %v1094 = vadd.f32 %v1072, %v1092
        %v1095 = vadd.f32 %v1073, %v1092
        %v1096 = vadd.f32 %v1074, %v1092
        %v1097 = vadd.f32 %v1075, %v1092
        %v1098 = vadd.f32 %v1076, %v1092
        %v1099 = vadd.f32 %v1077, %v1092
        %v1100 = vadd.f32 %v1078, %v1092
        %v1101 = vadd.f32 %v1079, %v1092
        %v1102 = vadd.f32 %v1080, %v1092
        %v1103 = vadd.f32 %v1081, %v1092
        %v1104 = vadd.f32 %v1082, %v1092
        %v1105 = vadd.f32 %v1083, %v1092
        %v1106 = vadd.f32 %v1084, %v1092
        %v1107 = vadd.f32 %v1085, %v1092
        %v1108 = vadd.f32 %v1086, %v1092
        %v1109 = vadd.f32 %v1087, %v1092
        %v1110 = vpack.c.bf16 %v1095, %v1094
        %v1111 = vpack.c.bf16 %v1097, %v1096
        %v1112 = vpack.c.bf16 %v1099, %v1098
        %v1113 = vpack.c.bf16 %v1101, %v1100
        %v1114 = vpack.c.bf16 %v1103, %v1102
        %v1115 = vpack.c.bf16 %v1105, %v1104
        %v1116 = vpack.c.bf16 %v1107, %v1106
        %v1117 = vpack.c.bf16 %v1109, %v1108
        %v1118 = vld [vmem:[%s692] sm:$0xff]
        %v1119 = vld [vmem:[%s692 + $0x8] sm:$0xf]
        %v1120 = vld [vmem:[%s692 + $0xc] sm:$0xff]
        %v1121 = vld [vmem:[%s692 + $0x14] sm:$0xf]
        %v1122 = vld [vmem:[%s692 + $0x18] sm:$0xff]
        %v1123 = vld [vmem:[%s692 + $0x20] sm:$0xf]
        %v1124 = vld [vmem:[%s692 + $0x24] sm:$0xff]
        %v1125 = vld [vmem:[%s692 + $0x2c] sm:$0xf]
        %v1126 = vld [vmem:[%s692 + $0x30] sm:$0xff]
        %v1127 = vld [vmem:[%s692 + $0x38] sm:$0xf]
        %v1128 = vld [vmem:[%s692 + $0x3c] sm:$0xff]
        %v1129 = vld [vmem:[%s692 + $0x44] sm:$0xf]
        %v1130 = vld [vmem:[%s692 + $0x48] sm:$0xff]
        %v1131 = vld [vmem:[%s692 + $0x50] sm:$0xf]
        %v1132 = vld [vmem:[%s692 + $0x54] sm:$0xff]
        %v1133 = vld [vmem:[%s692 + $0x5c] sm:$0xf]
        %v1134 = vld [vmem:[%s692 + $0x60] sm:$0xff]
        %v1135 = vld [vmem:[%s692 + $0x68] sm:$0xf]
        %v1136 = vld [vmem:[%s692 + $0x6c] sm:$0xff]
        %v1137 = vld [vmem:[%s692 + $0x74] sm:$0xf]
        %v1138 = vld [vmem:[%s692 + $0x78] sm:$0xff]
        %v1139 = vld [vmem:[%s692 + $0x80] sm:$0xf]
        %v1140 = vld [vmem:[%s692 + $0x84] sm:$0xff]
        %v1141 = vld [vmem:[%s692 + $0x8c] sm:$0xf]
        %v1142 = vld [vmem:[%s692 + $0x90] sm:$0xff]
        %v1143 = vld [vmem:[%s692 + $0x98] sm:$0xf]
        %v1144 = vld [vmem:[%s692 + $0x9c] sm:$0xff]
        %v1145 = vld [vmem:[%s692 + $0xa4] sm:$0xf]
        %v1146 = vld [vmem:[%s692 + $0xa8] sm:$0xff]
        %v1147 = vld [vmem:[%s692 + $0xb0] sm:$0xf]
        %v1148 = vld [vmem:[%s692 + $0xb4] sm:$0xff]
        %v1149 = vld [vmem:[%s692 + $0xbc] sm:$0xf]
        %v1150 = vld [vmem:[%s817] sm:$0x7]
        %v1152 = vlaneseq
        %v1153 = vshrl.u32 %v1152, 7
        %v1154 = vsub.s32 0, %v1153
        %v1155 = vrot.slane %v1150, %v1154
        %v1156 = vlaneseq
        %v1157 = vshrl.u32 %v1156, 7
        %v1158 = vsub.s32 1, %v1157
        %v1159 = vrot.slane %v1150, %v1158
        %v1160 = vlaneseq
        %v1161 = vshrl.u32 %v1160, 7
        %v1162 = vsub.s32 2, %v1161
        %v1163 = vrot.slane %v1150, %v1162
        %v1199 = vunpack.c.l.b16 %v1118
        %v1200 = vunpack.c.h.b16 %v1118
        %v1201 = vunpack.c.l.b16 %v1119
        %v1202 = vunpack.c.l.b16 %v1120
        %v1203 = vunpack.c.h.b16 %v1120
        %v1204 = vunpack.c.l.b16 %v1121
        %v1205 = vunpack.c.l.b16 %v1122
        %v1206 = vunpack.c.h.b16 %v1122
        %v1207 = vunpack.c.l.b16 %v1123
        %v1208 = vunpack.c.l.b16 %v1124
        %v1209 = vunpack.c.h.b16 %v1124
        %v1210 = vunpack.c.l.b16 %v1125
        %v1211 = vunpack.c.l.b16 %v1126
        %v1212 = vunpack.c.h.b16 %v1126
        %v1213 = vunpack.c.l.b16 %v1127
        %v1214 = vunpack.c.l.b16 %v1128
        %v1215 = vunpack.c.h.b16 %v1128
        %v1216 = vunpack.c.l.b16 %v1129
        %v1217 = vunpack.c.l.b16 %v1130
        %v1218 = vunpack.c.h.b16 %v1130
        %v1219 = vunpack.c.l.b16 %v1131
        %v1220 = vunpack.c.l.b16 %v1132
        %v1221 = vunpack.c.h.b16 %v1132
        %v1222 = vunpack.c.l.b16 %v1133
        %v1223 = vunpack.c.l.b16 %v1134
        %v1224 = vunpack.c.h.b16 %v1134
        %v1225 = vunpack.c.l.b16 %v1135
        %v1226 = vunpack.c.l.b16 %v1136
        %v1227 = vunpack.c.h.b16 %v1136
        %v1228 = vunpack.c.l.b16 %v1137
        %v1229 = vunpack.c.l.b16 %v1138
        %v1230 = vunpack.c.h.b16 %v1138
        %v1231 = vunpack.c.l.b16 %v1139
        %v1232 = vunpack.c.l.b16 %v1140
        %v1233 = vunpack.c.h.b16 %v1140
        %v1234 = vunpack.c.l.b16 %v1141
        %v1235 = vunpack.c.l.b16 %v1142
        %v1236 = vunpack.c.h.b16 %v1142
        %v1237 = vunpack.c.l.b16 %v1143
        %v1238 = vunpack.c.l.b16 %v1144
        %v1239 = vunpack.c.h.b16 %v1144
        %v1240 = vunpack.c.l.b16 %v1145
        %v1241 = vunpack.c.l.b16 %v1146
        %v1242 = vunpack.c.h.b16 %v1146
        %v1243 = vunpack.c.l.b16 %v1147
        %v1244 = vunpack.c.l.b16 %v1148
        %v1245 = vunpack.c.h.b16 %v1148
        %v1246 = vunpack.c.l.b16 %v1149
        %v1247 = vpack.c.b16 %v1202, %v1199
        %v1248 = vpack.c.b16 %v1203, %v1200
        %v1249 = vpack.c.b16 %v1204, %v1201
        %v1250 = vpack.c.b16 %v1208, %v1205
        %v1251 = vpack.c.b16 %v1209, %v1206
        %v1252 = vpack.c.b16 %v1210, %v1207
        %v1253 = vpack.c.b16 %v1214, %v1211
        %v1254 = vpack.c.b16 %v1215, %v1212
        %v1255 = vpack.c.b16 %v1216, %v1213
        %v1256 = vpack.c.b16 %v1220, %v1217
        %v1257 = vpack.c.b16 %v1221, %v1218
        %v1258 = vpack.c.b16 %v1222, %v1219
        %v1259 = vpack.c.b16 %v1226, %v1223
        %v1260 = vpack.c.b16 %v1227, %v1224
        %v1261 = vpack.c.b16 %v1228, %v1225
        %v1262 = vpack.c.b16 %v1232, %v1229
        %v1263 = vpack.c.b16 %v1233, %v1230
        %v1264 = vpack.c.b16 %v1234, %v1231
        %v1265 = vpack.c.b16 %v1238, %v1235
        %v1266 = vpack.c.b16 %v1239, %v1236
        %v1267 = vpack.c.b16 %v1240, %v1237
        %v1268 = vpack.c.b16 %v1244, %v1241
        %v1269 = vpack.c.b16 %v1245, %v1242
        %v1270 = vpack.c.b16 %v1246, %v1243
        %1295 = vmatprep.subr.bf16.mxu0 %v1248
        %1296 = vmatpush1.bf16.msra.mxu0 %v1247
        %1297 = vmatprep.subr.bf16.mxu0 %v1251
        %1298 = vmatpush1.bf16.msra.mxu0 %v1250
        %1299 = vmatprep.subr.bf16.mxu0 %v1254
        %1300 = vmatpush1.bf16.msra.mxu0 %v1253
        %1301 = vmatprep.subr.bf16.mxu0 %v1257
        %1302 = vmatpush1.bf16.msra.mxu0 %v1256
        %1303 = vmatprep.subr.bf16.mxu0 %v1260
        %1304 = vmatpush1.bf16.msra.mxu0 %v1259
        %1305 = vmatprep.subr.bf16.mxu0 %v1263
        %1306 = vmatpush1.bf16.msra.mxu0 %v1262
        %1307 = vmatprep.subr.bf16.mxu0 %v1266
        %1308 = vmatpush1.bf16.msra.mxu0 %v1265
        %1309 = vmatprep.subr.bf16.mxu0 %v1269
        %1310 = vmatpush1.bf16.msra.mxu0 %v1268
        %1311 = vmatprep.subr.bf16.mxu0 0
        %1312 = vmatpush1.bf16.msra.mxu0 0
        %1313 = vmatprep.subr.bf16.mxu0 0
        %1314 = vmatpush1.bf16.msra.mxu0 0
        %1315 = vmatprep.subr.bf16.mxu0 0
        %1316 = vmatpush1.bf16.msra.mxu0 0
        %1317 = vmatprep.subr.bf16.mxu0 0
        %1318 = vmatpush1.bf16.msra.mxu0 0
        %1319 = vmatprep.subr.bf16.mxu0 0
        %1320 = vmatpush1.bf16.msra.mxu0 0
        %1321 = vmatprep.subr.bf16.mxu0 0
        %1322 = vmatpush1.bf16.msra.mxu0 0
        %1323 = vmatprep.subr.bf16.mxu0 0
        %1324 = vmatpush1.bf16.msra.mxu0 0
        %1325 = vmatprep.subr.bf16.mxu0 0
        %1326 = vmatpush1.bf16.msra.mxu0 0
        %1327 = vmatprep.mubr.bf16.mxu0 0
        %1328 = vmatmul.mubr.bf16.gmra.mrb[0].mxu0 %v1110
        %v1329 = vpop.f32.mrb[0].mxu0
        %v1330 = vadd.f32 %v1155, %v1329
        %v1331 = vpop.f32.mrb[0].mxu0
        %v1332 = vadd.f32 %v1159, %v1331
        %v1333 = vpop.f32.mrb[0].mxu0
        %v1334 = vadd.f32 %v1155, %v1333
        %v1335 = vpop.f32.mrb[0].mxu0
        %v1336 = vadd.f32 %v1159, %v1335
        %1337 = vmatprep.mubr.bf16.mxu0 0
        %1338 = vmatmul.mubr.bf16.gmra.mrb[0].mxu0 %v1111
        %v1339 = vpop.f32.mrb[0].mxu0
        %v1340 = vadd.f32 %v1155, %v1339
        %v1341 = vpop.f32.mrb[0].mxu0
        %v1342 = vadd.f32 %v1159, %v1341
        %v1343 = vpop.f32.mrb[0].mxu0
        %v1344 = vadd.f32 %v1155, %v1343
        %v1345 = vpop.f32.mrb[0].mxu0
        %v1346 = vadd.f32 %v1159, %v1345
        %1347 = vmatprep.mubr.bf16.mxu0 0
        %1348 = vmatmul.mubr.bf16.gmra.mrb[0].mxu0 %v1112
        %v1349 = vpop.f32.mrb[0].mxu0
        %v1350 = vadd.f32 %v1155, %v1349
        %v1351 = vpop.f32.mrb[0].mxu0
        %v1352 = vadd.f32 %v1159, %v1351
        %v1353 = vpop.f32.mrb[0].mxu0
        %v1354 = vadd.f32 %v1155, %v1353
        %v1355 = vpop.f32.mrb[0].mxu0
        %v1356 = vadd.f32 %v1159, %v1355
        %1357 = vmatprep.mubr.bf16.mxu0 0
        %1358 = vmatmul.mubr.bf16.gmra.mrb[0].mxu0 %v1113
        %v1359 = vpop.f32.mrb[0].mxu0
        %v1360 = vadd.f32 %v1155, %v1359
        %v1361 = vpop.f32.mrb[0].mxu0
        %v1362 = vadd.f32 %v1159, %v1361
        %v1363 = vpop.f32.mrb[0].mxu0
        %v1364 = vadd.f32 %v1155, %v1363
        %v1365 = vpop.f32.mrb[0].mxu0
        %v1366 = vadd.f32 %v1159, %v1365
        %1367 = vmatprep.mubr.bf16.mxu0 0
        %1368 = vmatmul.mubr.bf16.gmra.mrb[0].mxu0 %v1114
        %v1369 = vpop.f32.mrb[0].mxu0
        %v1370 = vadd.f32 %v1155, %v1369
        %v1371 = vpop.f32.mrb[0].mxu0
        %v1372 = vadd.f32 %v1159, %v1371
        %v1373 = vpop.f32.mrb[0].mxu0
        %v1374 = vadd.f32 %v1155, %v1373
        %v1375 = vpop.f32.mrb[0].mxu0
        %v1376 = vadd.f32 %v1159, %v1375
        %1377 = vmatprep.mubr.bf16.mxu0 0
        %1378 = vmatmul.mubr.bf16.gmra.mrb[0].mxu0 %v1115
        %v1379 = vpop.f32.mrb[0].mxu0
        %v1380 = vadd.f32 %v1155, %v1379
        %v1381 = vpop.f32.mrb[0].mxu0
        %v1382 = vadd.f32 %v1159, %v1381
        %v1383 = vpop.f32.mrb[0].mxu0
        %v1384 = vadd.f32 %v1155, %v1383
        %v1385 = vpop.f32.mrb[0].mxu0
        %v1386 = vadd.f32 %v1159, %v1385
        %1387 = vmatprep.mubr.bf16.mxu0 0
        %1388 = vmatmul.mubr.bf16.gmra.mrb[0].mxu0 %v1116
        %v1389 = vpop.f32.mrb[0].mxu0
        %v1390 = vadd.f32 %v1155, %v1389
        %v1391 = vpop.f32.mrb[0].mxu0
        %v1392 = vadd.f32 %v1159, %v1391
        %v1393 = vpop.f32.mrb[0].mxu0
        %v1394 = vadd.f32 %v1155, %v1393
        %v1395 = vpop.f32.mrb[0].mxu0
        %v1396 = vadd.f32 %v1159, %v1395
        %1397 = vmatprep.mubr.bf16.mxu0 0
        %1398 = vmatmul.mubr.bf16.gmra.mrb[0].mxu0 %v1117
        %v1399 = vpop.f32.mrb[0].mxu0
        %v1400 = vadd.f32 %v1155, %v1399
        %v1401 = vpop.f32.mrb[0].mxu0
        %v1402 = vadd.f32 %v1159, %v1401
        %v1403 = vpop.f32.mrb[0].mxu0
        %v1404 = vadd.f32 %v1155, %v1403
        %v1405 = vpop.f32.mrb[0].mxu0
        %v1406 = vadd.f32 %v1159, %v1405
        %1407 = vdwg.mxu0
        %1408 = vmatprep.subr.bf16.mxu0 0
        %1409 = vmatpush1.bf16.msra.mxu0 %v1249
        %1410 = vmatprep.subr.bf16.mxu0 0
        %1411 = vmatpush1.bf16.msra.mxu0 %v1252
        %1412 = vmatprep.subr.bf16.mxu0 0
        %1413 = vmatpush1.bf16.msra.mxu0 %v1255
        %1414 = vmatprep.subr.bf16.mxu0 0
        %1415 = vmatpush1.bf16.msra.mxu0 %v1258
        %1416 = vmatprep.subr.bf16.mxu0 0
        %1417 = vmatpush1.bf16.msra.mxu0 %v1261
        %1418 = vmatprep.subr.bf16.mxu0 0
        %1419 = vmatpush1.bf16.msra.mxu0 %v1264
        %1420 = vmatprep.subr.bf16.mxu0 0
        %1421 = vmatpush1.bf16.msra.mxu0 %v1267
        %1422 = vmatprep.subr.bf16.mxu0 0
        %1423 = vmatpush1.bf16.msra.mxu0 %v1270
        %1424 = vmatprep.subr.bf16.mxu0 0
        %1425 = vmatpush1.bf16.msra.mxu0 0
        %1426 = vmatprep.subr.bf16.mxu0 0
        %1427 = vmatpush1.bf16.msra.mxu0 0
        %1428 = vmatprep.subr.bf16.mxu0 0
        %1429 = vmatpush1.bf16.msra.mxu0 0
        %1430 = vmatprep.subr.bf16.mxu0 0
        %1431 = vmatpush1.bf16.msra.mxu0 0
        %1432 = vmatprep.subr.bf16.mxu0 0
        %1433 = vmatpush1.bf16.msra.mxu0 0
        %1434 = vmatprep.subr.bf16.mxu0 0
        %1435 = vmatpush1.bf16.msra.mxu0 0
        %1436 = vmatprep.subr.bf16.mxu0 0
        %1437 = vmatpush1.bf16.msra.mxu0 0
        %1438 = vmatprep.subr.bf16.mxu0 0
        %1439 = vmatpush1.bf16.msra.mxu0 0
        %1440 = vmatprep.mubr.bf16.mxu0 0
        %1441 = vmatmul.mubr.bf16.gmra.mrb[0].mxu0 %v1110
        %v1442 = vpop.f32.mrb[0].mxu0
        %v1443 = vadd.f32 %v1163, %v1442
        %v1444 = vpop.f32.mrb[0].mxu0
        %v1445 = vpop.f32.mrb[0].mxu0
        %v1446 = vadd.f32 %v1163, %v1445
        %v1447 = vpop.f32.mrb[0].mxu0
        %1448 = vmatprep.mubr.bf16.mxu0 0
        %1449 = vmatmul.mubr.bf16.gmra.mrb[0].mxu0 %v1111
        %v1450 = vpop.f32.mrb[0].mxu0
        %v1451 = vadd.f32 %v1163, %v1450
        %v1452 = vpop.f32.mrb[0].mxu0
        %v1453 = vpop.f32.mrb[0].mxu0
        %v1454 = vadd.f32 %v1163, %v1453
        %v1455 = vpop.f32.mrb[0].mxu0
        %1456 = vmatprep.mubr.bf16.mxu0 0
        %1457 = vmatmul.mubr.bf16.gmra.mrb[0].mxu0 %v1112
        %v1458 = vpop.f32.mrb[0].mxu0
        %v1459 = vadd.f32 %v1163, %v1458
        %v1460 = vpop.f32.mrb[0].mxu0
        %v1461 = vpop.f32.mrb[0].mxu0
        %v1462 = vadd.f32 %v1163, %v1461
        %v1463 = vpop.f32.mrb[0].mxu0
        %1464 = vmatprep.mubr.bf16.mxu0 0
        %1465 = vmatmul.mubr.bf16.gmra.mrb[0].mxu0 %v1113
        %v1466 = vpop.f32.mrb[0].mxu0
        %v1467 = vadd.f32 %v1163, %v1466
        %v1468 = vpop.f32.mrb[0].mxu0
        %v1469 = vpop.f32.mrb[0].mxu0
        %v1470 = vadd.f32 %v1163, %v1469
        %v1471 = vpop.f32.mrb[0].mxu0
        %1472 = vmatprep.mubr.bf16.mxu0 0
        %1473 = vmatmul.mubr.bf16.gmra.mrb[0].mxu0 %v1114
        %v1474 = vpop.f32.mrb[0].mxu0
        %v1475 = vadd.f32 %v1163, %v1474
        %v1476 = vpop.f32.mrb[0].mxu0
        %v1477 = vpop.f32.mrb[0].mxu0
        %v1478 = vadd.f32 %v1163, %v1477
        %v1479 = vpop.f32.mrb[0].mxu0
        %1480 = vmatprep.mubr.bf16.mxu0 0
        %1481 = vmatmul.mubr.bf16.gmra.mrb[0].mxu0 %v1115
        %v1482 = vpop.f32.mrb[0].mxu0
        %v1483 = vadd.f32 %v1163, %v1482
        %v1484 = vpop.f32.mrb[0].mxu0
        %v1485 = vpop.f32.mrb[0].mxu0
        %v1486 = vadd.f32 %v1163, %v1485
        %v1487 = vpop.f32.mrb[0].mxu0
        %1488 = vmatprep.mubr.bf16.mxu0 0
        %1489 = vmatmul.mubr.bf16.gmra.mrb[0].mxu0 %v1116
        %v1490 = vpop.f32.mrb[0].mxu0
        %v1491 = vadd.f32 %v1163, %v1490
        %v1492 = vpop.f32.mrb[0].mxu0
        %v1493 = vpop.f32.mrb[0].mxu0
        %v1494 = vadd.f32 %v1163, %v1493
        %v1495 = vpop.f32.mrb[0].mxu0
        %1496 = vmatprep.mubr.bf16.mxu0 0
        %1497 = vmatmul.mubr.bf16.gmra.mrb[0].mxu0 %v1117
        %v1498 = vpop.f32.mrb[0].mxu0
        %v1499 = vadd.f32 %v1163, %v1498
        %v1500 = vpop.f32.mrb[0].mxu0
        %v1501 = vpop.f32.mrb[0].mxu0
        %v1502 = vadd.f32 %v1163, %v1501
        %v1503 = vpop.f32.mrb[0].mxu0
        %1504 = vdwg.mxu0
        %v1505 = vmul.f32 %v1330, 0.17677669
        %v1506 = vmul.f32 %v1334, 0.17677669
        %v1507 = vmul.f32 %v1340, 0.17677669
        %v1508 = vmul.f32 %v1344, 0.17677669
        %v1509 = vmul.f32 %v1350, 0.17677669
        %v1510 = vmul.f32 %v1354, 0.17677669
        %v1511 = vmul.f32 %v1360, 0.17677669
        %v1512 = vmul.f32 %v1364, 0.17677669
        %v1513 = vmul.f32 %v1370, 0.17677669
        %v1514 = vmul.f32 %v1374, 0.17677669
        %v1515 = vmul.f32 %v1380, 0.17677669
        %v1516 = vmul.f32 %v1384, 0.17677669
        %v1517 = vmul.f32 %v1390, 0.17677669
        %v1518 = vmul.f32 %v1394, 0.17677669
        %v1519 = vmul.f32 %v1400, 0.17677669
        %v1520 = vmul.f32 %v1404, 0.17677669
        %v1521 = vpack.c.bf16 %v1506, %v1505
        %v1522 = vpack.c.bf16 %v1508, %v1507
        %v1523 = vpack.c.bf16 %v1510, %v1509
        %v1524 = vpack.c.bf16 %v1512, %v1511
        %v1525 = vpack.c.bf16 %v1514, %v1513
        %v1526 = vpack.c.bf16 %v1516, %v1515
        %v1527 = vpack.c.bf16 %v1518, %v1517
        %v1528 = vpack.c.bf16 %v1520, %v1519
        %v1529 = vpack.c.bf16 %v1336, %v1332
        %v1530 = vpack.c.bf16 %v1346, %v1342
        %v1531 = vpack.c.bf16 %v1356, %v1352
        %v1532 = vpack.c.bf16 %v1366, %v1362
        %v1533 = vpack.c.bf16 %v1376, %v1372
        %v1534 = vpack.c.bf16 %v1386, %v1382
        %v1535 = vpack.c.bf16 %v1396, %v1392
        %v1536 = vpack.c.bf16 %v1406, %v1402
        %v1537 = vpack.c.bf16 %v1446, %v1443
        %v1538 = vpack.c.bf16 %v1454, %v1451
        %v1539 = vpack.c.bf16 %v1462, %v1459
        %v1540 = vpack.c.bf16 %v1470, %v1467
        %v1541 = vpack.c.bf16 %v1478, %v1475
        %v1542 = vpack.c.bf16 %v1486, %v1483
        %v1543 = vpack.c.bf16 %v1494, %v1491
        %v1544 = vpack.c.bf16 %v1502, %v1499
        %vm1545 = vcmask 261120
        %v1547 = vsel %vm1545, %v1521, 0
        %v1550 = vsel %vm1545, %v1522, 0
        %v1553 = vsel %vm1545, %v1523, 0
        %v1556 = vsel %vm1545, %v1524, 0
        %v1559 = vsel %vm1545, %v1525, 0
        %v1562 = vsel %vm1545, %v1526, 0
        %v1565 = vsel %vm1545, %v1527, 0
        %v1568 = vsel %vm1545, %v1528, 0
        %v1571 = vsel %vm1545, %v1529, 0
        %v1574 = vsel %vm1545, %v1530, 0
        %v1577 = vsel %vm1545, %v1531, 0
        %v1580 = vsel %vm1545, %v1532, 0
        %v1583 = vsel %vm1545, %v1533, 0
        %v1586 = vsel %vm1545, %v1534, 0
        %v1589 = vsel %vm1545, %v1535, 0
        %v1592 = vsel %vm1545, %v1536, 0
        %1594 = vmatprep.subr.bf16.mxu0 0
        %1595 = vmatpush1.bf16.xpose.msra.mxu0 %v1571
        %1596 = vmatprep.subr.bf16.mxu0 0
        %1597 = vmatpush1.bf16.xpose.msra.mxu0 %v1574
        %1598 = vmatprep.subr.bf16.mxu0 0
        %1599 = vmatpush1.bf16.xpose.msra.mxu0 %v1577
        %1600 = vmatprep.subr.bf16.mxu0 0
        %1601 = vmatpush1.bf16.xpose.msra.mxu0 %v1580
        %1602 = vmatprep.subr.bf16.mxu0 0
        %1603 = vmatpush1.bf16.xpose.msra.mxu0 %v1583
        %1604 = vmatprep.subr.bf16.mxu0 0
        %1605 = vmatpush1.bf16.xpose.msra.mxu0 %v1586
        %1606 = vmatprep.subr.bf16.mxu0 0
        %1607 = vmatpush1.bf16.xpose.msra.mxu0 %v1589
        %1608 = vmatprep.subr.bf16.mxu0 0
        %1609 = vmatpush1.bf16.xpose.msra.mxu0 %v1592
        %1610 = vmatprep.subr.bf16.mxu0 0
        %1611 = vmatpush1.bf16.xpose.msra.mxu0 0
        %1612 = vmatprep.subr.bf16.mxu0 0
        %1613 = vmatpush1.bf16.xpose.msra.mxu0 0
        %1614 = vmatprep.subr.bf16.mxu0 0
        %1615 = vmatpush1.bf16.xpose.msra.mxu0 0
        %1616 = vmatprep.subr.bf16.mxu0 0
        %1617 = vmatpush1.bf16.xpose.msra.mxu0 0
        %1618 = vmatprep.subr.bf16.mxu0 0
        %1619 = vmatpush1.bf16.xpose.msra.mxu0 0
        %1620 = vmatprep.subr.bf16.mxu0 0
        %1621 = vmatpush1.bf16.xpose.msra.mxu0 0
        %1622 = vmatprep.subr.bf16.mxu0 0
        %1623 = vmatpush1.bf16.xpose.msra.mxu0 0
        %1624 = vmatprep.subr.bf16.mxu0 0
        %1625 = vmatpush1.bf16.xpose.msra.mxu0 0
        %1626 = vmatprep.mubr.bf16.mxu0 0
        %1627 = vmatmul.mubr.bf16.gmra.mrb[0].mxu0 %v1547
        %v1628 = vpop.f32.mrb[0].mxu0
        %v1629 = vadd.f32 0.0, %v1628
        %v1630 = vpop.f32.mrb[0].mxu0
        %v1631 = vpop.f32.mrb[0].mxu0
        %v1632 = vadd.f32 0.0, %v1631
        %v1633 = vpop.f32.mrb[0].mxu0
        %1634 = vmatprep.mubr.bf16.mxu0 0
        %1635 = vmatmul.mubr.bf16.gmra.mrb[0].mxu0 %v1550
        %v1636 = vpop.f32.mrb[0].mxu0
        %v1637 = vadd.f32 0.0, %v1636
        %v1638 = vpop.f32.mrb[0].mxu0
        %v1639 = vpop.f32.mrb[0].mxu0
        %v1640 = vadd.f32 0.0, %v1639
        %v1641 = vpop.f32.mrb[0].mxu0
        %1642 = vmatprep.mubr.bf16.mxu0 0
        %1643 = vmatmul.mubr.bf16.gmra.mrb[0].mxu0 %v1553
        %v1644 = vpop.f32.mrb[0].mxu0
        %v1645 = vadd.f32 0.0, %v1644
        %v1646 = vpop.f32.mrb[0].mxu0
        %v1647 = vpop.f32.mrb[0].mxu0
        %v1648 = vadd.f32 0.0, %v1647
        %v1649 = vpop.f32.mrb[0].mxu0
        %1650 = vmatprep.mubr.bf16.mxu0 0
        %1651 = vmatmul.mubr.bf16.gmra.mrb[0].mxu0 %v1556
        %v1652 = vpop.f32.mrb[0].mxu0
        %v1653 = vadd.f32 0.0, %v1652
        %v1654 = vpop.f32.mrb[0].mxu0
        %v1655 = vpop.f32.mrb[0].mxu0
        %v1656 = vadd.f32 0.0, %v1655
        %v1657 = vpop.f32.mrb[0].mxu0
        %1658 = vmatprep.mubr.bf16.mxu0 0
        %1659 = vmatmul.mubr.bf16.gmra.mrb[0].mxu0 %v1559
        %v1660 = vpop.f32.mrb[0].mxu0
        %v1661 = vadd.f32 0.0, %v1660
        %v1662 = vpop.f32.mrb[0].mxu0
        %v1663 = vpop.f32.mrb[0].mxu0
        %v1664 = vadd.f32 0.0, %v1663
        %v1665 = vpop.f32.mrb[0].mxu0
        %1666 = vmatprep.mubr.bf16.mxu0 0
        %1667 = vmatmul.mubr.bf16.gmra.mrb[0].mxu0 %v1562
        %v1668 = vpop.f32.mrb[0].mxu0
        %v1669 = vadd.f32 0.0, %v1668
        %v1670 = vpop.f32.mrb[0].mxu0
        %v1671 = vpop.f32.mrb[0].mxu0
        %v1672 = vadd.f32 0.0, %v1671
        %v1673 = vpop.f32.mrb[0].mxu0
        %1674 = vmatprep.mubr.bf16.mxu0 0
        %1675 = vmatmul.mubr.bf16.gmra.mrb[0].mxu0 %v1565
        %v1676 = vpop.f32.mrb[0].mxu0
        %v1677 = vadd.f32 0.0, %v1676
        %v1678 = vpop.f32.mrb[0].mxu0
        %v1679 = vpop.f32.mrb[0].mxu0
        %v1680 = vadd.f32 0.0, %v1679
        %v1681 = vpop.f32.mrb[0].mxu0
        %1682 = vmatprep.mubr.bf16.mxu0 0
        %1683 = vmatmul.mubr.bf16.gmra.mrb[0].mxu0 %v1568
        %v1684 = vpop.f32.mrb[0].mxu0
        %v1685 = vadd.f32 0.0, %v1684
        %v1686 = vpop.f32.mrb[0].mxu0
        %v1687 = vpop.f32.mrb[0].mxu0
        %v1688 = vadd.f32 0.0, %v1687
        %v1689 = vpop.f32.mrb[0].mxu0
        %1690 = vdwg.mxu0
        %1691 = vmax.xlane.f32.xlu0 %v1629
        %v1692 = vpop.xlane.xlu0 %1691
        %1693 = vmax.xlane.f32.xlu0 %v1632
        %v1694 = vpop.xlane.xlu0 %1693
        %1695 = vmax.xlane.f32.xlu0 %v1637
        %v1696 = vpop.xlane.xlu0 %1695
        %1697 = vmax.xlane.f32.xlu0 %v1640
        %v1698 = vpop.xlane.xlu0 %1697
        %1699 = vmax.xlane.f32.xlu0 %v1645
        %v1700 = vpop.xlane.xlu0 %1699
        %1701 = vmax.xlane.f32.xlu0 %v1648
        %v1702 = vpop.xlane.xlu0 %1701
        %1703 = vmax.xlane.f32.xlu0 %v1653
        %v1704 = vpop.xlane.xlu0 %1703
        %1705 = vmax.xlane.f32.xlu0 %v1656
        %v1706 = vpop.xlane.xlu0 %1705
        %1707 = vmax.xlane.f32.xlu0 %v1661
        %v1708 = vpop.xlane.xlu0 %1707
        %1709 = vmax.xlane.f32.xlu0 %v1664
        %v1710 = vpop.xlane.xlu0 %1709
        %1711 = vmax.xlane.f32.xlu0 %v1669
        %v1712 = vpop.xlane.xlu0 %1711
        %1713 = vmax.xlane.f32.xlu0 %v1672
        %v1714 = vpop.xlane.xlu0 %1713
        %1715 = vmax.xlane.f32.xlu0 %v1677
        %v1716 = vpop.xlane.xlu0 %1715
        %1717 = vmax.xlane.f32.xlu0 %v1680
        %v1718 = vpop.xlane.xlu0 %1717
        %1719 = vmax.xlane.f32.xlu0 %v1685
        %v1720 = vpop.xlane.xlu0 %1719
        %1721 = vmax.xlane.f32.xlu0 %v1688
        %v1722 = vpop.xlane.xlu0 %1721
        %v1723 = vsub.f32 %v1629, %v1692
        %v1724 = vsub.f32 %v1632, %v1694
        %v1725 = vsub.f32 %v1637, %v1696
        %v1726 = vsub.f32 %v1640, %v1698
        %v1727 = vsub.f32 %v1645, %v1700
        %v1728 = vsub.f32 %v1648, %v1702
        %v1729 = vsub.f32 %v1653, %v1704
        %v1730 = vsub.f32 %v1656, %v1706
        %v1731 = vsub.f32 %v1661, %v1708
        %v1732 = vsub.f32 %v1664, %v1710
        %v1733 = vsub.f32 %v1669, %v1712
        %v1734 = vsub.f32 %v1672, %v1714
        %v1735 = vsub.f32 %v1677, %v1716
        %v1736 = vsub.f32 %v1680, %v1718
        %v1737 = vsub.f32 %v1685, %v1720
        %v1738 = vsub.f32 %v1688, %v1722
        %v1739 = vmul.f32 %v1723, 1.442695
        %v1740 = vpow.pop %v1739
        %v1741 = vmul.f32 %v1724, 1.442695
        %v1742 = vpow.pop %v1741
        %v1743 = vmul.f32 %v1725, 1.442695
        %v1744 = vpow.pop %v1743
        %v1745 = vmul.f32 %v1726, 1.442695
        %v1746 = vpow.pop %v1745
        %v1747 = vmul.f32 %v1727, 1.442695
        %v1748 = vpow.pop %v1747
        %v1749 = vmul.f32 %v1728, 1.442695
        %v1750 = vpow.pop %v1749
        %v1751 = vmul.f32 %v1729, 1.442695
        %v1752 = vpow.pop %v1751
        %v1753 = vmul.f32 %v1730, 1.442695
        %v1754 = vpow.pop %v1753
        %v1755 = vmul.f32 %v1731, 1.442695
        %v1756 = vpow.pop %v1755
        %v1757 = vmul.f32 %v1732, 1.442695
        %v1758 = vpow.pop %v1757
        %v1759 = vmul.f32 %v1733, 1.442695
        %v1760 = vpow.pop %v1759
        %v1761 = vmul.f32 %v1734, 1.442695
        %v1762 = vpow.pop %v1761
        %v1763 = vmul.f32 %v1735, 1.442695
        %v1764 = vpow.pop %v1763
        %v1765 = vmul.f32 %v1736, 1.442695
        %v1766 = vpow.pop %v1765
        %v1767 = vmul.f32 %v1737, 1.442695
        %v1768 = vpow.pop %v1767
        %v1769 = vmul.f32 %v1738, 1.442695
        %v1770 = vpow.pop %v1769
        %1771 = vadd.xlane.f32.xlu0 %v1740
        %v1772 = vpop.xlane.xlu0 %1771
        %1773 = vadd.xlane.f32.xlu0 %v1742
        %v1774 = vpop.xlane.xlu0 %1773
        %1775 = vadd.xlane.f32.xlu0 %v1744
        %v1776 = vpop.xlane.xlu0 %1775
        %1777 = vadd.xlane.f32.xlu0 %v1746
        %v1778 = vpop.xlane.xlu0 %1777
        %1779 = vadd.xlane.f32.xlu0 %v1748
        %v1780 = vpop.xlane.xlu0 %1779
        %1781 = vadd.xlane.f32.xlu0 %v1750
        %v1782 = vpop.xlane.xlu0 %1781
        %1783 = vadd.xlane.f32.xlu0 %v1752
        %v1784 = vpop.xlane.xlu0 %1783
        %1785 = vadd.xlane.f32.xlu0 %v1754
        %v1786 = vpop.xlane.xlu0 %1785
        %1787 = vadd.xlane.f32.xlu0 %v1756
        %v1788 = vpop.xlane.xlu0 %1787
        %1789 = vadd.xlane.f32.xlu0 %v1758
        %v1790 = vpop.xlane.xlu0 %1789
        %1791 = vadd.xlane.f32.xlu0 %v1760
        %v1792 = vpop.xlane.xlu0 %1791
        %1793 = vadd.xlane.f32.xlu0 %v1762
        %v1794 = vpop.xlane.xlu0 %1793
        %1795 = vadd.xlane.f32.xlu0 %v1764
        %v1796 = vpop.xlane.xlu0 %1795
        %1797 = vadd.xlane.f32.xlu0 %v1766
        %v1798 = vpop.xlane.xlu0 %1797
        %1799 = vadd.xlane.f32.xlu0 %v1768
        %v1800 = vpop.xlane.xlu0 %1799
        %1801 = vadd.xlane.f32.xlu0 %v1770
        %v1802 = vpop.xlane.xlu0 %1801
        %v1803 = vpack.c.bf16 %v1742, %v1740
        %v1804 = vpack.c.bf16 %v1746, %v1744
        %v1805 = vpack.c.bf16 %v1750, %v1748
        %v1806 = vpack.c.bf16 %v1754, %v1752
        %v1807 = vpack.c.bf16 %v1758, %v1756
        %v1808 = vpack.c.bf16 %v1762, %v1760
        %v1809 = vpack.c.bf16 %v1766, %v1764
        %v1810 = vpack.c.bf16 %v1770, %v1768
        %1811 = vmatprep.subr.bf16.mxu0 0
        %1812 = vmatpush1.bf16.msra.mxu0 %v1537
        %1813 = vmatprep.subr.bf16.mxu0 0
        %1814 = vmatpush1.bf16.msra.mxu0 %v1538
        %1815 = vmatprep.subr.bf16.mxu0 0
        %1816 = vmatpush1.bf16.msra.mxu0 %v1539
        %1817 = vmatprep.subr.bf16.mxu0 0
        %1818 = vmatpush1.bf16.msra.mxu0 %v1540
        %1819 = vmatprep.subr.bf16.mxu0 0
        %1820 = vmatpush1.bf16.msra.mxu0 %v1541
        %1821 = vmatprep.subr.bf16.mxu0 0
        %1822 = vmatpush1.bf16.msra.mxu0 %v1542
        %1823 = vmatprep.subr.bf16.mxu0 0
        %1824 = vmatpush1.bf16.msra.mxu0 %v1543
        %1825 = vmatprep.subr.bf16.mxu0 0
        %1826 = vmatpush1.bf16.msra.mxu0 %v1544
        %1827 = vmatprep.subr.bf16.mxu0 0
        %1828 = vmatpush1.bf16.msra.mxu0 0
        %1829 = vmatprep.subr.bf16.mxu0 0
        %1830 = vmatpush1.bf16.msra.mxu0 0
        %1831 = vmatprep.subr.bf16.mxu0 0
        %1832 = vmatpush1.bf16.msra.mxu0 0
        %1833 = vmatprep.subr.bf16.mxu0 0
        %1834 = vmatpush1.bf16.msra.mxu0 0
        %1835 = vmatprep.subr.bf16.mxu0 0
        %1836 = vmatpush1.bf16.msra.mxu0 0
        %1837 = vmatprep.subr.bf16.mxu0 0
        %1838 = vmatpush1.bf16.msra.mxu0 0
        %1839 = vmatprep.subr.bf16.mxu0 0
        %1840 = vmatpush1.bf16.msra.mxu0 0
        %1841 = vmatprep.subr.bf16.mxu0 0
        %1842 = vmatpush1.bf16.msra.mxu0 0
        %1843 = vmatprep.mubr.bf16.mxu0 0
        %1844 = vmatmul.mubr.bf16.gmra.mrb[0].mxu0 %v1803
        %v1845 = vpop.f32.mrb[0].mxu0
        %v1846 = vadd.f32 0.0, %v1845
        %v1847 = vpop.f32.mrb[0].mxu0
        %v1848 = vpop.f32.mrb[0].mxu0
        %v1849 = vadd.f32 0.0, %v1848
        %v1850 = vpop.f32.mrb[0].mxu0
        %1851 = vmatprep.mubr.bf16.mxu0 0
        %1852 = vmatmul.mubr.bf16.gmra.mrb[0].mxu0 %v1804
        %v1853 = vpop.f32.mrb[0].mxu0
        %v1854 = vadd.f32 0.0, %v1853
        %v1855 = vpop.f32.mrb[0].mxu0
        %v1856 = vpop.f32.mrb[0].mxu0
        %v1857 = vadd.f32 0.0, %v1856
        %v1858 = vpop.f32.mrb[0].mxu0
        %1859 = vmatprep.mubr.bf16.mxu0 0
        %1860 = vmatmul.mubr.bf16.gmra.mrb[0].mxu0 %v1805
        %v1861 = vpop.f32.mrb[0].mxu0
        %v1862 = vadd.f32 0.0, %v1861
        %v1863 = vpop.f32.mrb[0].mxu0
        %v1864 = vpop.f32.mrb[0].mxu0
        %v1865 = vadd.f32 0.0, %v1864
        %v1866 = vpop.f32.mrb[0].mxu0
        %1867 = vmatprep.mubr.bf16.mxu0 0
        %1868 = vmatmul.mubr.bf16.gmra.mrb[0].mxu0 %v1806
        %v1869 = vpop.f32.mrb[0].mxu0
        %v1870 = vadd.f32 0.0, %v1869
        %v1871 = vpop.f32.mrb[0].mxu0
        %v1872 = vpop.f32.mrb[0].mxu0
        %v1873 = vadd.f32 0.0, %v1872
        %v1874 = vpop.f32.mrb[0].mxu0
        %1875 = vmatprep.mubr.bf16.mxu0 0
        %1876 = vmatmul.mubr.bf16.gmra.mrb[0].mxu0 %v1807
        %v1877 = vpop.f32.mrb[0].mxu0
        %v1878 = vadd.f32 0.0, %v1877
        %v1879 = vpop.f32.mrb[0].mxu0
        %v1880 = vpop.f32.mrb[0].mxu0
        %v1881 = vadd.f32 0.0, %v1880
        %v1882 = vpop.f32.mrb[0].mxu0
        %1883 = vmatprep.mubr.bf16.mxu0 0
        %1884 = vmatmul.mubr.bf16.gmra.mrb[0].mxu0 %v1808
        %v1885 = vpop.f32.mrb[0].mxu0
        %v1886 = vadd.f32 0.0, %v1885
        %v1887 = vpop.f32.mrb[0].mxu0
        %v1888 = vpop.f32.mrb[0].mxu0
        %v1889 = vadd.f32 0.0, %v1888
        %v1890 = vpop.f32.mrb[0].mxu0
        %1891 = vmatprep.mubr.bf16.mxu0 0
        %1892 = vmatmul.mubr.bf16.gmra.mrb[0].mxu0 %v1809
        %v1893 = vpop.f32.mrb[0].mxu0
        %v1894 = vadd.f32 0.0, %v1893
        %v1895 = vpop.f32.mrb[0].mxu0
        %v1896 = vpop.f32.mrb[0].mxu0
        %v1897 = vadd.f32 0.0, %v1896
        %v1898 = vpop.f32.mrb[0].mxu0
        %1899 = vmatprep.mubr.bf16.mxu0 0
        %1900 = vmatmul.mubr.bf16.gmra.mrb[0].mxu0 %v1810
        %v1901 = vpop.f32.mrb[0].mxu0
        %v1902 = vadd.f32 0.0, %v1901
        %v1903 = vpop.f32.mrb[0].mxu0
        %v1904 = vpop.f32.mrb[0].mxu0
        %v1905 = vadd.f32 0.0, %v1904
        %v1906 = vpop.f32.mrb[0].mxu0
        %1907 = vdwg.mxu0
        %v1908 = vrcp.pop %v1772
        %v1909 = vrcp.pop %v1774
        %v1910 = vrcp.pop %v1776
        %v1911 = vrcp.pop %v1778
        %v1912 = vrcp.pop %v1780
        %v1913 = vrcp.pop %v1782
        %v1914 = vrcp.pop %v1784
        %v1915 = vrcp.pop %v1786
        %v1916 = vrcp.pop %v1788
        %v1917 = vrcp.pop %v1790
        %v1918 = vrcp.pop %v1792
        %v1919 = vrcp.pop %v1794
        %v1920 = vrcp.pop %v1796
        %v1921 = vrcp.pop %v1798
        %v1922 = vrcp.pop %v1800
        %v1923 = vrcp.pop %v1802
        %v1924 = vmul.f32 %v1846, %v1908
        %v1925 = vmul.f32 %v1849, %v1909
        %v1926 = vmul.f32 %v1854, %v1910
        %v1927 = vmul.f32 %v1857, %v1911
        %v1928 = vmul.f32 %v1862, %v1912
        %v1929 = vmul.f32 %v1865, %v1913
        %v1930 = vmul.f32 %v1870, %v1914
        %v1931 = vmul.f32 %v1873, %v1915
        %v1932 = vmul.f32 %v1878, %v1916
        %v1933 = vmul.f32 %v1881, %v1917
        %v1934 = vmul.f32 %v1886, %v1918
        %v1935 = vmul.f32 %v1889, %v1919
        %v1936 = vmul.f32 %v1894, %v1920
        %v1937 = vmul.f32 %v1897, %v1921
        %v1938 = vmul.f32 %v1902, %v1922
        %v1939 = vmul.f32 %v1905, %v1923
        %1940 = vst.msk [vmem:[#allocation3] sm:$0xff] %vm1545, %v1924
        %1941 = vst.msk [vmem:[#allocation3 + $0x8] sm:$0xff] %vm1545, %v1925
        %1942 = vst.msk [vmem:[#allocation3 + $0x10] sm:$0xff] %vm1545, %v1926
        %1943 = vst.msk [vmem:[#allocation3 + $0x18] sm:$0xff] %vm1545, %v1927
        %1944 = vst.msk [vmem:[#allocation3 + $0x20] sm:$0xff] %vm1545, %v1928
        %1945 = vst.msk [vmem:[#allocation3 + $0x28] sm:$0xff] %vm1545, %v1929
        %1946 = vst.msk [vmem:[#allocation3 + $0x30] sm:$0xff] %vm1545, %v1930
        %1947 = vst.msk [vmem:[#allocation3 + $0x38] sm:$0xff] %vm1545, %v1931
        %1948 = vst.msk [vmem:[#allocation3 + $0x40] sm:$0xff] %vm1545, %v1932
        %1949 = vst.msk [vmem:[#allocation3 + $0x48] sm:$0xff] %vm1545, %v1933
        %1950 = vst.msk [vmem:[#allocation3 + $0x50] sm:$0xff] %vm1545, %v1934
        %1951 = vst.msk [vmem:[#allocation3 + $0x58] sm:$0xff] %vm1545, %v1935
        %1952 = vst.msk [vmem:[#allocation3 + $0x60] sm:$0xff] %vm1545, %v1936
        %1953 = vst.msk [vmem:[#allocation3 + $0x68] sm:$0xff] %vm1545, %v1937
        %1954 = vst.msk [vmem:[#allocation3 + $0x70] sm:$0xff] %vm1545, %v1938
        %1955 = vst.msk [vmem:[#allocation3 + $0x78] sm:$0xff] %vm1545, %v1939
        %1964 = vrot.lane.b32.xlu0 %v1521, 96
        %v1965 = vpop.permute.xlu0 %1964
        %1966 = vrot.lane.b32.xlu0 %v1522, 96
        %v1967 = vpop.permute.xlu0 %1966
        %1968 = vrot.lane.b32.xlu0 %v1523, 96
        %v1969 = vpop.permute.xlu0 %1968
        %1970 = vrot.lane.b32.xlu0 %v1524, 96
        %v1971 = vpop.permute.xlu0 %1970
        %1972 = vrot.lane.b32.xlu0 %v1525, 96
        %v1973 = vpop.permute.xlu0 %1972
        %1974 = vrot.lane.b32.xlu0 %v1526, 96
        %v1975 = vpop.permute.xlu0 %1974
        %1976 = vrot.lane.b32.xlu0 %v1527, 96
        %v1977 = vpop.permute.xlu0 %1976
        %1978 = vrot.lane.b32.xlu0 %v1528, 96
        %v1979 = vpop.permute.xlu0 %1978
        %1988 = vrot.lane.b32.xlu0 %v1529, 96
        %v1989 = vpop.permute.xlu0 %1988
        %1990 = vrot.lane.b32.xlu0 %v1530, 96
        %v1991 = vpop.permute.xlu0 %1990
        %1992 = vrot.lane.b32.xlu0 %v1531, 96
        %v1993 = vpop.permute.xlu0 %1992
        %1994 = vrot.lane.b32.xlu0 %v1532, 96
        %v1995 = vpop.permute.xlu0 %1994
        %1996 = vrot.lane.b32.xlu0 %v1533, 96
        %v1997 = vpop.permute.xlu0 %1996
        %1998 = vrot.lane.b32.xlu0 %v1534, 96
        %v1999 = vpop.permute.xlu0 %1998
        %2000 = vrot.lane.b32.xlu0 %v1535, 96
        %v2001 = vpop.permute.xlu0 %2000
        %2002 = vrot.lane.b32.xlu0 %v1536, 96
        %v2003 = vpop.permute.xlu0 %2002
        %v2005 = vsel %vm1545, %v1965, 0
        %v2008 = vsel %vm1545, %v1967, 0
        %v2011 = vsel %vm1545, %v1969, 0
        %v2014 = vsel %vm1545, %v1971, 0
        %v2017 = vsel %vm1545, %v1973, 0
        %v2020 = vsel %vm1545, %v1975, 0
        %v2023 = vsel %vm1545, %v1977, 0
        %v2026 = vsel %vm1545, %v1979, 0
        %v2029 = vsel %vm1545, %v1989, 0
        %v2032 = vsel %vm1545, %v1991, 0
        %v2035 = vsel %vm1545, %v1993, 0
        %v2038 = vsel %vm1545, %v1995, 0
        %v2041 = vsel %vm1545, %v1997, 0
        %v2044 = vsel %vm1545, %v1999, 0
        %v2047 = vsel %vm1545, %v2001, 0
        %v2050 = vsel %vm1545, %v2003, 0
        %2052 = vmatprep.subr.bf16.mxu0 0
        %2053 = vmatpush1.bf16.xpose.msra.mxu0 %v2029
        %2054 = vmatprep.subr.bf16.mxu0 0
        %2055 = vmatpush1.bf16.xpose.msra.mxu0 %v2032
        %2056 = vmatprep.subr.bf16.mxu0 0
        %2057 = vmatpush1.bf16.xpose.msra.mxu0 %v2035
        %2058 = vmatprep.subr.bf16.mxu0 0
        %2059 = vmatpush1.bf16.xpose.msra.mxu0 %v2038
        %2060 = vmatprep.subr.bf16.mxu0 0
        %2061 = vmatpush1.bf16.xpose.msra.mxu0 %v2041
        %2062 = vmatprep.subr.bf16.mxu0 0
        %2063 = vmatpush1.bf16.xpose.msra.mxu0 %v2044
        %2064 = vmatprep.subr.bf16.mxu0 0
        %2065 = vmatpush1.bf16.xpose.msra.mxu0 %v2047
        %2066 = vmatprep.subr.bf16.mxu0 0
        %2067 = vmatpush1.bf16.xpose.msra.mxu0 %v2050
        %2068 = vmatprep.subr.bf16.mxu0 0
        %2069 = vmatpush1.bf16.xpose.msra.mxu0 0
        %2070 = vmatprep.subr.bf16.mxu0 0
        %2071 = vmatpush1.bf16.xpose.msra.mxu0 0
        %2072 = vmatprep.subr.bf16.mxu0 0
        %2073 = vmatpush1.bf16.xpose.msra.mxu0 0
        %2074 = vmatprep.subr.bf16.mxu0 0
        %2075 = vmatpush1.bf16.xpose.msra.mxu0 0
        %2076 = vmatprep.subr.bf16.mxu0 0
        %2077 = vmatpush1.bf16.xpose.msra.mxu0 0
        %2078 = vmatprep.subr.bf16.mxu0 0
        %2079 = vmatpush1.bf16.xpose.msra.mxu0 0
        %2080 = vmatprep.subr.bf16.mxu0 0
        %2081 = vmatpush1.bf16.xpose.msra.mxu0 0
        %2082 = vmatprep.subr.bf16.mxu0 0
        %2083 = vmatpush1.bf16.xpose.msra.mxu0 0
        %2084 = vmatprep.mubr.bf16.mxu0 0
        %2085 = vmatmul.mubr.bf16.gmra.mrb[0].mxu0 %v2005
        %v2086 = vpop.f32.mrb[0].mxu0
        %v2087 = vadd.f32 0.0, %v2086
        %v2088 = vpop.f32.mrb[0].mxu0
        %v2089 = vpop.f32.mrb[0].mxu0
        %v2090 = vadd.f32 0.0, %v2089
        %v2091 = vpop.f32.mrb[0].mxu0
        %2092 = vmatprep.mubr.bf16.mxu0 0
        %2093 = vmatmul.mubr.bf16.gmra.mrb[0].mxu0 %v2008
        %v2094 = vpop.f32.mrb[0].mxu0
        %v2095 = vadd.f32 0.0, %v2094
        %v2096 = vpop.f32.mrb[0].mxu0
        %v2097 = vpop.f32.mrb[0].mxu0
        %v2098 = vadd.f32 0.0, %v2097
        %v2099 = vpop.f32.mrb[0].mxu0
        %2100 = vmatprep.mubr.bf16.mxu0 0
        %2101 = vmatmul.mubr.bf16.gmra.mrb[0].mxu0 %v2011
        %v2102 = vpop.f32.mrb[0].mxu0
        %v2103 = vadd.f32 0.0, %v2102
        %v2104 = vpop.f32.mrb[0].mxu0
        %v2105 = vpop.f32.mrb[0].mxu0
        %v2106 = vadd.f32 0.0, %v2105
        %v2107 = vpop.f32.mrb[0].mxu0
        %2108 = vmatprep.mubr.bf16.mxu0 0
        %2109 = vmatmul.mubr.bf16.gmra.mrb[0].mxu0 %v2014
        %v2110 = vpop.f32.mrb[0].mxu0
        %v2111 = vadd.f32 0.0, %v2110
        %v2112 = vpop.f32.mrb[0].mxu0
        %v2113 = vpop.f32.mrb[0].mxu0
        %v2114 = vadd.f32 0.0, %v2113
        %v2115 = vpop.f32.mrb[0].mxu0
        %2116 = vmatprep.mubr.bf16.mxu0 0
        %2117 = vmatmul.mubr.bf16.gmra.mrb[0].mxu0 %v2017
        %v2118 = vpop.f32.mrb[0].mxu0
        %v2119 = vadd.f32 0.0, %v2118
        %v2120 = vpop.f32.mrb[0].mxu0
        %v2121 = vpop.f32.mrb[0].mxu0
        %v2122 = vadd.f32 0.0, %v2121
        %v2123 = vpop.f32.mrb[0].mxu0
        %2124 = vmatprep.mubr.bf16.mxu0 0
        %2125 = vmatmul.mubr.bf16.gmra.mrb[0].mxu0 %v2020
        %v2126 = vpop.f32.mrb[0].mxu0
        %v2127 = vadd.f32 0.0, %v2126
        %v2128 = vpop.f32.mrb[0].mxu0
        %v2129 = vpop.f32.mrb[0].mxu0
        %v2130 = vadd.f32 0.0, %v2129
        %v2131 = vpop.f32.mrb[0].mxu0
        %2132 = vmatprep.mubr.bf16.mxu0 0
        %2133 = vmatmul.mubr.bf16.gmra.mrb[0].mxu0 %v2023
        %v2134 = vpop.f32.mrb[0].mxu0
        %v2135 = vadd.f32 0.0, %v2134
        %v2136 = vpop.f32.mrb[0].mxu0
        %v2137 = vpop.f32.mrb[0].mxu0
        %v2138 = vadd.f32 0.0, %v2137
        %v2139 = vpop.f32.mrb[0].mxu0
        %2140 = vmatprep.mubr.bf16.mxu0 0
        %2141 = vmatmul.mubr.bf16.gmra.mrb[0].mxu0 %v2026
        %v2142 = vpop.f32.mrb[0].mxu0
        %v2143 = vadd.f32 0.0, %v2142
        %v2144 = vpop.f32.mrb[0].mxu0
        %v2145 = vpop.f32.mrb[0].mxu0
        %v2146 = vadd.f32 0.0, %v2145
        %v2147 = vpop.f32.mrb[0].mxu0
        %2148 = vdwg.mxu0
        %2149 = vmax.xlane.f32.xlu0 %v2087
        %v2150 = vpop.xlane.xlu0 %2149
        %2151 = vmax.xlane.f32.xlu0 %v2090
        %v2152 = vpop.xlane.xlu0 %2151
        %2153 = vmax.xlane.f32.xlu0 %v2095
        %v2154 = vpop.xlane.xlu0 %2153
        %2155 = vmax.xlane.f32.xlu0 %v2098
        %v2156 = vpop.xlane.xlu0 %2155
        %2157 = vmax.xlane.f32.xlu0 %v2103
        %v2158 = vpop.xlane.xlu0 %2157
        %2159 = vmax.xlane.f32.xlu0 %v2106
        %v2160 = vpop.xlane.xlu0 %2159
        %2161 = vmax.xlane.f32.xlu0 %v2111
        %v2162 = vpop.xlane.xlu0 %2161
        %2163 = vmax.xlane.f32.xlu0 %v2114
        %v2164 = vpop.xlane.xlu0 %2163
        %2165 = vmax.xlane.f32.xlu0 %v2119
        %v2166 = vpop.xlane.xlu0 %2165
        %2167 = vmax.xlane.f32.xlu0 %v2122
        %v2168 = vpop.xlane.xlu0 %2167
        %2169 = vmax.xlane.f32.xlu0 %v2127
        %v2170 = vpop.xlane.xlu0 %2169
        %2171 = vmax.xlane.f32.xlu0 %v2130
        %v2172 = vpop.xlane.xlu0 %2171
        %2173 = vmax.xlane.f32.xlu0 %v2135
        %v2174 = vpop.xlane.xlu0 %2173
        %2175 = vmax.xlane.f32.xlu0 %v2138
        %v2176 = vpop.xlane.xlu0 %2175
        %2177 = vmax.xlane.f32.xlu0 %v2143
        %v2178 = vpop.xlane.xlu0 %2177
        %2179 = vmax.xlane.f32.xlu0 %v2146
        %v2180 = vpop.xlane.xlu0 %2179
        %v2181 = vsub.f32 %v2087, %v2150
        %v2182 = vsub.f32 %v2090, %v2152
        %v2183 = vsub.f32 %v2095, %v2154
        %v2184 = vsub.f32 %v2098, %v2156
        %v2185 = vsub.f32 %v2103, %v2158
        %v2186 = vsub.f32 %v2106, %v2160
        %v2187 = vsub.f32 %v2111, %v2162
        %v2188 = vsub.f32 %v2114, %v2164
        %v2189 = vsub.f32 %v2119, %v2166
        %v2190 = vsub.f32 %v2122, %v2168
        %v2191 = vsub.f32 %v2127, %v2170
        %v2192 = vsub.f32 %v2130, %v2172
        %v2193 = vsub.f32 %v2135, %v2174
        %v2194 = vsub.f32 %v2138, %v2176
        %v2195 = vsub.f32 %v2143, %v2178
        %v2196 = vsub.f32 %v2146, %v2180
        %v2197 = vmul.f32 %v2181, 1.442695
        %v2198 = vpow.pop %v2197
        %v2199 = vmul.f32 %v2182, 1.442695
        %v2200 = vpow.pop %v2199
        %v2201 = vmul.f32 %v2183, 1.442695
        %v2202 = vpow.pop %v2201
        %v2203 = vmul.f32 %v2184, 1.442695
        %v2204 = vpow.pop %v2203
        %v2205 = vmul.f32 %v2185, 1.442695
        %v2206 = vpow.pop %v2205
        %v2207 = vmul.f32 %v2186, 1.442695
        %v2208 = vpow.pop %v2207
        %v2209 = vmul.f32 %v2187, 1.442695
        %v2210 = vpow.pop %v2209
        %v2211 = vmul.f32 %v2188, 1.442695
        %v2212 = vpow.pop %v2211
        %v2213 = vmul.f32 %v2189, 1.442695
        %v2214 = vpow.pop %v2213
        %v2215 = vmul.f32 %v2190, 1.442695
        %v2216 = vpow.pop %v2215
        %v2217 = vmul.f32 %v2191, 1.442695
        %v2218 = vpow.pop %v2217
        %v2219 = vmul.f32 %v2192, 1.442695
        %v2220 = vpow.pop %v2219
        %v2221 = vmul.f32 %v2193, 1.442695
        %v2222 = vpow.pop %v2221
        %v2223 = vmul.f32 %v2194, 1.442695
        %v2224 = vpow.pop %v2223
        %v2225 = vmul.f32 %v2195, 1.442695
        %v2226 = vpow.pop %v2225
        %v2227 = vmul.f32 %v2196, 1.442695
        %v2228 = vpow.pop %v2227
        %2229 = vadd.xlane.f32.xlu0 %v2198
        %v2230 = vpop.xlane.xlu0 %2229
        %2231 = vadd.xlane.f32.xlu0 %v2200
        %v2232 = vpop.xlane.xlu0 %2231
        %2233 = vadd.xlane.f32.xlu0 %v2202
        %v2234 = vpop.xlane.xlu0 %2233
        %2235 = vadd.xlane.f32.xlu0 %v2204
        %v2236 = vpop.xlane.xlu0 %2235
        %2237 = vadd.xlane.f32.xlu0 %v2206
        %v2238 = vpop.xlane.xlu0 %2237
        %2239 = vadd.xlane.f32.xlu0 %v2208
        %v2240 = vpop.xlane.xlu0 %2239
        %2241 = vadd.xlane.f32.xlu0 %v2210
        %v2242 = vpop.xlane.xlu0 %2241
        %2243 = vadd.xlane.f32.xlu0 %v2212
        %v2244 = vpop.xlane.xlu0 %2243
        %2245 = vadd.xlane.f32.xlu0 %v2214
        %v2246 = vpop.xlane.xlu0 %2245
        %2247 = vadd.xlane.f32.xlu0 %v2216
        %v2248 = vpop.xlane.xlu0 %2247
        %2249 = vadd.xlane.f32.xlu0 %v2218
        %v2250 = vpop.xlane.xlu0 %2249
        %2251 = vadd.xlane.f32.xlu0 %v2220
        %v2252 = vpop.xlane.xlu0 %2251
        %2253 = vadd.xlane.f32.xlu0 %v2222
        %v2254 = vpop.xlane.xlu0 %2253
        %2255 = vadd.xlane.f32.xlu0 %v2224
        %v2256 = vpop.xlane.xlu0 %2255
        %2257 = vadd.xlane.f32.xlu0 %v2226
        %v2258 = vpop.xlane.xlu0 %2257
        %2259 = vadd.xlane.f32.xlu0 %v2228
        %v2260 = vpop.xlane.xlu0 %2259
        %v2261 = vpack.c.bf16 %v2200, %v2198
        %v2262 = vpack.c.bf16 %v2204, %v2202
        %v2263 = vpack.c.bf16 %v2208, %v2206
        %v2264 = vpack.c.bf16 %v2212, %v2210
        %v2265 = vpack.c.bf16 %v2216, %v2214
        %v2266 = vpack.c.bf16 %v2220, %v2218
        %v2267 = vpack.c.bf16 %v2224, %v2222
        %v2268 = vpack.c.bf16 %v2228, %v2226
        %2277 = vrot.lane.b32.xlu0 %v1537, 96
        %v2278 = vpop.permute.xlu0 %2277
        %2279 = vrot.lane.b32.xlu0 %v1538, 96
        %v2280 = vpop.permute.xlu0 %2279
        %2281 = vrot.lane.b32.xlu0 %v1539, 96
        %v2282 = vpop.permute.xlu0 %2281
        %2283 = vrot.lane.b32.xlu0 %v1540, 96
        %v2284 = vpop.permute.xlu0 %2283
        %2285 = vrot.lane.b32.xlu0 %v1541, 96
        %v2286 = vpop.permute.xlu0 %2285
        %2287 = vrot.lane.b32.xlu0 %v1542, 96
        %v2288 = vpop.permute.xlu0 %2287
        %2289 = vrot.lane.b32.xlu0 %v1543, 96
        %v2290 = vpop.permute.xlu0 %2289
        %2291 = vrot.lane.b32.xlu0 %v1544, 96
        %v2292 = vpop.permute.xlu0 %2291
        %2301 = vmatprep.subr.bf16.mxu0 0
        %2302 = vmatpush1.bf16.msra.mxu0 %v2278
        %2303 = vmatprep.subr.bf16.mxu0 0
        %2304 = vmatpush1.bf16.msra.mxu0 %v2280
        %2305 = vmatprep.subr.bf16.mxu0 0
        %2306 = vmatpush1.bf16.msra.mxu0 %v2282
        %2307 = vmatprep.subr.bf16.mxu0 0
        %2308 = vmatpush1.bf16.msra.mxu0 %v2284
        %2309 = vmatprep.subr.bf16.mxu0 0
        %2310 = vmatpush1.bf16.msra.mxu0 %v2286
        %2311 = vmatprep.subr.bf16.mxu0 0
        %2312 = vmatpush1.bf16.msra.mxu0 %v2288
        %2313 = vmatprep.subr.bf16.mxu0 0
        %2314 = vmatpush1.bf16.msra.mxu0 %v2290
        %2315 = vmatprep.subr.bf16.mxu0 0
        %2316 = vmatpush1.bf16.msra.mxu0 %v2292
        %2317 = vmatprep.subr.bf16.mxu0 0
        %2318 = vmatpush1.bf16.msra.mxu0 0
        %2319 = vmatprep.subr.bf16.mxu0 0
        %2320 = vmatpush1.bf16.msra.mxu0 0
        %2321 = vmatprep.subr.bf16.mxu0 0
        %2322 = vmatpush1.bf16.msra.mxu0 0
        %2323 = vmatprep.subr.bf16.mxu0 0
        %2324 = vmatpush1.bf16.msra.mxu0 0
        %2325 = vmatprep.subr.bf16.mxu0 0
        %2326 = vmatpush1.bf16.msra.mxu0 0
        %2327 = vmatprep.subr.bf16.mxu0 0
        %2328 = vmatpush1.bf16.msra.mxu0 0
        %2329 = vmatprep.subr.bf16.mxu0 0
        %2330 = vmatpush1.bf16.msra.mxu0 0
        %2331 = vmatprep.subr.bf16.mxu0 0
        %2332 = vmatpush1.bf16.msra.mxu0 0
        %2333 = vmatprep.mubr.bf16.mxu0 0
        %2334 = vmatmul.mubr.bf16.gmra.mrb[0].mxu0 %v2261
        %v2335 = vpop.f32.mrb[0].mxu0
        %v2336 = vadd.f32 0.0, %v2335
        %v2337 = vpop.f32.mrb[0].mxu0
        %v2338 = vpop.f32.mrb[0].mxu0
        %v2339 = vadd.f32 0.0, %v2338
        %v2340 = vpop.f32.mrb[0].mxu0
        %2341 = vmatprep.mubr.bf16.mxu0 0
        %2342 = vmatmul.mubr.bf16.gmra.mrb[0].mxu0 %v2262
        %v2343 = vpop.f32.mrb[0].mxu0
        %v2344 = vadd.f32 0.0, %v2343
        %v2345 = vpop.f32.mrb[0].mxu0
        %v2346 = vpop.f32.mrb[0].mxu0
        %v2347 = vadd.f32 0.0, %v2346
        %v2348 = vpop.f32.mrb[0].mxu0
        %2349 = vmatprep.mubr.bf16.mxu0 0
        %2350 = vmatmul.mubr.bf16.gmra.mrb[0].mxu0 %v2263
        %v2351 = vpop.f32.mrb[0].mxu0
        %v2352 = vadd.f32 0.0, %v2351
        %v2353 = vpop.f32.mrb[0].mxu0
        %v2354 = vpop.f32.mrb[0].mxu0
        %v2355 = vadd.f32 0.0, %v2354
        %v2356 = vpop.f32.mrb[0].mxu0
        %2357 = vmatprep.mubr.bf16.mxu0 0
        %2358 = vmatmul.mubr.bf16.gmra.mrb[0].mxu0 %v2264
        %v2359 = vpop.f32.mrb[0].mxu0
        %v2360 = vadd.f32 0.0, %v2359
        %v2361 = vpop.f32.mrb[0].mxu0
        %v2362 = vpop.f32.mrb[0].mxu0
        %v2363 = vadd.f32 0.0, %v2362
        %v2364 = vpop.f32.mrb[0].mxu0
        %2365 = vmatprep.mubr.bf16.mxu0 0
        %2366 = vmatmul.mubr.bf16.gmra.mrb[0].mxu0 %v2265
        %v2367 = vpop.f32.mrb[0].mxu0
        %v2368 = vadd.f32 0.0, %v2367
        %v2369 = vpop.f32.mrb[0].mxu0
        %v2370 = vpop.f32.mrb[0].mxu0
        %v2371 = vadd.f32 0.0, %v2370
        %v2372 = vpop.f32.mrb[0].mxu0
        %2373 = vmatprep.mubr.bf16.mxu0 0
        %2374 = vmatmul.mubr.bf16.gmra.mrb[0].mxu0 %v2266
        %v2375 = vpop.f32.mrb[0].mxu0
        %v2376 = vadd.f32 0.0, %v2375
        %v2377 = vpop.f32.mrb[0].mxu0
        %v2378 = vpop.f32.mrb[0].mxu0
        %v2379 = vadd.f32 0.0, %v2378
        %v2380 = vpop.f32.mrb[0].mxu0
        %2381 = vmatprep.mubr.bf16.mxu0 0
        %2382 = vmatmul.mubr.bf16.gmra.mrb[0].mxu0 %v2267
        %v2383 = vpop.f32.mrb[0].mxu0
        %v2384 = vadd.f32 0.0, %v2383
        %v2385 = vpop.f32.mrb[0].mxu0
        %v2386 = vpop.f32.mrb[0].mxu0
        %v2387 = vadd.f32 0.0, %v2386
        %v2388 = vpop.f32.mrb[0].mxu0
        %2389 = vmatprep.mubr.bf16.mxu0 0
        %2390 = vmatmul.mubr.bf16.gmra.mrb[0].mxu0 %v2268
        %v2391 = vpop.f32.mrb[0].mxu0
        %v2392 = vadd.f32 0.0, %v2391
        %v2393 = vpop.f32.mrb[0].mxu0
        %v2394 = vpop.f32.mrb[0].mxu0
        %v2395 = vadd.f32 0.0, %v2394
        %v2396 = vpop.f32.mrb[0].mxu0
        %2397 = vdwg.mxu0
        %v2398 = vrcp.pop %v2230
        %v2399 = vrcp.pop %v2232
        %v2400 = vrcp.pop %v2234
        %v2401 = vrcp.pop %v2236
        %v2402 = vrcp.pop %v2238
        %v2403 = vrcp.pop %v2240
        %v2404 = vrcp.pop %v2242
        %v2405 = vrcp.pop %v2244
        %v2406 = vrcp.pop %v2246
        %v2407 = vrcp.pop %v2248
        %v2408 = vrcp.pop %v2250
        %v2409 = vrcp.pop %v2252
        %v2410 = vrcp.pop %v2254
        %v2411 = vrcp.pop %v2256
        %v2412 = vrcp.pop %v2258
        %v2413 = vrcp.pop %v2260
        %v2414 = vmul.f32 %v2336, %v2398
        %v2415 = vmul.f32 %v2339, %v2399
        %v2416 = vmul.f32 %v2344, %v2400
        %v2417 = vmul.f32 %v2347, %v2401
        %v2418 = vmul.f32 %v2352, %v2402
        %v2419 = vmul.f32 %v2355, %v2403
        %v2420 = vmul.f32 %v2360, %v2404
        %v2421 = vmul.f32 %v2363, %v2405
        %v2422 = vmul.f32 %v2368, %v2406
        %v2423 = vmul.f32 %v2371, %v2407
        %v2424 = vmul.f32 %v2376, %v2408
        %v2425 = vmul.f32 %v2379, %v2409
        %v2426 = vmul.f32 %v2384, %v2410
        %v2427 = vmul.f32 %v2387, %v2411
        %v2428 = vmul.f32 %v2392, %v2412
        %v2429 = vmul.f32 %v2395, %v2413
        %2446 = vrot.lane.b32.xlu0 %v2414, 32
        %v2447 = vpop.permute.xlu0 %2446
        %2448 = vrot.lane.b32.xlu0 %v2415, 32
        %v2449 = vpop.permute.xlu0 %2448
        %2450 = vrot.lane.b32.xlu0 %v2416, 32
        %v2451 = vpop.permute.xlu0 %2450
        %2452 = vrot.lane.b32.xlu0 %v2417, 32
        %v2453 = vpop.permute.xlu0 %2452
        %2454 = vrot.lane.b32.xlu0 %v2418, 32
        %v2455 = vpop.permute.xlu0 %2454
        %2456 = vrot.lane.b32.xlu0 %v2419, 32
        %v2457 = vpop.permute.xlu0 %2456
        %2458 = vrot.lane.b32.xlu0 %v2420, 32
        %v2459 = vpop.permute.xlu0 %2458
        %2460 = vrot.lane.b32.xlu0 %v2421, 32
        %v2461 = vpop.permute.xlu0 %2460
        %2462 = vrot.lane.b32.xlu0 %v2422, 32
        %v2463 = vpop.permute.xlu0 %2462
        %2464 = vrot.lane.b32.xlu0 %v2423, 32
        %v2465 = vpop.permute.xlu0 %2464
        %2466 = vrot.lane.b32.xlu0 %v2424, 32
        %v2467 = vpop.permute.xlu0 %2466
        %2468 = vrot.lane.b32.xlu0 %v2425, 32
        %v2469 = vpop.permute.xlu0 %2468
        %2470 = vrot.lane.b32.xlu0 %v2426, 32
        %v2471 = vpop.permute.xlu0 %2470
        %2472 = vrot.lane.b32.xlu0 %v2427, 32
        %v2473 = vpop.permute.xlu0 %2472
        %2474 = vrot.lane.b32.xlu0 %v2428, 32
        %v2475 = vpop.permute.xlu0 %2474
        %2476 = vrot.lane.b32.xlu0 %v2429, 32
        %v2477 = vpop.permute.xlu0 %2476
        %vm2494 = vcmask 523520
        %2495 = vst.msk [vmem:[#allocation3] sm:$0xff] %vm2494, %v2447
        %2496 = vst.msk [vmem:[#allocation3 + $0x8] sm:$0xff] %vm2494, %v2449
        %2497 = vst.msk [vmem:[#allocation3 + $0x10] sm:$0xff] %vm2494, %v2451
        %2498 = vst.msk [vmem:[#allocation3 + $0x18] sm:$0xff] %vm2494, %v2453
        %2499 = vst.msk [vmem:[#allocation3 + $0x20] sm:$0xff] %vm2494, %v2455
        %2500 = vst.msk [vmem:[#allocation3 + $0x28] sm:$0xff] %vm2494, %v2457
        %2501 = vst.msk [vmem:[#allocation3 + $0x30] sm:$0xff] %vm2494, %v2459
        %2502 = vst.msk [vmem:[#allocation3 + $0x38] sm:$0xff] %vm2494, %v2461
        %2503 = vst.msk [vmem:[#allocation3 + $0x40] sm:$0xff] %vm2494, %v2463
        %2504 = vst.msk [vmem:[#allocation3 + $0x48] sm:$0xff] %vm2494, %v2465
        %2505 = vst.msk [vmem:[#allocation3 + $0x50] sm:$0xff] %vm2494, %v2467
        %2506 = vst.msk [vmem:[#allocation3 + $0x58] sm:$0xff] %vm2494, %v2469
        %2507 = vst.msk [vmem:[#allocation3 + $0x60] sm:$0xff] %vm2494, %v2471
        %2508 = vst.msk [vmem:[#allocation3 + $0x68] sm:$0xff] %vm2494, %v2473
        %2509 = vst.msk [vmem:[#allocation3 + $0x70] sm:$0xff] %vm2494, %v2475
        %2510 = vst.msk [vmem:[#allocation3 + $0x78] sm:$0xff] %vm2494, %v2477
        %2511 = vrot.lane.b32.xlu0 %v1521, 64
        %v2512 = vpop.permute.xlu0 %2511
        %2513 = vrot.lane.b32.xlu0 %v1522, 64
        %v2514 = vpop.permute.xlu0 %2513
        %2515 = vrot.lane.b32.xlu0 %v1523, 64
        %v2516 = vpop.permute.xlu0 %2515
        %2517 = vrot.lane.b32.xlu0 %v1524, 64
        %v2518 = vpop.permute.xlu0 %2517
        %2519 = vrot.lane.b32.xlu0 %v1525, 64
        %v2520 = vpop.permute.xlu0 %2519
        %2521 = vrot.lane.b32.xlu0 %v1526, 64
        %v2522 = vpop.permute.xlu0 %2521
        %2523 = vrot.lane.b32.xlu0 %v1527, 64
        %v2524 = vpop.permute.xlu0 %2523
        %2525 = vrot.lane.b32.xlu0 %v1528, 64
        %v2526 = vpop.permute.xlu0 %2525
        %2527 = vrot.lane.b32.xlu0 %v1529, 64
        %v2528 = vpop.permute.xlu0 %2527
        %2529 = vrot.lane.b32.xlu0 %v1530, 64
        %v2530 = vpop.permute.xlu0 %2529
        %2531 = vrot.lane.b32.xlu0 %v1531, 64
        %v2532 = vpop.permute.xlu0 %2531
        %2533 = vrot.lane.b32.xlu0 %v1532, 64
        %v2534 = vpop.permute.xlu0 %2533
        %2535 = vrot.lane.b32.xlu0 %v1533, 64
        %v2536 = vpop.permute.xlu0 %2535
        %2537 = vrot.lane.b32.xlu0 %v1534, 64
        %v2538 = vpop.permute.xlu0 %2537
        %2539 = vrot.lane.b32.xlu0 %v1535, 64
        %v2540 = vpop.permute.xlu0 %2539
        %2541 = vrot.lane.b32.xlu0 %v1536, 64
        %v2542 = vpop.permute.xlu0 %2541
        %v2544 = vsel %vm1545, %v2512, 0
        %v2547 = vsel %vm1545, %v2514, 0
        %v2550 = vsel %vm1545, %v2516, 0
        %v2553 = vsel %vm1545, %v2518, 0
        %v2556 = vsel %vm1545, %v2520, 0
        %v2559 = vsel %vm1545, %v2522, 0
        %v2562 = vsel %vm1545, %v2524, 0
        %v2565 = vsel %vm1545, %v2526, 0
        %v2568 = vsel %vm1545, %v2528, 0
        %v2571 = vsel %vm1545, %v2530, 0
        %v2574 = vsel %vm1545, %v2532, 0
        %v2577 = vsel %vm1545, %v2534, 0
        %v2580 = vsel %vm1545, %v2536, 0
        %v2583 = vsel %vm1545, %v2538, 0
        %v2586 = vsel %vm1545, %v2540, 0
        %v2589 = vsel %vm1545, %v2542, 0
        %2591 = vmatprep.subr.bf16.mxu0 0
        %2592 = vmatpush1.bf16.xpose.msra.mxu0 %v2568
        %2593 = vmatprep.subr.bf16.mxu0 0
        %2594 = vmatpush1.bf16.xpose.msra.mxu0 %v2571
        %2595 = vmatprep.subr.bf16.mxu0 0
        %2596 = vmatpush1.bf16.xpose.msra.mxu0 %v2574
        %2597 = vmatprep.subr.bf16.mxu0 0
        %2598 = vmatpush1.bf16.xpose.msra.mxu0 %v2577
        %2599 = vmatprep.subr.bf16.mxu0 0
        %2600 = vmatpush1.bf16.xpose.msra.mxu0 %v2580
        %2601 = vmatprep.subr.bf16.mxu0 0
        %2602 = vmatpush1.bf16.xpose.msra.mxu0 %v2583
        %2603 = vmatprep.subr.bf16.mxu0 0
        %2604 = vmatpush1.bf16.xpose.msra.mxu0 %v2586
        %2605 = vmatprep.subr.bf16.mxu0 0
        %2606 = vmatpush1.bf16.xpose.msra.mxu0 %v2589
        %2607 = vmatprep.subr.bf16.mxu0 0
        %2608 = vmatpush1.bf16.xpose.msra.mxu0 0
        %2609 = vmatprep.subr.bf16.mxu0 0
        %2610 = vmatpush1.bf16.xpose.msra.mxu0 0
        %2611 = vmatprep.subr.bf16.mxu0 0
        %2612 = vmatpush1.bf16.xpose.msra.mxu0 0
        %2613 = vmatprep.subr.bf16.mxu0 0
        %2614 = vmatpush1.bf16.xpose.msra.mxu0 0
        %2615 = vmatprep.subr.bf16.mxu0 0
        %2616 = vmatpush1.bf16.xpose.msra.mxu0 0
        %2617 = vmatprep.subr.bf16.mxu0 0
        %2618 = vmatpush1.bf16.xpose.msra.mxu0 0
        %2619 = vmatprep.subr.bf16.mxu0 0
        %2620 = vmatpush1.bf16.xpose.msra.mxu0 0
        %2621 = vmatprep.subr.bf16.mxu0 0
        %2622 = vmatpush1.bf16.xpose.msra.mxu0 0
        %2623 = vmatprep.mubr.bf16.mxu0 0
        %2624 = vmatmul.mubr.bf16.gmra.mrb[0].mxu0 %v2544
        %v2625 = vpop.f32.mrb[0].mxu0
        %v2626 = vadd.f32 0.0, %v2625
        %v2627 = vpop.f32.mrb[0].mxu0
        %v2628 = vpop.f32.mrb[0].mxu0
        %v2629 = vadd.f32 0.0, %v2628
        %v2630 = vpop.f32.mrb[0].mxu0
        %2631 = vmatprep.mubr.bf16.mxu0 0
        %2632 = vmatmul.mubr.bf16.gmra.mrb[0].mxu0 %v2547
        %v2633 = vpop.f32.mrb[0].mxu0
        %v2634 = vadd.f32 0.0, %v2633
        %v2635 = vpop.f32.mrb[0].mxu0
        %v2636 = vpop.f32.mrb[0].mxu0
        %v2637 = vadd.f32 0.0, %v2636
        %v2638 = vpop.f32.mrb[0].mxu0
        %2639 = vmatprep.mubr.bf16.mxu0 0
        %2640 = vmatmul.mubr.bf16.gmra.mrb[0].mxu0 %v2550
        %v2641 = vpop.f32.mrb[0].mxu0
        %v2642 = vadd.f32 0.0, %v2641
        %v2643 = vpop.f32.mrb[0].mxu0
        %v2644 = vpop.f32.mrb[0].mxu0
        %v2645 = vadd.f32 0.0, %v2644
        %v2646 = vpop.f32.mrb[0].mxu0
        %2647 = vmatprep.mubr.bf16.mxu0 0
        %2648 = vmatmul.mubr.bf16.gmra.mrb[0].mxu0 %v2553
        %v2649 = vpop.f32.mrb[0].mxu0
        %v2650 = vadd.f32 0.0, %v2649
        %v2651 = vpop.f32.mrb[0].mxu0
        %v2652 = vpop.f32.mrb[0].mxu0
        %v2653 = vadd.f32 0.0, %v2652
        %v2654 = vpop.f32.mrb[0].mxu0
        %2655 = vmatprep.mubr.bf16.mxu0 0
        %2656 = vmatmul.mubr.bf16.gmra.mrb[0].mxu0 %v2556
        %v2657 = vpop.f32.mrb[0].mxu0
        %v2658 = vadd.f32 0.0, %v2657
        %v2659 = vpop.f32.mrb[0].mxu0
        %v2660 = vpop.f32.mrb[0].mxu0
        %v2661 = vadd.f32 0.0, %v2660
        %v2662 = vpop.f32.mrb[0].mxu0
        %2663 = vmatprep.mubr.bf16.mxu0 0
        %2664 = vmatmul.mubr.bf16.gmra.mrb[0].mxu0 %v2559
        %v2665 = vpop.f32.mrb[0].mxu0
        %v2666 = vadd.f32 0.0, %v2665
        %v2667 = vpop.f32.mrb[0].mxu0
        %v2668 = vpop.f32.mrb[0].mxu0
        %v2669 = vadd.f32 0.0, %v2668
        %v2670 = vpop.f32.mrb[0].mxu0
        %2671 = vmatprep.mubr.bf16.mxu0 0
        %2672 = vmatmul.mubr.bf16.gmra.mrb[0].mxu0 %v2562
        %v2673 = vpop.f32.mrb[0].mxu0
        %v2674 = vadd.f32 0.0, %v2673
        %v2675 = vpop.f32.mrb[0].mxu0
        %v2676 = vpop.f32.mrb[0].mxu0
        %v2677 = vadd.f32 0.0, %v2676
        %v2678 = vpop.f32.mrb[0].mxu0
        %2679 = vmatprep.mubr.bf16.mxu0 0
        %2680 = vmatmul.mubr.bf16.gmra.mrb[0].mxu0 %v2565
        %v2681 = vpop.f32.mrb[0].mxu0
        %v2682 = vadd.f32 0.0, %v2681
        %v2683 = vpop.f32.mrb[0].mxu0
        %v2684 = vpop.f32.mrb[0].mxu0
        %v2685 = vadd.f32 0.0, %v2684
        %v2686 = vpop.f32.mrb[0].mxu0
        %2687 = vdwg.mxu0
        %2688 = vmax.xlane.f32.xlu0 %v2626
        %v2689 = vpop.xlane.xlu0 %2688
        %2690 = vmax.xlane.f32.xlu0 %v2629
        %v2691 = vpop.xlane.xlu0 %2690
        %2692 = vmax.xlane.f32.xlu0 %v2634
        %v2693 = vpop.xlane.xlu0 %2692
        %2694 = vmax.xlane.f32.xlu0 %v2637
        %v2695 = vpop.xlane.xlu0 %2694
        %2696 = vmax.xlane.f32.xlu0 %v2642
        %v2697 = vpop.xlane.xlu0 %2696
        %2698 = vmax.xlane.f32.xlu0 %v2645
        %v2699 = vpop.xlane.xlu0 %2698
        %2700 = vmax.xlane.f32.xlu0 %v2650
        %v2701 = vpop.xlane.xlu0 %2700
        %2702 = vmax.xlane.f32.xlu0 %v2653
        %v2703 = vpop.xlane.xlu0 %2702
        %2704 = vmax.xlane.f32.xlu0 %v2658
        %v2705 = vpop.xlane.xlu0 %2704
        %2706 = vmax.xlane.f32.xlu0 %v2661
        %v2707 = vpop.xlane.xlu0 %2706
        %2708 = vmax.xlane.f32.xlu0 %v2666
        %v2709 = vpop.xlane.xlu0 %2708
        %2710 = vmax.xlane.f32.xlu0 %v2669
        %v2711 = vpop.xlane.xlu0 %2710
        %2712 = vmax.xlane.f32.xlu0 %v2674
        %v2713 = vpop.xlane.xlu0 %2712
        %2714 = vmax.xlane.f32.xlu0 %v2677
        %v2715 = vpop.xlane.xlu0 %2714
        %2716 = vmax.xlane.f32.xlu0 %v2682
        %v2717 = vpop.xlane.xlu0 %2716
        %2718 = vmax.xlane.f32.xlu0 %v2685
        %v2719 = vpop.xlane.xlu0 %2718
        %v2720 = vsub.f32 %v2626, %v2689
        %v2721 = vsub.f32 %v2629, %v2691
        %v2722 = vsub.f32 %v2634, %v2693
        %v2723 = vsub.f32 %v2637, %v2695
        %v2724 = vsub.f32 %v2642, %v2697
        %v2725 = vsub.f32 %v2645, %v2699
        %v2726 = vsub.f32 %v2650, %v2701
        %v2727 = vsub.f32 %v2653, %v2703
        %v2728 = vsub.f32 %v2658, %v2705
        %v2729 = vsub.f32 %v2661, %v2707
        %v2730 = vsub.f32 %v2666, %v2709
        %v2731 = vsub.f32 %v2669, %v2711
        %v2732 = vsub.f32 %v2674, %v2713
        %v2733 = vsub.f32 %v2677, %v2715
        %v2734 = vsub.f32 %v2682, %v2717
        %v2735 = vsub.f32 %v2685, %v2719
        %v2736 = vmul.f32 %v2720, 1.442695
        %v2737 = vpow.pop %v2736
        %v2738 = vmul.f32 %v2721, 1.442695
        %v2739 = vpow.pop %v2738
        %v2740 = vmul.f32 %v2722, 1.442695
        %v2741 = vpow.pop %v2740
        %v2742 = vmul.f32 %v2723, 1.442695
        %v2743 = vpow.pop %v2742
        %v2744 = vmul.f32 %v2724, 1.442695
        %v2745 = vpow.pop %v2744
        %v2746 = vmul.f32 %v2725, 1.442695
        %v2747 = vpow.pop %v2746
        %v2748 = vmul.f32 %v2726, 1.442695
        %v2749 = vpow.pop %v2748
        %v2750 = vmul.f32 %v2727, 1.442695
        %v2751 = vpow.pop %v2750
        %v2752 = vmul.f32 %v2728, 1.442695
        %v2753 = vpow.pop %v2752
        %v2754 = vmul.f32 %v2729, 1.442695
        %v2755 = vpow.pop %v2754
        %v2756 = vmul.f32 %v2730, 1.442695
        %v2757 = vpow.pop %v2756
        %v2758 = vmul.f32 %v2731, 1.442695
        %v2759 = vpow.pop %v2758
        %v2760 = vmul.f32 %v2732, 1.442695
        %v2761 = vpow.pop %v2760
        %v2762 = vmul.f32 %v2733, 1.442695
        %v2763 = vpow.pop %v2762
        %v2764 = vmul.f32 %v2734, 1.442695
        %v2765 = vpow.pop %v2764
        %v2766 = vmul.f32 %v2735, 1.442695
        %v2767 = vpow.pop %v2766
        %2768 = vadd.xlane.f32.xlu0 %v2737
        %v2769 = vpop.xlane.xlu0 %2768
        %2770 = vadd.xlane.f32.xlu0 %v2739
        %v2771 = vpop.xlane.xlu0 %2770
        %2772 = vadd.xlane.f32.xlu0 %v2741
        %v2773 = vpop.xlane.xlu0 %2772
        %2774 = vadd.xlane.f32.xlu0 %v2743
        %v2775 = vpop.xlane.xlu0 %2774
        %2776 = vadd.xlane.f32.xlu0 %v2745
        %v2777 = vpop.xlane.xlu0 %2776
        %2778 = vadd.xlane.f32.xlu0 %v2747
        %v2779 = vpop.xlane.xlu0 %2778
        %2780 = vadd.xlane.f32.xlu0 %v2749
        %v2781 = vpop.xlane.xlu0 %2780
        %2782 = vadd.xlane.f32.xlu0 %v2751
        %v2783 = vpop.xlane.xlu0 %2782
        %2784 = vadd.xlane.f32.xlu0 %v2753
        %v2785 = vpop.xlane.xlu0 %2784
        %2786 = vadd.xlane.f32.xlu0 %v2755
        %v2787 = vpop.xlane.xlu0 %2786
        %2788 = vadd.xlane.f32.xlu0 %v2757
        %v2789 = vpop.xlane.xlu0 %2788
        %2790 = vadd.xlane.f32.xlu0 %v2759
        %v2791 = vpop.xlane.xlu0 %2790
        %2792 = vadd.xlane.f32.xlu0 %v2761
        %v2793 = vpop.xlane.xlu0 %2792
        %2794 = vadd.xlane.f32.xlu0 %v2763
        %v2795 = vpop.xlane.xlu0 %2794
        %2796 = vadd.xlane.f32.xlu0 %v2765
        %v2797 = vpop.xlane.xlu0 %2796
        %2798 = vadd.xlane.f32.xlu0 %v2767
        %v2799 = vpop.xlane.xlu0 %2798
        %v2800 = vpack.c.bf16 %v2739, %v2737
        %v2801 = vpack.c.bf16 %v2743, %v2741
        %v2802 = vpack.c.bf16 %v2747, %v2745
        %v2803 = vpack.c.bf16 %v2751, %v2749
        %v2804 = vpack.c.bf16 %v2755, %v2753
        %v2805 = vpack.c.bf16 %v2759, %v2757
        %v2806 = vpack.c.bf16 %v2763, %v2761
        %v2807 = vpack.c.bf16 %v2767, %v2765
        %2808 = vrot.lane.b32.xlu0 %v1537, 64
        %v2809 = vpop.permute.xlu0 %2808
        %2810 = vrot.lane.b32.xlu0 %v1538, 64
        %v2811 = vpop.permute.xlu0 %2810
        %2812 = vrot.lane.b32.xlu0 %v1539, 64
        %v2813 = vpop.permute.xlu0 %2812
        %2814 = vrot.lane.b32.xlu0 %v1540, 64
        %v2815 = vpop.permute.xlu0 %2814
        %2816 = vrot.lane.b32.xlu0 %v1541, 64
        %v2817 = vpop.permute.xlu0 %2816
        %2818 = vrot.lane.b32.xlu0 %v1542, 64
        %v2819 = vpop.permute.xlu0 %2818
        %2820 = vrot.lane.b32.xlu0 %v1543, 64
        %v2821 = vpop.permute.xlu0 %2820
        %2822 = vrot.lane.b32.xlu0 %v1544, 64
        %v2823 = vpop.permute.xlu0 %2822
        %2832 = vmatprep.subr.bf16.mxu0 0
        %2833 = vmatpush1.bf16.msra.mxu0 %v2809
        %2834 = vmatprep.subr.bf16.mxu0 0
        %2835 = vmatpush1.bf16.msra.mxu0 %v2811
        %2836 = vmatprep.subr.bf16.mxu0 0
        %2837 = vmatpush1.bf16.msra.mxu0 %v2813
        %2838 = vmatprep.subr.bf16.mxu0 0
        %2839 = vmatpush1.bf16.msra.mxu0 %v2815
        %2840 = vmatprep.subr.bf16.mxu0 0
        %2841 = vmatpush1.bf16.msra.mxu0 %v2817
        %2842 = vmatprep.subr.bf16.mxu0 0
        %2843 = vmatpush1.bf16.msra.mxu0 %v2819
        %2844 = vmatprep.subr.bf16.mxu0 0
        %2845 = vmatpush1.bf16.msra.mxu0 %v2821
        %2846 = vmatprep.subr.bf16.mxu0 0
        %2847 = vmatpush1.bf16.msra.mxu0 %v2823
        %2848 = vmatprep.subr.bf16.mxu0 0
        %2849 = vmatpush1.bf16.msra.mxu0 0
        %2850 = vmatprep.subr.bf16.mxu0 0
        %2851 = vmatpush1.bf16.msra.mxu0 0
        %2852 = vmatprep.subr.bf16.mxu0 0
        %2853 = vmatpush1.bf16.msra.mxu0 0
        %2854 = vmatprep.subr.bf16.mxu0 0
        %2855 = vmatpush1.bf16.msra.mxu0 0
        %2856 = vmatprep.subr.bf16.mxu0 0
        %2857 = vmatpush1.bf16.msra.mxu0 0
        %2858 = vmatprep.subr.bf16.mxu0 0
        %2859 = vmatpush1.bf16.msra.mxu0 0
        %2860 = vmatprep.subr.bf16.mxu0 0
        %2861 = vmatpush1.bf16.msra.mxu0 0
        %2862 = vmatprep.subr.bf16.mxu0 0
        %2863 = vmatpush1.bf16.msra.mxu0 0
        %2864 = vmatprep.mubr.bf16.mxu0 0
        %2865 = vmatmul.mubr.bf16.gmra.mrb[0].mxu0 %v2800
        %v2866 = vpop.f32.mrb[0].mxu0
        %v2867 = vadd.f32 0.0, %v2866
        %v2868 = vpop.f32.mrb[0].mxu0
        %v2869 = vpop.f32.mrb[0].mxu0
        %v2870 = vadd.f32 0.0, %v2869
        %v2871 = vpop.f32.mrb[0].mxu0
        %2872 = vmatprep.mubr.bf16.mxu0 0
        %2873 = vmatmul.mubr.bf16.gmra.mrb[0].mxu0 %v2801
        %v2874 = vpop.f32.mrb[0].mxu0
        %v2875 = vadd.f32 0.0, %v2874
        %v2876 = vpop.f32.mrb[0].mxu0
        %v2877 = vpop.f32.mrb[0].mxu0
        %v2878 = vadd.f32 0.0, %v2877
        %v2879 = vpop.f32.mrb[0].mxu0
        %2880 = vmatprep.mubr.bf16.mxu0 0
        %2881 = vmatmul.mubr.bf16.gmra.mrb[0].mxu0 %v2802
        %v2882 = vpop.f32.mrb[0].mxu0
        %v2883 = vadd.f32 0.0, %v2882
        %v2884 = vpop.f32.mrb[0].mxu0
        %v2885 = vpop.f32.mrb[0].mxu0
        %v2886 = vadd.f32 0.0, %v2885
        %v2887 = vpop.f32.mrb[0].mxu0
        %2888 = vmatprep.mubr.bf16.mxu0 0
        %2889 = vmatmul.mubr.bf16.gmra.mrb[0].mxu0 %v2803
        %v2890 = vpop.f32.mrb[0].mxu0
        %v2891 = vadd.f32 0.0, %v2890
        %v2892 = vpop.f32.mrb[0].mxu0
        %v2893 = vpop.f32.mrb[0].mxu0
        %v2894 = vadd.f32 0.0, %v2893
        %v2895 = vpop.f32.mrb[0].mxu0
        %2896 = vmatprep.mubr.bf16.mxu0 0
        %2897 = vmatmul.mubr.bf16.gmra.mrb[0].mxu0 %v2804
        %v2898 = vpop.f32.mrb[0].mxu0
        %v2899 = vadd.f32 0.0, %v2898
        %v2900 = vpop.f32.mrb[0].mxu0
        %v2901 = vpop.f32.mrb[0].mxu0
        %v2902 = vadd.f32 0.0, %v2901
        %v2903 = vpop.f32.mrb[0].mxu0
        %2904 = vmatprep.mubr.bf16.mxu0 0
        %2905 = vmatmul.mubr.bf16.gmra.mrb[0].mxu0 %v2805
        %v2906 = vpop.f32.mrb[0].mxu0
        %v2907 = vadd.f32 0.0, %v2906
        %v2908 = vpop.f32.mrb[0].mxu0
        %v2909 = vpop.f32.mrb[0].mxu0
        %v2910 = vadd.f32 0.0, %v2909
        %v2911 = vpop.f32.mrb[0].mxu0
        %2912 = vmatprep.mubr.bf16.mxu0 0
        %2913 = vmatmul.mubr.bf16.gmra.mrb[0].mxu0 %v2806
        %v2914 = vpop.f32.mrb[0].mxu0
        %v2915 = vadd.f32 0.0, %v2914
        %v2916 = vpop.f32.mrb[0].mxu0
        %v2917 = vpop.f32.mrb[0].mxu0
        %v2918 = vadd.f32 0.0, %v2917
        %v2919 = vpop.f32.mrb[0].mxu0
        %2920 = vmatprep.mubr.bf16.mxu0 0
        %2921 = vmatmul.mubr.bf16.gmra.mrb[0].mxu0 %v2807
        %v2922 = vpop.f32.mrb[0].mxu0
        %v2923 = vadd.f32 0.0, %v2922
        %v2924 = vpop.f32.mrb[0].mxu0
        %v2925 = vpop.f32.mrb[0].mxu0
        %v2926 = vadd.f32 0.0, %v2925
        %v2927 = vpop.f32.mrb[0].mxu0
        %2928 = vdwg.mxu0
        %v2929 = vrcp.pop %v2769
        %v2930 = vrcp.pop %v2771
        %v2931 = vrcp.pop %v2773
        %v2932 = vrcp.pop %v2775
        %v2933 = vrcp.pop %v2777
        %v2934 = vrcp.pop %v2779
        %v2935 = vrcp.pop %v2781
        %v2936 = vrcp.pop %v2783
        %v2937 = vrcp.pop %v2785
        %v2938 = vrcp.pop %v2787
        %v2939 = vrcp.pop %v2789
        %v2940 = vrcp.pop %v2791
        %v2941 = vrcp.pop %v2793
        %v2942 = vrcp.pop %v2795
        %v2943 = vrcp.pop %v2797
        %v2944 = vrcp.pop %v2799
        %v2945 = vmul.f32 %v2867, %v2929
        %v2946 = vmul.f32 %v2870, %v2930
        %v2947 = vmul.f32 %v2875, %v2931
        %v2948 = vmul.f32 %v2878, %v2932
        %v2949 = vmul.f32 %v2883, %v2933
        %v2950 = vmul.f32 %v2886, %v2934
        %v2951 = vmul.f32 %v2891, %v2935
        %v2952 = vmul.f32 %v2894, %v2936
        %v2953 = vmul.f32 %v2899, %v2937
        %v2954 = vmul.f32 %v2902, %v2938
        %v2955 = vmul.f32 %v2907, %v2939
        %v2956 = vmul.f32 %v2910, %v2940
        %v2957 = vmul.f32 %v2915, %v2941
        %v2958 = vmul.f32 %v2918, %v2942
        %v2959 = vmul.f32 %v2923, %v2943
        %v2960 = vmul.f32 %v2926, %v2944
        %2977 = vrot.lane.b32.xlu0 %v2945, 64
        %v2978 = vpop.permute.xlu0 %2977
        %2979 = vrot.lane.b32.xlu0 %v2946, 64
        %v2980 = vpop.permute.xlu0 %2979
        %2981 = vrot.lane.b32.xlu0 %v2947, 64
        %v2982 = vpop.permute.xlu0 %2981
        %2983 = vrot.lane.b32.xlu0 %v2948, 64
        %v2984 = vpop.permute.xlu0 %2983
        %2985 = vrot.lane.b32.xlu0 %v2949, 64
        %v2986 = vpop.permute.xlu0 %2985
        %2987 = vrot.lane.b32.xlu0 %v2950, 64
        %v2988 = vpop.permute.xlu0 %2987
        %2989 = vrot.lane.b32.xlu0 %v2951, 64
        %v2990 = vpop.permute.xlu0 %2989
        %2991 = vrot.lane.b32.xlu0 %v2952, 64
        %v2992 = vpop.permute.xlu0 %2991
        %2993 = vrot.lane.b32.xlu0 %v2953, 64
        %v2994 = vpop.permute.xlu0 %2993
        %2995 = vrot.lane.b32.xlu0 %v2954, 64
        %v2996 = vpop.permute.xlu0 %2995
        %2997 = vrot.lane.b32.xlu0 %v2955, 64
        %v2998 = vpop.permute.xlu0 %2997
        %2999 = vrot.lane.b32.xlu0 %v2956, 64
        %v3000 = vpop.permute.xlu0 %2999
        %3001 = vrot.lane.b32.xlu0 %v2957, 64
        %v3002 = vpop.permute.xlu0 %3001
        %3003 = vrot.lane.b32.xlu0 %v2958, 64
        %v3004 = vpop.permute.xlu0 %3003
        %3005 = vrot.lane.b32.xlu0 %v2959, 64
        %v3006 = vpop.permute.xlu0 %3005
        %3007 = vrot.lane.b32.xlu0 %v2960, 64
        %v3008 = vpop.permute.xlu0 %3007
        %vm3025 = vcmask 785920
        %3026 = vst.msk [vmem:[#allocation3] sm:$0xff] %vm3025, %v2978
        %3027 = vst.msk [vmem:[#allocation3 + $0x8] sm:$0xff] %vm3025, %v2980
        %3028 = vst.msk [vmem:[#allocation3 + $0x10] sm:$0xff] %vm3025, %v2982
        %3029 = vst.msk [vmem:[#allocation3 + $0x18] sm:$0xff] %vm3025, %v2984
        %3030 = vst.msk [vmem:[#allocation3 + $0x20] sm:$0xff] %vm3025, %v2986
        %3031 = vst.msk [vmem:[#allocation3 + $0x28] sm:$0xff] %vm3025, %v2988
        %3032 = vst.msk [vmem:[#allocation3 + $0x30] sm:$0xff] %vm3025, %v2990
        %3033 = vst.msk [vmem:[#allocation3 + $0x38] sm:$0xff] %vm3025, %v2992
        %3034 = vst.msk [vmem:[#allocation3 + $0x40] sm:$0xff] %vm3025, %v2994
        %3035 = vst.msk [vmem:[#allocation3 + $0x48] sm:$0xff] %vm3025, %v2996
        %3036 = vst.msk [vmem:[#allocation3 + $0x50] sm:$0xff] %vm3025, %v2998
        %3037 = vst.msk [vmem:[#allocation3 + $0x58] sm:$0xff] %vm3025, %v3000
        %3038 = vst.msk [vmem:[#allocation3 + $0x60] sm:$0xff] %vm3025, %v3002
        %3039 = vst.msk [vmem:[#allocation3 + $0x68] sm:$0xff] %vm3025, %v3004
        %3040 = vst.msk [vmem:[#allocation3 + $0x70] sm:$0xff] %vm3025, %v3006
        %3041 = vst.msk [vmem:[#allocation3 + $0x78] sm:$0xff] %vm3025, %v3008
        %3042 = vrot.lane.b32.xlu0 %v1521, 32
        %v3043 = vpop.permute.xlu0 %3042
        %3044 = vrot.lane.b32.xlu0 %v1522, 32
        %v3045 = vpop.permute.xlu0 %3044
        %3046 = vrot.lane.b32.xlu0 %v1523, 32
        %v3047 = vpop.permute.xlu0 %3046
        %3048 = vrot.lane.b32.xlu0 %v1524, 32
        %v3049 = vpop.permute.xlu0 %3048
        %3050 = vrot.lane.b32.xlu0 %v1525, 32
        %v3051 = vpop.permute.xlu0 %3050
        %3052 = vrot.lane.b32.xlu0 %v1526, 32
        %v3053 = vpop.permute.xlu0 %3052
        %3054 = vrot.lane.b32.xlu0 %v1527, 32
        %v3055 = vpop.permute.xlu0 %3054
        %3056 = vrot.lane.b32.xlu0 %v1528, 32
        %v3057 = vpop.permute.xlu0 %3056
        %3058 = vrot.lane.b32.xlu0 %v1529, 32
        %v3059 = vpop.permute.xlu0 %3058
        %3060 = vrot.lane.b32.xlu0 %v1530, 32
        %v3061 = vpop.permute.xlu0 %3060
        %3062 = vrot.lane.b32.xlu0 %v1531, 32
        %v3063 = vpop.permute.xlu0 %3062
        %3064 = vrot.lane.b32.xlu0 %v1532, 32
        %v3065 = vpop.permute.xlu0 %3064
        %3066 = vrot.lane.b32.xlu0 %v1533, 32
        %v3067 = vpop.permute.xlu0 %3066
        %3068 = vrot.lane.b32.xlu0 %v1534, 32
        %v3069 = vpop.permute.xlu0 %3068
        %3070 = vrot.lane.b32.xlu0 %v1535, 32
        %v3071 = vpop.permute.xlu0 %3070
        %3072 = vrot.lane.b32.xlu0 %v1536, 32
        %v3073 = vpop.permute.xlu0 %3072
        %v3075 = vsel %vm1545, %v3043, 0
        %v3078 = vsel %vm1545, %v3045, 0
        %v3081 = vsel %vm1545, %v3047, 0
        %v3084 = vsel %vm1545, %v3049, 0
        %v3087 = vsel %vm1545, %v3051, 0
        %v3090 = vsel %vm1545, %v3053, 0
        %v3093 = vsel %vm1545, %v3055, 0
        %v3096 = vsel %vm1545, %v3057, 0
        %v3099 = vsel %vm1545, %v3059, 0
        %v3102 = vsel %vm1545, %v3061, 0
        %v3105 = vsel %vm1545, %v3063, 0
        %v3108 = vsel %vm1545, %v3065, 0
        %v3111 = vsel %vm1545, %v3067, 0
        %v3114 = vsel %vm1545, %v3069, 0
        %v3117 = vsel %vm1545, %v3071, 0
        %v3120 = vsel %vm1545, %v3073, 0
        %3122 = vmatprep.subr.bf16.mxu0 0
        %3123 = vmatpush1.bf16.xpose.msra.mxu0 %v3099
        %3124 = vmatprep.subr.bf16.mxu0 0
        %3125 = vmatpush1.bf16.xpose.msra.mxu0 %v3102
        %3126 = vmatprep.subr.bf16.mxu0 0
        %3127 = vmatpush1.bf16.xpose.msra.mxu0 %v3105
        %3128 = vmatprep.subr.bf16.mxu0 0
        %3129 = vmatpush1.bf16.xpose.msra.mxu0 %v3108
        %3130 = vmatprep.subr.bf16.mxu0 0
        %3131 = vmatpush1.bf16.xpose.msra.mxu0 %v3111
        %3132 = vmatprep.subr.bf16.mxu0 0
        %3133 = vmatpush1.bf16.xpose.msra.mxu0 %v3114
        %3134 = vmatprep.subr.bf16.mxu0 0
        %3135 = vmatpush1.bf16.xpose.msra.mxu0 %v3117
        %3136 = vmatprep.subr.bf16.mxu0 0
        %3137 = vmatpush1.bf16.xpose.msra.mxu0 %v3120
        %3138 = vmatprep.subr.bf16.mxu0 0
        %3139 = vmatpush1.bf16.xpose.msra.mxu0 0
        %3140 = vmatprep.subr.bf16.mxu0 0
        %3141 = vmatpush1.bf16.xpose.msra.mxu0 0
        %3142 = vmatprep.subr.bf16.mxu0 0
        %3143 = vmatpush1.bf16.xpose.msra.mxu0 0
        %3144 = vmatprep.subr.bf16.mxu0 0
        %3145 = vmatpush1.bf16.xpose.msra.mxu0 0
        %3146 = vmatprep.subr.bf16.mxu0 0
        %3147 = vmatpush1.bf16.xpose.msra.mxu0 0
        %3148 = vmatprep.subr.bf16.mxu0 0
        %3149 = vmatpush1.bf16.xpose.msra.mxu0 0
        %3150 = vmatprep.subr.bf16.mxu0 0
        %3151 = vmatpush1.bf16.xpose.msra.mxu0 0
        %3152 = vmatprep.subr.bf16.mxu0 0
        %3153 = vmatpush1.bf16.xpose.msra.mxu0 0
        %3154 = vmatprep.mubr.bf16.mxu0 0
        %3155 = vmatmul.mubr.bf16.gmra.mrb[0].mxu0 %v3075
        %v3156 = vpop.f32.mrb[0].mxu0
        %v3157 = vadd.f32 0.0, %v3156
        %v3158 = vpop.f32.mrb[0].mxu0
        %v3159 = vpop.f32.mrb[0].mxu0
        %v3160 = vadd.f32 0.0, %v3159
        %v3161 = vpop.f32.mrb[0].mxu0
        %3162 = vmatprep.mubr.bf16.mxu0 0
        %3163 = vmatmul.mubr.bf16.gmra.mrb[0].mxu0 %v3078
        %v3164 = vpop.f32.mrb[0].mxu0
        %v3165 = vadd.f32 0.0, %v3164
        %v3166 = vpop.f32.mrb[0].mxu0
        %v3167 = vpop.f32.mrb[0].mxu0
        %v3168 = vadd.f32 0.0, %v3167
        %v3169 = vpop.f32.mrb[0].mxu0
        %3170 = vmatprep.mubr.bf16.mxu0 0
        %3171 = vmatmul.mubr.bf16.gmra.mrb[0].mxu0 %v3081
        %v3172 = vpop.f32.mrb[0].mxu0
        %v3173 = vadd.f32 0.0, %v3172
        %v3174 = vpop.f32.mrb[0].mxu0
        %v3175 = vpop.f32.mrb[0].mxu0
        %v3176 = vadd.f32 0.0, %v3175
        %v3177 = vpop.f32.mrb[0].mxu0
        %3178 = vmatprep.mubr.bf16.mxu0 0
        %3179 = vmatmul.mubr.bf16.gmra.mrb[0].mxu0 %v3084
        %v3180 = vpop.f32.mrb[0].mxu0
        %v3181 = vadd.f32 0.0, %v3180
        %v3182 = vpop.f32.mrb[0].mxu0
        %v3183 = vpop.f32.mrb[0].mxu0
        %v3184 = vadd.f32 0.0, %v3183
        %v3185 = vpop.f32.mrb[0].mxu0
        %3186 = vmatprep.mubr.bf16.mxu0 0
        %3187 = vmatmul.mubr.bf16.gmra.mrb[0].mxu0 %v3087
        %v3188 = vpop.f32.mrb[0].mxu0
        %v3189 = vadd.f32 0.0, %v3188
        %v3190 = vpop.f32.mrb[0].mxu0
        %v3191 = vpop.f32.mrb[0].mxu0
        %v3192 = vadd.f32 0.0, %v3191
        %v3193 = vpop.f32.mrb[0].mxu0
        %3194 = vmatprep.mubr.bf16.mxu0 0
        %3195 = vmatmul.mubr.bf16.gmra.mrb[0].mxu0 %v3090
        %v3196 = vpop.f32.mrb[0].mxu0
        %v3197 = vadd.f32 0.0, %v3196
        %v3198 = vpop.f32.mrb[0].mxu0
        %v3199 = vpop.f32.mrb[0].mxu0
        %v3200 = vadd.f32 0.0, %v3199
        %v3201 = vpop.f32.mrb[0].mxu0
        %3202 = vmatprep.mubr.bf16.mxu0 0
        %3203 = vmatmul.mubr.bf16.gmra.mrb[0].mxu0 %v3093
        %v3204 = vpop.f32.mrb[0].mxu0
        %v3205 = vadd.f32 0.0, %v3204
        %v3206 = vpop.f32.mrb[0].mxu0
        %v3207 = vpop.f32.mrb[0].mxu0
        %v3208 = vadd.f32 0.0, %v3207
        %v3209 = vpop.f32.mrb[0].mxu0
        %3210 = vmatprep.mubr.bf16.mxu0 0
        %3211 = vmatmul.mubr.bf16.gmra.mrb[0].mxu0 %v3096
        %v3212 = vpop.f32.mrb[0].mxu0
        %v3213 = vadd.f32 0.0, %v3212
        %v3214 = vpop.f32.mrb[0].mxu0
        %v3215 = vpop.f32.mrb[0].mxu0
        %v3216 = vadd.f32 0.0, %v3215
        %v3217 = vpop.f32.mrb[0].mxu0
        %3218 = vdwg.mxu0
        %3219 = vmax.xlane.f32.xlu0 %v3157
        %v3220 = vpop.xlane.xlu0 %3219
        %3221 = vmax.xlane.f32.xlu0 %v3160
        %v3222 = vpop.xlane.xlu0 %3221
        %3223 = vmax.xlane.f32.xlu0 %v3165
        %v3224 = vpop.xlane.xlu0 %3223
        %3225 = vmax.xlane.f32.xlu0 %v3168
        %v3226 = vpop.xlane.xlu0 %3225
        %3227 = vmax.xlane.f32.xlu0 %v3173
        %v3228 = vpop.xlane.xlu0 %3227
        %3229 = vmax.xlane.f32.xlu0 %v3176
        %v3230 = vpop.xlane.xlu0 %3229
        %3231 = vmax.xlane.f32.xlu0 %v3181
        %v3232 = vpop.xlane.xlu0 %3231
        %3233 = vmax.xlane.f32.xlu0 %v3184
        %v3234 = vpop.xlane.xlu0 %3233
        %3235 = vmax.xlane.f32.xlu0 %v3189
        %v3236 = vpop.xlane.xlu0 %3235
        %3237 = vmax.xlane.f32.xlu0 %v3192
        %v3238 = vpop.xlane.xlu0 %3237
        %3239 = vmax.xlane.f32.xlu0 %v3197
        %v3240 = vpop.xlane.xlu0 %3239
        %3241 = vmax.xlane.f32.xlu0 %v3200
        %v3242 = vpop.xlane.xlu0 %3241
        %3243 = vmax.xlane.f32.xlu0 %v3205
        %v3244 = vpop.xlane.xlu0 %3243
        %3245 = vmax.xlane.f32.xlu0 %v3208
        %v3246 = vpop.xlane.xlu0 %3245
        %3247 = vmax.xlane.f32.xlu0 %v3213
        %v3248 = vpop.xlane.xlu0 %3247
        %3249 = vmax.xlane.f32.xlu0 %v3216
        %v3250 = vpop.xlane.xlu0 %3249
        %v3251 = vsub.f32 %v3157, %v3220
        %v3252 = vsub.f32 %v3160, %v3222
        %v3253 = vsub.f32 %v3165, %v3224
        %v3254 = vsub.f32 %v3168, %v3226
        %v3255 = vsub.f32 %v3173, %v3228
        %v3256 = vsub.f32 %v3176, %v3230
        %v3257 = vsub.f32 %v3181, %v3232
        %v3258 = vsub.f32 %v3184, %v3234
        %v3259 = vsub.f32 %v3189, %v3236
        %v3260 = vsub.f32 %v3192, %v3238
        %v3261 = vsub.f32 %v3197, %v3240
        %v3262 = vsub.f32 %v3200, %v3242
        %v3263 = vsub.f32 %v3205, %v3244
        %v3264 = vsub.f32 %v3208, %v3246
        %v3265 = vsub.f32 %v3213, %v3248
        %v3266 = vsub.f32 %v3216, %v3250
        %v3267 = vmul.f32 %v3251, 1.442695
        %v3268 = vpow.pop %v3267
        %v3269 = vmul.f32 %v3252, 1.442695
        %v3270 = vpow.pop %v3269
        %v3271 = vmul.f32 %v3253, 1.442695
        %v3272 = vpow.pop %v3271
        %v3273 = vmul.f32 %v3254, 1.442695
        %v3274 = vpow.pop %v3273
        %v3275 = vmul.f32 %v3255, 1.442695
        %v3276 = vpow.pop %v3275
        %v3277 = vmul.f32 %v3256, 1.442695
        %v3278 = vpow.pop %v3277
        %v3279 = vmul.f32 %v3257, 1.442695
        %v3280 = vpow.pop %v3279
        %v3281 = vmul.f32 %v3258, 1.442695
        %v3282 = vpow.pop %v3281
        %v3283 = vmul.f32 %v3259, 1.442695
        %v3284 = vpow.pop %v3283
        %v3285 = vmul.f32 %v3260, 1.442695
        %v3286 = vpow.pop %v3285
        %v3287 = vmul.f32 %v3261, 1.442695
        %v3288 = vpow.pop %v3287
        %v3289 = vmul.f32 %v3262, 1.442695
        %v3290 = vpow.pop %v3289
        %v3291 = vmul.f32 %v3263, 1.442695
        %v3292 = vpow.pop %v3291
        %v3293 = vmul.f32 %v3264, 1.442695
        %v3294 = vpow.pop %v3293
        %v3295 = vmul.f32 %v3265, 1.442695
        %v3296 = vpow.pop %v3295
        %v3297 = vmul.f32 %v3266, 1.442695
        %v3298 = vpow.pop %v3297
        %3299 = vadd.xlane.f32.xlu0 %v3268
        %v3300 = vpop.xlane.xlu0 %3299
        %3301 = vadd.xlane.f32.xlu0 %v3270
        %v3302 = vpop.xlane.xlu0 %3301
        %3303 = vadd.xlane.f32.xlu0 %v3272
        %v3304 = vpop.xlane.xlu0 %3303
        %3305 = vadd.xlane.f32.xlu0 %v3274
        %v3306 = vpop.xlane.xlu0 %3305
        %3307 = vadd.xlane.f32.xlu0 %v3276
        %v3308 = vpop.xlane.xlu0 %3307
        %3309 = vadd.xlane.f32.xlu0 %v3278
        %v3310 = vpop.xlane.xlu0 %3309
        %3311 = vadd.xlane.f32.xlu0 %v3280
        %v3312 = vpop.xlane.xlu0 %3311
        %3313 = vadd.xlane.f32.xlu0 %v3282
        %v3314 = vpop.xlane.xlu0 %3313
        %3315 = vadd.xlane.f32.xlu0 %v3284
        %v3316 = vpop.xlane.xlu0 %3315
        %3317 = vadd.xlane.f32.xlu0 %v3286
        %v3318 = vpop.xlane.xlu0 %3317
        %3319 = vadd.xlane.f32.xlu0 %v3288
        %v3320 = vpop.xlane.xlu0 %3319
        %3321 = vadd.xlane.f32.xlu0 %v3290
        %v3322 = vpop.xlane.xlu0 %3321
        %3323 = vadd.xlane.f32.xlu0 %v3292
        %v3324 = vpop.xlane.xlu0 %3323
        %3325 = vadd.xlane.f32.xlu0 %v3294
        %v3326 = vpop.xlane.xlu0 %3325
        %3327 = vadd.xlane.f32.xlu0 %v3296
        %v3328 = vpop.xlane.xlu0 %3327
        %3329 = vadd.xlane.f32.xlu0 %v3298
        %v3330 = vpop.xlane.xlu0 %3329
        %v3331 = vpack.c.bf16 %v3270, %v3268
        %v3332 = vpack.c.bf16 %v3274, %v3272
        %v3333 = vpack.c.bf16 %v3278, %v3276
        %v3334 = vpack.c.bf16 %v3282, %v3280
        %v3335 = vpack.c.bf16 %v3286, %v3284
        %v3336 = vpack.c.bf16 %v3290, %v3288
        %v3337 = vpack.c.bf16 %v3294, %v3292
        %v3338 = vpack.c.bf16 %v3298, %v3296
        %3339 = vrot.lane.b32.xlu0 %v1537, 32
        %v3340 = vpop.permute.xlu0 %3339
        %3341 = vrot.lane.b32.xlu0 %v1538, 32
        %v3342 = vpop.permute.xlu0 %3341
        %3343 = vrot.lane.b32.xlu0 %v1539, 32
        %v3344 = vpop.permute.xlu0 %3343
        %3345 = vrot.lane.b32.xlu0 %v1540, 32
        %v3346 = vpop.permute.xlu0 %3345
        %3347 = vrot.lane.b32.xlu0 %v1541, 32
        %v3348 = vpop.permute.xlu0 %3347
        %3349 = vrot.lane.b32.xlu0 %v1542, 32
        %v3350 = vpop.permute.xlu0 %3349
        %3351 = vrot.lane.b32.xlu0 %v1543, 32
        %v3352 = vpop.permute.xlu0 %3351
        %3353 = vrot.lane.b32.xlu0 %v1544, 32
        %v3354 = vpop.permute.xlu0 %3353
        %3363 = vmatprep.subr.bf16.mxu0 0
        %3364 = vmatpush1.bf16.msra.mxu0 %v3340
        %3365 = vmatprep.subr.bf16.mxu0 0
        %3366 = vmatpush1.bf16.msra.mxu0 %v3342
        %3367 = vmatprep.subr.bf16.mxu0 0
        %3368 = vmatpush1.bf16.msra.mxu0 %v3344
        %3369 = vmatprep.subr.bf16.mxu0 0
        %3370 = vmatpush1.bf16.msra.mxu0 %v3346
        %3371 = vmatprep.subr.bf16.mxu0 0
        %3372 = vmatpush1.bf16.msra.mxu0 %v3348
        %3373 = vmatprep.subr.bf16.mxu0 0
        %3374 = vmatpush1.bf16.msra.mxu0 %v3350
        %3375 = vmatprep.subr.bf16.mxu0 0
        %3376 = vmatpush1.bf16.msra.mxu0 %v3352
        %3377 = vmatprep.subr.bf16.mxu0 0
        %3378 = vmatpush1.bf16.msra.mxu0 %v3354
        %3379 = vmatprep.subr.bf16.mxu0 0
        %3380 = vmatpush1.bf16.msra.mxu0 0
        %3381 = vmatprep.subr.bf16.mxu0 0
        %3382 = vmatpush1.bf16.msra.mxu0 0
        %3383 = vmatprep.subr.bf16.mxu0 0
        %3384 = vmatpush1.bf16.msra.mxu0 0
        %3385 = vmatprep.subr.bf16.mxu0 0
        %3386 = vmatpush1.bf16.msra.mxu0 0
        %3387 = vmatprep.subr.bf16.mxu0 0
        %3388 = vmatpush1.bf16.msra.mxu0 0
        %3389 = vmatprep.subr.bf16.mxu0 0
        %3390 = vmatpush1.bf16.msra.mxu0 0
        %3391 = vmatprep.subr.bf16.mxu0 0
        %3392 = vmatpush1.bf16.msra.mxu0 0
        %3393 = vmatprep.subr.bf16.mxu0 0
        %3394 = vmatpush1.bf16.msra.mxu0 0
        %3395 = vmatprep.mubr.bf16.mxu0 0
        %3396 = vmatmul.mubr.bf16.gmra.mrb[0].mxu0 %v3331
        %v3397 = vpop.f32.mrb[0].mxu0
        %v3398 = vadd.f32 0.0, %v3397
        %v3399 = vpop.f32.mrb[0].mxu0
        %v3400 = vpop.f32.mrb[0].mxu0
        %v3401 = vadd.f32 0.0, %v3400
        %v3402 = vpop.f32.mrb[0].mxu0
        %3403 = vmatprep.mubr.bf16.mxu0 0
        %3404 = vmatmul.mubr.bf16.gmra.mrb[0].mxu0 %v3332
        %v3405 = vpop.f32.mrb[0].mxu0
        %v3406 = vadd.f32 0.0, %v3405
        %v3407 = vpop.f32.mrb[0].mxu0
        %v3408 = vpop.f32.mrb[0].mxu0
        %v3409 = vadd.f32 0.0, %v3408
        %v3410 = vpop.f32.mrb[0].mxu0
        %3411 = vmatprep.mubr.bf16.mxu0 0
        %3412 = vmatmul.mubr.bf16.gmra.mrb[0].mxu0 %v3333
        %v3413 = vpop.f32.mrb[0].mxu0
        %v3414 = vadd.f32 0.0, %v3413
        %v3415 = vpop.f32.mrb[0].mxu0
        %v3416 = vpop.f32.mrb[0].mxu0
        %v3417 = vadd.f32 0.0, %v3416
        %v3418 = vpop.f32.mrb[0].mxu0
        %3419 = vmatprep.mubr.bf16.mxu0 0
        %3420 = vmatmul.mubr.bf16.gmra.mrb[0].mxu0 %v3334
        %v3421 = vpop.f32.mrb[0].mxu0
        %v3422 = vadd.f32 0.0, %v3421
        %v3423 = vpop.f32.mrb[0].mxu0
        %v3424 = vpop.f32.mrb[0].mxu0
        %v3425 = vadd.f32 0.0, %v3424
        %v3426 = vpop.f32.mrb[0].mxu0
        %3427 = vmatprep.mubr.bf16.mxu0 0
        %3428 = vmatmul.mubr.bf16.gmra.mrb[0].mxu0 %v3335
        %v3429 = vpop.f32.mrb[0].mxu0
        %v3430 = vadd.f32 0.0, %v3429
        %v3431 = vpop.f32.mrb[0].mxu0
        %v3432 = vpop.f32.mrb[0].mxu0
        %v3433 = vadd.f32 0.0, %v3432
        %v3434 = vpop.f32.mrb[0].mxu0
        %3435 = vmatprep.mubr.bf16.mxu0 0
        %3436 = vmatmul.mubr.bf16.gmra.mrb[0].mxu0 %v3336
        %v3437 = vpop.f32.mrb[0].mxu0
        %v3438 = vadd.f32 0.0, %v3437
        %v3439 = vpop.f32.mrb[0].mxu0
        %v3440 = vpop.f32.mrb[0].mxu0
        %v3441 = vadd.f32 0.0, %v3440
        %v3442 = vpop.f32.mrb[0].mxu0
        %3443 = vmatprep.mubr.bf16.mxu0 0
        %3444 = vmatmul.mubr.bf16.gmra.mrb[0].mxu0 %v3337
        %v3445 = vpop.f32.mrb[0].mxu0
        %v3446 = vadd.f32 0.0, %v3445
        %v3447 = vpop.f32.mrb[0].mxu0
        %v3448 = vpop.f32.mrb[0].mxu0
        %v3449 = vadd.f32 0.0, %v3448
        %v3450 = vpop.f32.mrb[0].mxu0
        %3451 = vmatprep.mubr.bf16.mxu0 0
        %3452 = vmatmul.mubr.bf16.gmra.mrb[0].mxu0 %v3338
        %v3453 = vpop.f32.mrb[0].mxu0
        %v3454 = vadd.f32 0.0, %v3453
        %v3455 = vpop.f32.mrb[0].mxu0
        %v3456 = vpop.f32.mrb[0].mxu0
        %v3457 = vadd.f32 0.0, %v3456
        %v3458 = vpop.f32.mrb[0].mxu0
        %3459 = vdwg.mxu0
        %v3460 = vrcp.pop %v3300
        %v3461 = vrcp.pop %v3302
        %v3462 = vrcp.pop %v3304
        %v3463 = vrcp.pop %v3306
        %v3464 = vrcp.pop %v3308
        %v3465 = vrcp.pop %v3310
        %v3466 = vrcp.pop %v3312
        %v3467 = vrcp.pop %v3314
        %v3468 = vrcp.pop %v3316
        %v3469 = vrcp.pop %v3318
        %v3470 = vrcp.pop %v3320
        %v3471 = vrcp.pop %v3322
        %v3472 = vrcp.pop %v3324
        %v3473 = vrcp.pop %v3326
        %v3474 = vrcp.pop %v3328
        %v3475 = vrcp.pop %v3330
        %v3476 = vmul.f32 %v3398, %v3460
        %v3477 = vmul.f32 %v3401, %v3461
        %v3478 = vmul.f32 %v3406, %v3462
        %v3479 = vmul.f32 %v3409, %v3463
        %v3480 = vmul.f32 %v3414, %v3464
        %v3481 = vmul.f32 %v3417, %v3465
        %v3482 = vmul.f32 %v3422, %v3466
        %v3483 = vmul.f32 %v3425, %v3467
        %v3484 = vmul.f32 %v3430, %v3468
        %v3485 = vmul.f32 %v3433, %v3469
        %v3486 = vmul.f32 %v3438, %v3470
        %v3487 = vmul.f32 %v3441, %v3471
        %v3488 = vmul.f32 %v3446, %v3472
        %v3489 = vmul.f32 %v3449, %v3473
        %v3490 = vmul.f32 %v3454, %v3474
        %v3491 = vmul.f32 %v3457, %v3475
        %3508 = vrot.lane.b32.xlu0 %v3476, 96
        %v3509 = vpop.permute.xlu0 %3508
        %3510 = vrot.lane.b32.xlu0 %v3477, 96
        %v3511 = vpop.permute.xlu0 %3510
        %3512 = vrot.lane.b32.xlu0 %v3478, 96
        %v3513 = vpop.permute.xlu0 %3512
        %3514 = vrot.lane.b32.xlu0 %v3479, 96
        %v3515 = vpop.permute.xlu0 %3514
        %3516 = vrot.lane.b32.xlu0 %v3480, 96
        %v3517 = vpop.permute.xlu0 %3516
        %3518 = vrot.lane.b32.xlu0 %v3481, 96
        %v3519 = vpop.permute.xlu0 %3518
        %3520 = vrot.lane.b32.xlu0 %v3482, 96
        %v3521 = vpop.permute.xlu0 %3520
        %3522 = vrot.lane.b32.xlu0 %v3483, 96
        %v3523 = vpop.permute.xlu0 %3522
        %3524 = vrot.lane.b32.xlu0 %v3484, 96
        %v3525 = vpop.permute.xlu0 %3524
        %3526 = vrot.lane.b32.xlu0 %v3485, 96
        %v3527 = vpop.permute.xlu0 %3526
        %3528 = vrot.lane.b32.xlu0 %v3486, 96
        %v3529 = vpop.permute.xlu0 %3528
        %3530 = vrot.lane.b32.xlu0 %v3487, 96
        %v3531 = vpop.permute.xlu0 %3530
        %3532 = vrot.lane.b32.xlu0 %v3488, 96
        %v3533 = vpop.permute.xlu0 %3532
        %3534 = vrot.lane.b32.xlu0 %v3489, 96
        %v3535 = vpop.permute.xlu0 %3534
        %3536 = vrot.lane.b32.xlu0 %v3490, 96
        %v3537 = vpop.permute.xlu0 %3536
        %3538 = vrot.lane.b32.xlu0 %v3491, 96
        %v3539 = vpop.permute.xlu0 %3538
        %vm3556 = vcmask 1048320
        %3557 = vst.msk [vmem:[#allocation3] sm:$0xff] %vm3556, %v3509
        %3558 = vst.msk [vmem:[#allocation3 + $0x8] sm:$0xff] %vm3556, %v3511
        %3559 = vst.msk [vmem:[#allocation3 + $0x10] sm:$0xff] %vm3556, %v3513
        %3560 = vst.msk [vmem:[#allocation3 + $0x18] sm:$0xff] %vm3556, %v3515
        %3561 = vst.msk [vmem:[#allocation3 + $0x20] sm:$0xff] %vm3556, %v3517
        %3562 = vst.msk [vmem:[#allocation3 + $0x28] sm:$0xff] %vm3556, %v3519
        %3563 = vst.msk [vmem:[#allocation3 + $0x30] sm:$0xff] %vm3556, %v3521
        %3564 = vst.msk [vmem:[#allocation3 + $0x38] sm:$0xff] %vm3556, %v3523
        %3565 = vst.msk [vmem:[#allocation3 + $0x40] sm:$0xff] %vm3556, %v3525
        %3566 = vst.msk [vmem:[#allocation3 + $0x48] sm:$0xff] %vm3556, %v3527
        %3567 = vst.msk [vmem:[#allocation3 + $0x50] sm:$0xff] %vm3556, %v3529
        %3568 = vst.msk [vmem:[#allocation3 + $0x58] sm:$0xff] %vm3556, %v3531
        %3569 = vst.msk [vmem:[#allocation3 + $0x60] sm:$0xff] %vm3556, %v3533
        %3570 = vst.msk [vmem:[#allocation3 + $0x68] sm:$0xff] %vm3556, %v3535
        %3571 = vst.msk [vmem:[#allocation3 + $0x70] sm:$0xff] %vm3556, %v3537
        %3572 = vst.msk [vmem:[#allocation3 + $0x78] sm:$0xff] %vm3556, %v3539
        %v3573 = vld [vmem:[#allocation3] sm:$0xff]
        %v3574 = vld [vmem:[#allocation3 + $0x8] sm:$0xff]
        %v3575 = vld [vmem:[#allocation3 + $0x10] sm:$0xff]
        %v3576 = vld [vmem:[#allocation3 + $0x18] sm:$0xff]
        %v3577 = vld [vmem:[#allocation3 + $0x20] sm:$0xff]
        %v3578 = vld [vmem:[#allocation3 + $0x28] sm:$0xff]
        %v3579 = vld [vmem:[#allocation3 + $0x30] sm:$0xff]
        %v3580 = vld [vmem:[#allocation3 + $0x38] sm:$0xff]
        %v3581 = vld [vmem:[#allocation3 + $0x40] sm:$0xff]
        %v3582 = vld [vmem:[#allocation3 + $0x48] sm:$0xff]
        %v3583 = vld [vmem:[#allocation3 + $0x50] sm:$0xff]
        %v3584 = vld [vmem:[#allocation3 + $0x58] sm:$0xff]
        %v3585 = vld [vmem:[#allocation3 + $0x60] sm:$0xff]
        %v3586 = vld [vmem:[#allocation3 + $0x68] sm:$0xff]
        %v3587 = vld [vmem:[#allocation3 + $0x70] sm:$0xff]
        %v3588 = vld [vmem:[#allocation3 + $0x78] sm:$0xff]
        %v3589 = vpack.c.bf16 %v3574, %v3573
        %v3590 = vpack.c.bf16 %v3576, %v3575
        %v3591 = vpack.c.bf16 %v3578, %v3577
        %v3592 = vpack.c.bf16 %v3580, %v3579
        %v3593 = vpack.c.bf16 %v3582, %v3581
        %v3594 = vpack.c.bf16 %v3584, %v3583
        %v3595 = vpack.c.bf16 %v3586, %v3585
        %v3596 = vpack.c.bf16 %v3588, %v3587
        %v3597 = vld [vmem:[%s701] sm:$0xf]
        %v3598 = vld [vmem:[%s701 + $0x4] sm:$0xf]
        %v3599 = vld [vmem:[%s701 + $0x8] sm:$0xf]
        %v3600 = vld [vmem:[%s701 + $0xc] sm:$0xf]
        %v3601 = vld [vmem:[%s701 + $0x10] sm:$0xf]
        %v3602 = vld [vmem:[%s701 + $0x14] sm:$0xf]
        %v3603 = vld [vmem:[%s701 + $0x18] sm:$0xf]
        %v3604 = vld [vmem:[%s701 + $0x1c] sm:$0xf]
        %v3605 = vld [vmem:[%s701 + $0x20] sm:$0xf]
        %v3606 = vld [vmem:[%s701 + $0x24] sm:$0xf]
        %v3607 = vld [vmem:[%s701 + $0x28] sm:$0xf]
        %v3608 = vld [vmem:[%s701 + $0x2c] sm:$0xf]
        %v3609 = vld [vmem:[%s701 + $0x30] sm:$0xf]
        %v3610 = vld [vmem:[%s701 + $0x34] sm:$0xf]
        %v3611 = vld [vmem:[%s701 + $0x38] sm:$0xf]
        %v3612 = vld [vmem:[%s701 + $0x3c] sm:$0xf]
        %v3613 = vld [vmem:[%s820] sm:$0x1]
        %v3615 = vlaneseq
        %v3616 = vshrl.u32 %v3615, 7
        %v3617 = vsub.s32 0, %v3616
        %v3618 = vrot.slane %v3613, %v3617
        %v3636 = vunpack.c.l.b16 %v3597
        %v3637 = vunpack.c.l.b16 %v3598
        %v3638 = vunpack.c.l.b16 %v3599
        %v3639 = vunpack.c.l.b16 %v3600
        %v3640 = vunpack.c.l.b16 %v3601
        %v3641 = vunpack.c.l.b16 %v3602
        %v3642 = vunpack.c.l.b16 %v3603
        %v3643 = vunpack.c.l.b16 %v3604
        %v3644 = vunpack.c.l.b16 %v3605
        %v3645 = vunpack.c.l.b16 %v3606
        %v3646 = vunpack.c.l.b16 %v3607
        %v3647 = vunpack.c.l.b16 %v3608
        %v3648 = vunpack.c.l.b16 %v3609
        %v3649 = vunpack.c.l.b16 %v3610
        %v3650 = vunpack.c.l.b16 %v3611
        %v3651 = vunpack.c.l.b16 %v3612
        %v3652 = vpack.c.b16 %v3637, %v3636
        %v3653 = vpack.c.b16 %v3639, %v3638
        %v3654 = vpack.c.b16 %v3641, %v3640
        %v3655 = vpack.c.b16 %v3643, %v3642
        %v3656 = vpack.c.b16 %v3645, %v3644
        %v3657 = vpack.c.b16 %v3647, %v3646
        %v3658 = vpack.c.b16 %v3649, %v3648
        %v3659 = vpack.c.b16 %v3651, %v3650
        %3668 = vmatprep.subr.bf16.mxu0 0
        %3669 = vmatpush1.bf16.msra.mxu0 %v3652
        %3670 = vmatprep.subr.bf16.mxu0 0
        %3671 = vmatpush1.bf16.msra.mxu0 %v3653
        %3672 = vmatprep.subr.bf16.mxu0 0
        %3673 = vmatpush1.bf16.msra.mxu0 %v3654
        %3674 = vmatprep.subr.bf16.mxu0 0
        %3675 = vmatpush1.bf16.msra.mxu0 %v3655
        %3676 = vmatprep.subr.bf16.mxu0 0
        %3677 = vmatpush1.bf16.msra.mxu0 %v3656
        %3678 = vmatprep.subr.bf16.mxu0 0
        %3679 = vmatpush1.bf16.msra.mxu0 %v3657
        %3680 = vmatprep.subr.bf16.mxu0 0
        %3681 = vmatpush1.bf16.msra.mxu0 %v3658
        %3682 = vmatprep.subr.bf16.mxu0 0
        %3683 = vmatpush1.bf16.msra.mxu0 %v3659
        %3684 = vmatprep.subr.bf16.mxu0 0
        %3685 = vmatpush1.bf16.msra.mxu0 0
        %3686 = vmatprep.subr.bf16.mxu0 0
        %3687 = vmatpush1.bf16.msra.mxu0 0
        %3688 = vmatprep.subr.bf16.mxu0 0
        %3689 = vmatpush1.bf16.msra.mxu0 0
        %3690 = vmatprep.subr.bf16.mxu0 0
        %3691 = vmatpush1.bf16.msra.mxu0 0
        %3692 = vmatprep.subr.bf16.mxu0 0
        %3693 = vmatpush1.bf16.msra.mxu0 0
        %3694 = vmatprep.subr.bf16.mxu0 0
        %3695 = vmatpush1.bf16.msra.mxu0 0
        %3696 = vmatprep.subr.bf16.mxu0 0
        %3697 = vmatpush1.bf16.msra.mxu0 0
        %3698 = vmatprep.subr.bf16.mxu0 0
        %3699 = vmatpush1.bf16.msra.mxu0 0
        %3700 = vmatprep.mubr.bf16.mxu0 0
        %3701 = vmatmul.mubr.bf16.gmra.mrb[0].mxu0 %v3589
        %v3702 = vpop.f32.mrb[0].mxu0
        %v3703 = vadd.f32 %v3618, %v3702
        %v3704 = vpop.f32.mrb[0].mxu0
        %v3705 = vpop.f32.mrb[0].mxu0
        %v3706 = vadd.f32 %v3618, %v3705
        %v3707 = vpop.f32.mrb[0].mxu0
        %3708 = vmatprep.mubr.bf16.mxu0 0
        %3709 = vmatmul.mubr.bf16.gmra.mrb[0].mxu0 %v3590
        %v3710 = vpop.f32.mrb[0].mxu0
        %v3711 = vadd.f32 %v3618, %v3710
        %v3712 = vpop.f32.mrb[0].mxu0
        %v3713 = vpop.f32.mrb[0].mxu0
        %v3714 = vadd.f32 %v3618, %v3713
        %v3715 = vpop.f32.mrb[0].mxu0
        %3716 = vmatprep.mubr.bf16.mxu0 0
        %3717 = vmatmul.mubr.bf16.gmra.mrb[0].mxu0 %v3591
        %v3718 = vpop.f32.mrb[0].mxu0
        %v3719 = vadd.f32 %v3618, %v3718
        %v3720 = vpop.f32.mrb[0].mxu0
        %v3721 = vpop.f32.mrb[0].mxu0
        %v3722 = vadd.f32 %v3618, %v3721
        %v3723 = vpop.f32.mrb[0].mxu0
        %3724 = vmatprep.mubr.bf16.mxu0 0
        %3725 = vmatmul.mubr.bf16.gmra.mrb[0].mxu0 %v3592
        %v3726 = vpop.f32.mrb[0].mxu0
        %v3727 = vadd.f32 %v3618, %v3726
        %v3728 = vpop.f32.mrb[0].mxu0
        %v3729 = vpop.f32.mrb[0].mxu0
        %v3730 = vadd.f32 %v3618, %v3729
        %v3731 = vpop.f32.mrb[0].mxu0
        %3732 = vmatprep.mubr.bf16.mxu0 0
        %3733 = vmatmul.mubr.bf16.gmra.mrb[0].mxu0 %v3593
        %v3734 = vpop.f32.mrb[0].mxu0
        %v3735 = vadd.f32 %v3618, %v3734
        %v3736 = vpop.f32.mrb[0].mxu0
        %v3737 = vpop.f32.mrb[0].mxu0
        %v3738 = vadd.f32 %v3618, %v3737
        %v3739 = vpop.f32.mrb[0].mxu0
        %3740 = vmatprep.mubr.bf16.mxu0 0
        %3741 = vmatmul.mubr.bf16.gmra.mrb[0].mxu0 %v3594
        %v3742 = vpop.f32.mrb[0].mxu0
        %v3743 = vadd.f32 %v3618, %v3742
        %v3744 = vpop.f32.mrb[0].mxu0
        %v3745 = vpop.f32.mrb[0].mxu0
        %v3746 = vadd.f32 %v3618, %v3745
        %v3747 = vpop.f32.mrb[0].mxu0
        %3748 = vmatprep.mubr.bf16.mxu0 0
        %3749 = vmatmul.mubr.bf16.gmra.mrb[0].mxu0 %v3595
        %v3750 = vpop.f32.mrb[0].mxu0
        %v3751 = vadd.f32 %v3618, %v3750
        %v3752 = vpop.f32.mrb[0].mxu0
        %v3753 = vpop.f32.mrb[0].mxu0
        %v3754 = vadd.f32 %v3618, %v3753
        %v3755 = vpop.f32.mrb[0].mxu0
        %3756 = vmatprep.mubr.bf16.mxu0 0
        %3757 = vmatmul.mubr.bf16.gmra.mrb[0].mxu0 %v3596
        %v3758 = vpop.f32.mrb[0].mxu0
        %v3759 = vadd.f32 %v3618, %v3758
        %v3760 = vpop.f32.mrb[0].mxu0
        %v3761 = vpop.f32.mrb[0].mxu0
        %v3762 = vadd.f32 %v3618, %v3761
        %v3763 = vpop.f32.mrb[0].mxu0
        %3764 = vdwg.mxu0
        %v3765 = vadd.f32 %v871, %v3703
        %v3766 = vadd.f32 %v872, %v3706
        %v3767 = vadd.f32 %v873, %v3711
        %v3768 = vadd.f32 %v874, %v3714
        %v3769 = vadd.f32 %v875, %v3719
        %v3770 = vadd.f32 %v876, %v3722
        %v3771 = vadd.f32 %v877, %v3727
        %v3772 = vadd.f32 %v878, %v3730
        %v3773 = vadd.f32 %v879, %v3735
        %v3774 = vadd.f32 %v880, %v3738
        %v3775 = vadd.f32 %v881, %v3743
        %v3776 = vadd.f32 %v882, %v3746
        %v3777 = vadd.f32 %v883, %v3751
        %v3778 = vadd.f32 %v884, %v3754
        %v3779 = vadd.f32 %v885, %v3759
        %v3780 = vadd.f32 %v886, %v3762
        %v3781 = vld [vmem:[%s823] sm:$0x1]
        %v3782 = vld [vmem:[%s826] sm:$0x1]
        %3783 = vadd.xlane.f32.xlu0 %v3765
        %v3784 = vpop.xlane.xlu0 %3783
        %3785 = vadd.xlane.f32.xlu0 %v3766
        %v3786 = vpop.xlane.xlu0 %3785
        %3787 = vadd.xlane.f32.xlu0 %v3767
        %v3788 = vpop.xlane.xlu0 %3787
        %3789 = vadd.xlane.f32.xlu0 %v3768
        %v3790 = vpop.xlane.xlu0 %3789
        %3791 = vadd.xlane.f32.xlu0 %v3769
        %v3792 = vpop.xlane.xlu0 %3791
        %3793 = vadd.xlane.f32.xlu0 %v3770
        %v3794 = vpop.xlane.xlu0 %3793
        %3795 = vadd.xlane.f32.xlu0 %v3771
        %v3796 = vpop.xlane.xlu0 %3795
        %3797 = vadd.xlane.f32.xlu0 %v3772
        %v3798 = vpop.xlane.xlu0 %3797
        %3799 = vadd.xlane.f32.xlu0 %v3773
        %v3800 = vpop.xlane.xlu0 %3799
        %3801 = vadd.xlane.f32.xlu0 %v3774
        %v3802 = vpop.xlane.xlu0 %3801
        %3803 = vadd.xlane.f32.xlu0 %v3775
        %v3804 = vpop.xlane.xlu0 %3803
        %3805 = vadd.xlane.f32.xlu0 %v3776
        %v3806 = vpop.xlane.xlu0 %3805
        %3807 = vadd.xlane.f32.xlu0 %v3777
        %v3808 = vpop.xlane.xlu0 %3807
        %3809 = vadd.xlane.f32.xlu0 %v3778
        %v3810 = vpop.xlane.xlu0 %3809
        %3811 = vadd.xlane.f32.xlu0 %v3779
        %v3812 = vpop.xlane.xlu0 %3811
        %3813 = vadd.xlane.f32.xlu0 %v3780
        %v3814 = vpop.xlane.xlu0 %3813
        %v3815 = vmul.f32 %v3784, %v921
        %v3816 = vmul.f32 %v3786, %v921
        %v3817 = vmul.f32 %v3788, %v921
        %v3818 = vmul.f32 %v3790, %v921
        %v3819 = vmul.f32 %v3792, %v921
        %v3820 = vmul.f32 %v3794, %v921
        %v3821 = vmul.f32 %v3796, %v921
        %v3822 = vmul.f32 %v3798, %v921
        %v3823 = vmul.f32 %v3800, %v921
        %v3824 = vmul.f32 %v3802, %v921
        %v3825 = vmul.f32 %v3804, %v921
        %v3826 = vmul.f32 %v3806, %v921
        %v3827 = vmul.f32 %v3808, %v921
        %v3828 = vmul.f32 %v3810, %v921
        %v3829 = vmul.f32 %v3812, %v921
        %v3830 = vmul.f32 %v3814, %v921
        %v3831 = vsub.f32 %v3765, %v3815
        %v3832 = vsub.f32 %v3766, %v3816
        %v3833 = vsub.f32 %v3767, %v3817
        %v3834 = vsub.f32 %v3768, %v3818
        %v3835 = vsub.f32 %v3769, %v3819
        %v3836 = vsub.f32 %v3770, %v3820
        %v3837 = vsub.f32 %v3771, %v3821
        %v3838 = vsub.f32 %v3772, %v3822
        %v3839 = vsub.f32 %v3773, %v3823
        %v3840 = vsub.f32 %v3774, %v3824
        %v3841 = vsub.f32 %v3775, %v3825
        %v3842 = vsub.f32 %v3776, %v3826
        %v3843 = vsub.f32 %v3777, %v3827
        %v3844 = vsub.f32 %v3778, %v3828
        %v3845 = vsub.f32 %v3779, %v3829
        %v3846 = vsub.f32 %v3780, %v3830
        %v3847 = vmul.f32 %v3831, %v3831
        %v3848 = vmul.f32 %v3832, %v3832
        %v3849 = vmul.f32 %v3833, %v3833
        %v3850 = vmul.f32 %v3834, %v3834
        %v3851 = vmul.f32 %v3835, %v3835
        %v3852 = vmul.f32 %v3836, %v3836
        %v3853 = vmul.f32 %v3837, %v3837
        %v3854 = vmul.f32 %v3838, %v3838
        %v3855 = vmul.f32 %v3839, %v3839
        %v3856 = vmul.f32 %v3840, %v3840
        %v3857 = vmul.f32 %v3841, %v3841
        %v3858 = vmul.f32 %v3842, %v3842
        %v3859 = vmul.f32 %v3843, %v3843
        %v3860 = vmul.f32 %v3844, %v3844
        %v3861 = vmul.f32 %v3845, %v3845
        %v3862 = vmul.f32 %v3846, %v3846
        %3863 = vadd.xlane.f32.xlu0 %v3847
        %v3864 = vpop.xlane.xlu0 %3863
        %3865 = vadd.xlane.f32.xlu0 %v3848
        %v3866 = vpop.xlane.xlu0 %3865
        %3867 = vadd.xlane.f32.xlu0 %v3849
        %v3868 = vpop.xlane.xlu0 %3867
        %3869 = vadd.xlane.f32.xlu0 %v3850
        %v3870 = vpop.xlane.xlu0 %3869
        %3871 = vadd.xlane.f32.xlu0 %v3851
        %v3872 = vpop.xlane.xlu0 %3871
        %3873 = vadd.xlane.f32.xlu0 %v3852
        %v3874 = vpop.xlane.xlu0 %3873
        %3875 = vadd.xlane.f32.xlu0 %v3853
        %v3876 = vpop.xlane.xlu0 %3875
        %3877 = vadd.xlane.f32.xlu0 %v3854
        %v3878 = vpop.xlane.xlu0 %3877
        %3879 = vadd.xlane.f32.xlu0 %v3855
        %v3880 = vpop.xlane.xlu0 %3879
        %3881 = vadd.xlane.f32.xlu0 %v3856
        %v3882 = vpop.xlane.xlu0 %3881
        %3883 = vadd.xlane.f32.xlu0 %v3857
        %v3884 = vpop.xlane.xlu0 %3883
        %3885 = vadd.xlane.f32.xlu0 %v3858
        %v3886 = vpop.xlane.xlu0 %3885
        %3887 = vadd.xlane.f32.xlu0 %v3859
        %v3888 = vpop.xlane.xlu0 %3887
        %3889 = vadd.xlane.f32.xlu0 %v3860
        %v3890 = vpop.xlane.xlu0 %3889
        %3891 = vadd.xlane.f32.xlu0 %v3861
        %v3892 = vpop.xlane.xlu0 %3891
        %3893 = vadd.xlane.f32.xlu0 %v3862
        %v3894 = vpop.xlane.xlu0 %3893
        %v3895 = vmul.f32 %v3864, %v921
        %v3896 = vmul.f32 %v3866, %v921
        %v3897 = vmul.f32 %v3868, %v921
        %v3898 = vmul.f32 %v3870, %v921
        %v3899 = vmul.f32 %v3872, %v921
        %v3900 = vmul.f32 %v3874, %v921
        %v3901 = vmul.f32 %v3876, %v921
        %v3902 = vmul.f32 %v3878, %v921
        %v3903 = vmul.f32 %v3880, %v921
        %v3904 = vmul.f32 %v3882, %v921
        %v3905 = vmul.f32 %v3884, %v921
        %v3906 = vmul.f32 %v3886, %v921
        %v3907 = vmul.f32 %v3888, %v921
        %v3908 = vmul.f32 %v3890, %v921
        %v3909 = vmul.f32 %v3892, %v921
        %v3910 = vmul.f32 %v3894, %v921
        %v3911 = vadd.f32 %v3895, 1e-06
        %v3912 = vadd.f32 %v3896, 1e-06
        %v3913 = vadd.f32 %v3897, 1e-06
        %v3914 = vadd.f32 %v3898, 1e-06
        %v3915 = vadd.f32 %v3899, 1e-06
        %v3916 = vadd.f32 %v3900, 1e-06
        %v3917 = vadd.f32 %v3901, 1e-06
        %v3918 = vadd.f32 %v3902, 1e-06
        %v3919 = vadd.f32 %v3903, 1e-06
        %v3920 = vadd.f32 %v3904, 1e-06
        %v3921 = vadd.f32 %v3905, 1e-06
        %v3922 = vadd.f32 %v3906, 1e-06
        %v3923 = vadd.f32 %v3907, 1e-06
        %v3924 = vadd.f32 %v3908, 1e-06
        %v3925 = vadd.f32 %v3909, 1e-06
        %v3926 = vadd.f32 %v3910, 1e-06
        %v3927 = vrsqrt.pop %v3911
        %v3928 = vrsqrt.pop %v3912
        %v3929 = vrsqrt.pop %v3913
        %v3930 = vrsqrt.pop %v3914
        %v3931 = vrsqrt.pop %v3915
        %v3932 = vrsqrt.pop %v3916
        %v3933 = vrsqrt.pop %v3917
        %v3934 = vrsqrt.pop %v3918
        %v3935 = vrsqrt.pop %v3919
        %v3936 = vrsqrt.pop %v3920
        %v3937 = vrsqrt.pop %v3921
        %v3938 = vrsqrt.pop %v3922
        %v3939 = vrsqrt.pop %v3923
        %v3940 = vrsqrt.pop %v3924
        %v3941 = vrsqrt.pop %v3925
        %v3942 = vrsqrt.pop %v3926
        %v3943 = vmul.f32 %v3831, %v3927
        %v3944 = vmul.f32 %v3832, %v3928
        %v3945 = vmul.f32 %v3833, %v3929
        %v3946 = vmul.f32 %v3834, %v3930
        %v3947 = vmul.f32 %v3835, %v3931
        %v3948 = vmul.f32 %v3836, %v3932
        %v3949 = vmul.f32 %v3837, %v3933
        %v3950 = vmul.f32 %v3838, %v3934
        %v3951 = vmul.f32 %v3839, %v3935
        %v3952 = vmul.f32 %v3840, %v3936
        %v3953 = vmul.f32 %v3841, %v3937
        %v3954 = vmul.f32 %v3842, %v3938
        %v3955 = vmul.f32 %v3843, %v3939
        %v3956 = vmul.f32 %v3844, %v3940
        %v3957 = vmul.f32 %v3845, %v3941
        %v3958 = vmul.f32 %v3846, %v3942
        %v3960 = vlaneseq
        %v3961 = vshrl.u32 %v3960, 7
        %v3962 = vsub.s32 0, %v3961
        %v3963 = vrot.slane %v3781, %v3962
        %v3965 = vmul.f32 %v3943, %v3963
        %v3966 = vmul.f32 %v3944, %v3963
        %v3967 = vmul.f32 %v3945, %v3963
        %v3968 = vmul.f32 %v3946, %v3963
        %v3969 = vmul.f32 %v3947, %v3963
        %v3970 = vmul.f32 %v3948, %v3963
        %v3971 = vmul.f32 %v3949, %v3963
        %v3972 = vmul.f32 %v3950, %v3963
        %v3973 = vmul.f32 %v3951, %v3963
        %v3974 = vmul.f32 %v3952, %v3963
        %v3975 = vmul.f32 %v3953, %v3963
        %v3976 = vmul.f32 %v3954, %v3963
        %v3977 = vmul.f32 %v3955, %v3963
        %v3978 = vmul.f32 %v3956, %v3963
        %v3979 = vmul.f32 %v3957, %v3963
        %v3980 = vmul.f32 %v3958, %v3963
        %v3982 = vlaneseq
        %v3983 = vshrl.u32 %v3982, 7
        %v3984 = vsub.s32 0, %v3983
        %v3985 = vrot.slane %v3782, %v3984
        %v3987 = vadd.f32 %v3965, %v3985
        %v3988 = vadd.f32 %v3966, %v3985
        %v3989 = vadd.f32 %v3967, %v3985
        %v3990 = vadd.f32 %v3968, %v3985
        %v3991 = vadd.f32 %v3969, %v3985
        %v3992 = vadd.f32 %v3970, %v3985
        %v3993 = vadd.f32 %v3971, %v3985
        %v3994 = vadd.f32 %v3972, %v3985
        %v3995 = vadd.f32 %v3973, %v3985
        %v3996 = vadd.f32 %v3974, %v3985
        %v3997 = vadd.f32 %v3975, %v3985
        %v3998 = vadd.f32 %v3976, %v3985
        %v3999 = vadd.f32 %v3977, %v3985
        %v4000 = vadd.f32 %v3978, %v3985
        %v4001 = vadd.f32 %v3979, %v3985
        %v4002 = vadd.f32 %v3980, %v3985
        %v4003 = vpack.c.bf16 %v3988, %v3987
        %v4004 = vpack.c.bf16 %v3990, %v3989
        %v4005 = vpack.c.bf16 %v3992, %v3991
        %v4006 = vpack.c.bf16 %v3994, %v3993
        %v4007 = vpack.c.bf16 %v3996, %v3995
        %v4008 = vpack.c.bf16 %v3998, %v3997
        %v4009 = vpack.c.bf16 %v4000, %v3999
        %v4010 = vpack.c.bf16 %v4002, %v4001
        %v4011 = vld [vmem:[%s710] sm:$0xff]
        %v4012 = vld [vmem:[%s710 + $0x8] sm:$0xff]
        %v4013 = vld [vmem:[%s710 + $0x10] sm:$0xff]
        %v4014 = vld [vmem:[%s710 + $0x18] sm:$0xff]
        %v4015 = vld [vmem:[%s710 + $0x20] sm:$0xff]
        %v4016 = vld [vmem:[%s710 + $0x28] sm:$0xff]
        %v4017 = vld [vmem:[%s710 + $0x30] sm:$0xff]
        %v4018 = vld [vmem:[%s710 + $0x38] sm:$0xff]
        %v4019 = vld [vmem:[%s710 + $0x40] sm:$0xff]
        %v4020 = vld [vmem:[%s710 + $0x48] sm:$0xff]
        %v4021 = vld [vmem:[%s710 + $0x50] sm:$0xff]
        %v4022 = vld [vmem:[%s710 + $0x58] sm:$0xff]
        %v4023 = vld [vmem:[%s710 + $0x60] sm:$0xff]
        %v4024 = vld [vmem:[%s710 + $0x68] sm:$0xff]
        %v4025 = vld [vmem:[%s710 + $0x70] sm:$0xff]
        %v4026 = vld [vmem:[%s710 + $0x78] sm:$0xff]
        %v4027 = vld [vmem:[%s830] sm:$0x3]
        %v4029 = vlaneseq
        %v4030 = vshrl.u32 %v4029, 7
        %v4031 = vsub.s32 0, %v4030
        %v4032 = vrot.slane %v4027, %v4031
        %v4033 = vlaneseq
        %v4034 = vshrl.u32 %v4033, 7
        %v4035 = vsub.s32 1, %v4034
        %v4036 = vrot.slane %v4027, %v4035
        %v4055 = vunpack.c.l.b16 %v4011
        %v4056 = vunpack.c.h.b16 %v4011
        %v4057 = vunpack.c.l.b16 %v4012
        %v4058 = vunpack.c.h.b16 %v4012
        %v4059 = vunpack.c.l.b16 %v4013
        %v4060 = vunpack.c.h.b16 %v4013
        %v4061 = vunpack.c.l.b16 %v4014
        %v4062 = vunpack.c.h.b16 %v4014
        %v4063 = vunpack.c.l.b16 %v4015
        %v4064 = vunpack.c.h.b16 %v4015
        %v4065 = vunpack.c.l.b16 %v4016
        %v4066 = vunpack.c.h.b16 %v4016
        %v4067 = vunpack.c.l.b16 %v4017
        %v4068 = vunpack.c.h.b16 %v4017
        %v4069 = vunpack.c.l.b16 %v4018
        %v4070 = vunpack.c.h.b16 %v4018
        %v4071 = vunpack.c.l.b16 %v4019
        %v4072 = vunpack.c.h.b16 %v4019
        %v4073 = vunpack.c.l.b16 %v4020
        %v4074 = vunpack.c.h.b16 %v4020
        %v4075 = vunpack.c.l.b16 %v4021
        %v4076 = vunpack.c.h.b16 %v4021
        %v4077 = vunpack.c.l.b16 %v4022
        %v4078 = vunpack.c.h.b16 %v4022
        %v4079 = vunpack.c.l.b16 %v4023
        %v4080 = vunpack.c.h.b16 %v4023
        %v4081 = vunpack.c.l.b16 %v4024
        %v4082 = vunpack.c.h.b16 %v4024
        %v4083 = vunpack.c.l.b16 %v4025
        %v4084 = vunpack.c.h.b16 %v4025
        %v4085 = vunpack.c.l.b16 %v4026
        %v4086 = vunpack.c.h.b16 %v4026
        %v4087 = vpack.c.b16 %v4057, %v4055
        %v4088 = vpack.c.b16 %v4058, %v4056
        %v4089 = vpack.c.b16 %v4061, %v4059
        %v4090 = vpack.c.b16 %v4062, %v4060
        %v4091 = vpack.c.b16 %v4065, %v4063
        %v4092 = vpack.c.b16 %v4066, %v4064
        %v4093 = vpack.c.b16 %v4069, %v4067
        %v4094 = vpack.c.b16 %v4070, %v4068
        %v4095 = vpack.c.b16 %v4073, %v4071
        %v4096 = vpack.c.b16 %v4074, %v4072
        %v4097 = vpack.c.b16 %v4077, %v4075
        %v4098 = vpack.c.b16 %v4078, %v4076
        %v4099 = vpack.c.b16 %v4081, %v4079
        %v4100 = vpack.c.b16 %v4082, %v4080
        %v4101 = vpack.c.b16 %v4085, %v4083
        %v4102 = vpack.c.b16 %v4086, %v4084
        %4119 = vmatprep.subr.bf16.mxu0 %v4088
        %4120 = vmatpush1.bf16.msra.mxu0 %v4087
        %4121 = vmatprep.subr.bf16.mxu0 %v4090
        %4122 = vmatpush1.bf16.msra.mxu0 %v4089
        %4123 = vmatprep.subr.bf16.mxu0 %v4092
        %4124 = vmatpush1.bf16.msra.mxu0 %v4091
        %4125 = vmatprep.subr.bf16.mxu0 %v4094
        %4126 = vmatpush1.bf16.msra.mxu0 %v4093
        %4127 = vmatprep.subr.bf16.mxu0 %v4096
        %4128 = vmatpush1.bf16.msra.mxu0 %v4095
        %4129 = vmatprep.subr.bf16.mxu0 %v4098
        %4130 = vmatpush1.bf16.msra.mxu0 %v4097
        %4131 = vmatprep.subr.bf16.mxu0 %v4100
        %4132 = vmatpush1.bf16.msra.mxu0 %v4099
        %4133 = vmatprep.subr.bf16.mxu0 %v4102
        %4134 = vmatpush1.bf16.msra.mxu0 %v4101
        %4135 = vmatprep.subr.bf16.mxu0 0
        %4136 = vmatpush1.bf16.msra.mxu0 0
        %4137 = vmatprep.subr.bf16.mxu0 0
        %4138 = vmatpush1.bf16.msra.mxu0 0
        %4139 = vmatprep.subr.bf16.mxu0 0
        %4140 = vmatpush1.bf16.msra.mxu0 0
        %4141 = vmatprep.subr.bf16.mxu0 0
        %4142 = vmatpush1.bf16.msra.mxu0 0
        %4143 = vmatprep.subr.bf16.mxu0 0
        %4144 = vmatpush1.bf16.msra.mxu0 0
        %4145 = vmatprep.subr.bf16.mxu0 0
        %4146 = vmatpush1.bf16.msra.mxu0 0
        %4147 = vmatprep.subr.bf16.mxu0 0
        %4148 = vmatpush1.bf16.msra.mxu0 0
        %4149 = vmatprep.subr.bf16.mxu0 0
        %4150 = vmatpush1.bf16.msra.mxu0 0
        %4151 = vmatprep.mubr.bf16.mxu0 0
        %4152 = vmatmul.mubr.bf16.gmra.mrb[0].mxu0 %v4003
        %v4153 = vpop.f32.mrb[0].mxu0
        %v4154 = vadd.f32 %v4032, %v4153
        %v4155 = vpop.f32.mrb[0].mxu0
        %v4156 = vadd.f32 %v4036, %v4155
        %v4157 = vpop.f32.mrb[0].mxu0
        %v4158 = vadd.f32 %v4032, %v4157
        %v4159 = vpop.f32.mrb[0].mxu0
        %v4160 = vadd.f32 %v4036, %v4159
        %4161 = vmatprep.mubr.bf16.mxu0 0
        %4162 = vmatmul.mubr.bf16.gmra.mrb[0].mxu0 %v4004
        %v4163 = vpop.f32.mrb[0].mxu0
        %v4164 = vadd.f32 %v4032, %v4163
        %v4165 = vpop.f32.mrb[0].mxu0
        %v4166 = vadd.f32 %v4036, %v4165
        %v4167 = vpop.f32.mrb[0].mxu0
        %v4168 = vadd.f32 %v4032, %v4167
        %v4169 = vpop.f32.mrb[0].mxu0
        %v4170 = vadd.f32 %v4036, %v4169
        %4171 = vmatprep.mubr.bf16.mxu0 0
        %4172 = vmatmul.mubr.bf16.gmra.mrb[0].mxu0 %v4005
        %v4173 = vpop.f32.mrb[0].mxu0
        %v4174 = vadd.f32 %v4032, %v4173
        %v4175 = vpop.f32.mrb[0].mxu0
        %v4176 = vadd.f32 %v4036, %v4175
        %v4177 = vpop.f32.mrb[0].mxu0
        %v4178 = vadd.f32 %v4032, %v4177
        %v4179 = vpop.f32.mrb[0].mxu0
        %v4180 = vadd.f32 %v4036, %v4179
        %4181 = vmatprep.mubr.bf16.mxu0 0
        %4182 = vmatmul.mubr.bf16.gmra.mrb[0].mxu0 %v4006
        %v4183 = vpop.f32.mrb[0].mxu0
        %v4184 = vadd.f32 %v4032, %v4183
        %v4185 = vpop.f32.mrb[0].mxu0
        %v4186 = vadd.f32 %v4036, %v4185
        %v4187 = vpop.f32.mrb[0].mxu0
        %v4188 = vadd.f32 %v4032, %v4187
        %v4189 = vpop.f32.mrb[0].mxu0
        %v4190 = vadd.f32 %v4036, %v4189
        %4191 = vmatprep.mubr.bf16.mxu0 0
        %4192 = vmatmul.mubr.bf16.gmra.mrb[0].mxu0 %v4007
        %v4193 = vpop.f32.mrb[0].mxu0
        %v4194 = vadd.f32 %v4032, %v4193
        %v4195 = vpop.f32.mrb[0].mxu0
        %v4196 = vadd.f32 %v4036, %v4195
        %v4197 = vpop.f32.mrb[0].mxu0
        %v4198 = vadd.f32 %v4032, %v4197
        %v4199 = vpop.f32.mrb[0].mxu0
        %v4200 = vadd.f32 %v4036, %v4199
        %4201 = vmatprep.mubr.bf16.mxu0 0
        %4202 = vmatmul.mubr.bf16.gmra.mrb[0].mxu0 %v4008
        %v4203 = vpop.f32.mrb[0].mxu0
        %v4204 = vadd.f32 %v4032, %v4203
        %v4205 = vpop.f32.mrb[0].mxu0
        %v4206 = vadd.f32 %v4036, %v4205
        %v4207 = vpop.f32.mrb[0].mxu0
        %v4208 = vadd.f32 %v4032, %v4207
        %v4209 = vpop.f32.mrb[0].mxu0
        %v4210 = vadd.f32 %v4036, %v4209
        %4211 = vmatprep.mubr.bf16.mxu0 0
        %4212 = vmatmul.mubr.bf16.gmra.mrb[0].mxu0 %v4009
        %v4213 = vpop.f32.mrb[0].mxu0
        %v4214 = vadd.f32 %v4032, %v4213
        %v4215 = vpop.f32.mrb[0].mxu0
        %v4216 = vadd.f32 %v4036, %v4215
        %v4217 = vpop.f32.mrb[0].mxu0
        %v4218 = vadd.f32 %v4032, %v4217
        %v4219 = vpop.f32.mrb[0].mxu0
        %v4220 = vadd.f32 %v4036, %v4219
        %4221 = vmatprep.mubr.bf16.mxu0 0
        %4222 = vmatmul.mubr.bf16.gmra.mrb[0].mxu0 %v4010
        %v4223 = vpop.f32.mrb[0].mxu0
        %v4224 = vadd.f32 %v4032, %v4223
        %v4225 = vpop.f32.mrb[0].mxu0
        %v4226 = vadd.f32 %v4036, %v4225
        %v4227 = vpop.f32.mrb[0].mxu0
        %v4228 = vadd.f32 %v4032, %v4227
        %v4229 = vpop.f32.mrb[0].mxu0
        %v4230 = vadd.f32 %v4036, %v4229
        %4231 = vdwg.mxu0
        %v4232 = vmul.f32 %v4154, 0.5
        %v4233 = vmul.f32 %v4156, 0.5
        %v4234 = vmul.f32 %v4158, 0.5
        %v4235 = vmul.f32 %v4160, 0.5
        %v4236 = vmul.f32 %v4164, 0.5
        %v4237 = vmul.f32 %v4166, 0.5
        %v4238 = vmul.f32 %v4168, 0.5
        %v4239 = vmul.f32 %v4170, 0.5
        %v4240 = vmul.f32 %v4174, 0.5
        %v4241 = vmul.f32 %v4176, 0.5
        %v4242 = vmul.f32 %v4178, 0.5
        %v4243 = vmul.f32 %v4180, 0.5
        %v4244 = vmul.f32 %v4184, 0.5
        %v4245 = vmul.f32 %v4186, 0.5
        %v4246 = vmul.f32 %v4188, 0.5
        %v4247 = vmul.f32 %v4190, 0.5
        %v4248 = vmul.f32 %v4194, 0.5
        %v4249 = vmul.f32 %v4196, 0.5
        %v4250 = vmul.f32 %v4198, 0.5
        %v4251 = vmul.f32 %v4200, 0.5
        %v4252 = vmul.f32 %v4204, 0.5
        %v4253 = vmul.f32 %v4206, 0.5
        %v4254 = vmul.f32 %v4208, 0.5
        %v4255 = vmul.f32 %v4210, 0.5
        %v4256 = vmul.f32 %v4214, 0.5
        %v4257 = vmul.f32 %v4216, 0.5
        %v4258 = vmul.f32 %v4218, 0.5
        %v4259 = vmul.f32 %v4220, 0.5
        %v4260 = vmul.f32 %v4224, 0.5
        %v4261 = vmul.f32 %v4226, 0.5
        %v4262 = vmul.f32 %v4228, 0.5
        %v4263 = vmul.f32 %v4230, 0.5
        %v4264 = vmul.f32 %v4154, 0.044715
        %v4265 = vmul.f32 %v4156, 0.044715
        %v4266 = vmul.f32 %v4158, 0.044715
        %v4267 = vmul.f32 %v4160, 0.044715
        %v4268 = vmul.f32 %v4164, 0.044715
        %v4269 = vmul.f32 %v4166, 0.044715
        %v4270 = vmul.f32 %v4168, 0.044715
        %v4271 = vmul.f32 %v4170, 0.044715
        %v4272 = vmul.f32 %v4174, 0.044715
        %v4273 = vmul.f32 %v4176, 0.044715
        %v4274 = vmul.f32 %v4178, 0.044715
        %v4275 = vmul.f32 %v4180, 0.044715
        %v4276 = vmul.f32 %v4184, 0.044715
        %v4277 = vmul.f32 %v4186, 0.044715
        %v4278 = vmul.f32 %v4188, 0.044715
        %v4279 = vmul.f32 %v4190, 0.044715
        %v4280 = vmul.f32 %v4194, 0.044715
        %v4281 = vmul.f32 %v4196, 0.044715
        %v4282 = vmul.f32 %v4198, 0.044715
        %v4283 = vmul.f32 %v4200, 0.044715
        %v4284 = vmul.f32 %v4204, 0.044715
        %v4285 = vmul.f32 %v4206, 0.044715
        %v4286 = vmul.f32 %v4208, 0.044715
        %v4287 = vmul.f32 %v4210, 0.044715
        %v4288 = vmul.f32 %v4214, 0.044715
        %v4289 = vmul.f32 %v4216, 0.044715
        %v4290 = vmul.f32 %v4218, 0.044715
        %v4291 = vmul.f32 %v4220, 0.044715
        %v4292 = vmul.f32 %v4224, 0.044715
        %v4293 = vmul.f32 %v4226, 0.044715
        %v4294 = vmul.f32 %v4228, 0.044715
        %v4295 = vmul.f32 %v4230, 0.044715
        %v4296 = vmul.f32 %v4264, %v4154
        %v4297 = vmul.f32 %v4265, %v4156
        %v4298 = vmul.f32 %v4266, %v4158
        %v4299 = vmul.f32 %v4267, %v4160
        %v4300 = vmul.f32 %v4268, %v4164
        %v4301 = vmul.f32 %v4269, %v4166
        %v4302 = vmul.f32 %v4270, %v4168
        %v4303 = vmul.f32 %v4271, %v4170
        %v4304 = vmul.f32 %v4272, %v4174
        %v4305 = vmul.f32 %v4273, %v4176
        %v4306 = vmul.f32 %v4274, %v4178
        %v4307 = vmul.f32 %v4275, %v4180
        %v4308 = vmul.f32 %v4276, %v4184
        %v4309 = vmul.f32 %v4277, %v4186
        %v4310 = vmul.f32 %v4278, %v4188
        %v4311 = vmul.f32 %v4279, %v4190
        %v4312 = vmul.f32 %v4280, %v4194
        %v4313 = vmul.f32 %v4281, %v4196
        %v4314 = vmul.f32 %v4282, %v4198
        %v4315 = vmul.f32 %v4283, %v4200
        %v4316 = vmul.f32 %v4284, %v4204
        %v4317 = vmul.f32 %v4285, %v4206
        %v4318 = vmul.f32 %v4286, %v4208
        %v4319 = vmul.f32 %v4287, %v4210
        %v4320 = vmul.f32 %v4288, %v4214
        %v4321 = vmul.f32 %v4289, %v4216
        %v4322 = vmul.f32 %v4290, %v4218
        %v4323 = vmul.f32 %v4291, %v4220
        %v4324 = vmul.f32 %v4292, %v4224
        %v4325 = vmul.f32 %v4293, %v4226
        %v4326 = vmul.f32 %v4294, %v4228
        %v4327 = vmul.f32 %v4295, %v4230
        %v4328 = vmul.f32 %v4296, %v4154
        %v4329 = vmul.f32 %v4297, %v4156
        %v4330 = vmul.f32 %v4298, %v4158
        %v4331 = vmul.f32 %v4299, %v4160
        %v4332 = vmul.f32 %v4300, %v4164
        %v4333 = vmul.f32 %v4301, %v4166
        %v4334 = vmul.f32 %v4302, %v4168
        %v4335 = vmul.f32 %v4303, %v4170
        %v4336 = vmul.f32 %v4304, %v4174
        %v4337 = vmul.f32 %v4305, %v4176
        %v4338 = vmul.f32 %v4306, %v4178
        %v4339 = vmul.f32 %v4307, %v4180
        %v4340 = vmul.f32 %v4308, %v4184
        %v4341 = vmul.f32 %v4309, %v4186
        %v4342 = vmul.f32 %v4310, %v4188
        %v4343 = vmul.f32 %v4311, %v4190
        %v4344 = vmul.f32 %v4312, %v4194
        %v4345 = vmul.f32 %v4313, %v4196
        %v4346 = vmul.f32 %v4314, %v4198
        %v4347 = vmul.f32 %v4315, %v4200
        %v4348 = vmul.f32 %v4316, %v4204
        %v4349 = vmul.f32 %v4317, %v4206
        %v4350 = vmul.f32 %v4318, %v4208
        %v4351 = vmul.f32 %v4319, %v4210
        %v4352 = vmul.f32 %v4320, %v4214
        %v4353 = vmul.f32 %v4321, %v4216
        %v4354 = vmul.f32 %v4322, %v4218
        %v4355 = vmul.f32 %v4323, %v4220
        %v4356 = vmul.f32 %v4324, %v4224
        %v4357 = vmul.f32 %v4325, %v4226
        %v4358 = vmul.f32 %v4326, %v4228
        %v4359 = vmul.f32 %v4327, %v4230
        %v4360 = vadd.f32 %v4154, %v4328
        %v4361 = vadd.f32 %v4156, %v4329
        %v4362 = vadd.f32 %v4158, %v4330
        %v4363 = vadd.f32 %v4160, %v4331
        %v4364 = vadd.f32 %v4164, %v4332
        %v4365 = vadd.f32 %v4166, %v4333
        %v4366 = vadd.f32 %v4168, %v4334
        %v4367 = vadd.f32 %v4170, %v4335
        %v4368 = vadd.f32 %v4174, %v4336
        %v4369 = vadd.f32 %v4176, %v4337
        %v4370 = vadd.f32 %v4178, %v4338
        %v4371 = vadd.f32 %v4180, %v4339
        %v4372 = vadd.f32 %v4184, %v4340
        %v4373 = vadd.f32 %v4186, %v4341
        %v4374 = vadd.f32 %v4188, %v4342
        %v4375 = vadd.f32 %v4190, %v4343
        %v4376 = vadd.f32 %v4194, %v4344
        %v4377 = vadd.f32 %v4196, %v4345
        %v4378 = vadd.f32 %v4198, %v4346
        %v4379 = vadd.f32 %v4200, %v4347
        %v4380 = vadd.f32 %v4204, %v4348
        %v4381 = vadd.f32 %v4206, %v4349
        %v4382 = vadd.f32 %v4208, %v4350
        %v4383 = vadd.f32 %v4210, %v4351
        %v4384 = vadd.f32 %v4214, %v4352
        %v4385 = vadd.f32 %v4216, %v4353
        %v4386 = vadd.f32 %v4218, %v4354
        %v4387 = vadd.f32 %v4220, %v4355
        %v4388 = vadd.f32 %v4224, %v4356
        %v4389 = vadd.f32 %v4226, %v4357
        %v4390 = vadd.f32 %v4228, %v4358
        %v4391 = vadd.f32 %v4230, %v4359
        %v4392 = vmul.f32 %v4360, 0.7978846
        %v4393 = vmul.f32 %v4361, 0.7978846
        %v4394 = vmul.f32 %v4362, 0.7978846
        %v4395 = vmul.f32 %v4363, 0.7978846
        %v4396 = vmul.f32 %v4364, 0.7978846
        %v4397 = vmul.f32 %v4365, 0.7978846
        %v4398 = vmul.f32 %v4366, 0.7978846
        %v4399 = vmul.f32 %v4367, 0.7978846
        %v4400 = vmul.f32 %v4368, 0.7978846
        %v4401 = vmul.f32 %v4369, 0.7978846
        %v4402 = vmul.f32 %v4370, 0.7978846
        %v4403 = vmul.f32 %v4371, 0.7978846
        %v4404 = vmul.f32 %v4372, 0.7978846
        %v4405 = vmul.f32 %v4373, 0.7978846
        %v4406 = vmul.f32 %v4374, 0.7978846
        %v4407 = vmul.f32 %v4375, 0.7978846
        %v4408 = vmul.f32 %v4376, 0.7978846
        %v4409 = vmul.f32 %v4377, 0.7978846
        %v4410 = vmul.f32 %v4378, 0.7978846
        %v4411 = vmul.f32 %v4379, 0.7978846
        %v4412 = vmul.f32 %v4380, 0.7978846
        %v4413 = vmul.f32 %v4381, 0.7978846
        %v4414 = vmul.f32 %v4382, 0.7978846
        %v4415 = vmul.f32 %v4383, 0.7978846
        %v4416 = vmul.f32 %v4384, 0.7978846
        %v4417 = vmul.f32 %v4385, 0.7978846
        %v4418 = vmul.f32 %v4386, 0.7978846
        %v4419 = vmul.f32 %v4387, 0.7978846
        %v4420 = vmul.f32 %v4388, 0.7978846
        %v4421 = vmul.f32 %v4389, 0.7978846
        %v4422 = vmul.f32 %v4390, 0.7978846
        %v4423 = vmul.f32 %v4391, 0.7978846
        %v4424 = vtanh.pop %v4392
        %v4425 = vtanh.pop %v4393
        %v4426 = vtanh.pop %v4394
        %v4427 = vtanh.pop %v4395
        %v4428 = vtanh.pop %v4396
        %v4429 = vtanh.pop %v4397
        %v4430 = vtanh.pop %v4398
        %v4431 = vtanh.pop %v4399
        %v4432 = vtanh.pop %v4400
        %v4433 = vtanh.pop %v4401
        %v4434 = vtanh.pop %v4402
        %v4435 = vtanh.pop %v4403
        %v4436 = vtanh.pop %v4404
        %v4437 = vtanh.pop %v4405
        %v4438 = vtanh.pop %v4406
        %v4439 = vtanh.pop %v4407
        %v4440 = vtanh.pop %v4408
        %v4441 = vtanh.pop %v4409
        %v4442 = vtanh.pop %v4410
        %v4443 = vtanh.pop %v4411
        %v4444 = vtanh.pop %v4412
        %v4445 = vtanh.pop %v4413
        %v4446 = vtanh.pop %v4414
        %v4447 = vtanh.pop %v4415
        %v4448 = vtanh.pop %v4416
        %v4449 = vtanh.pop %v4417
        %v4450 = vtanh.pop %v4418
        %v4451 = vtanh.pop %v4419
        %v4452 = vtanh.pop %v4420
        %v4453 = vtanh.pop %v4421
        %v4454 = vtanh.pop %v4422
        %v4455 = vtanh.pop %v4423
        %v4456 = vadd.f32 %v4424, 1.0
        %v4457 = vadd.f32 %v4425, 1.0
        %v4458 = vadd.f32 %v4426, 1.0
        %v4459 = vadd.f32 %v4427, 1.0
        %v4460 = vadd.f32 %v4428, 1.0
        %v4461 = vadd.f32 %v4429, 1.0
        %v4462 = vadd.f32 %v4430, 1.0
        %v4463 = vadd.f32 %v4431, 1.0
        %v4464 = vadd.f32 %v4432, 1.0
        %v4465 = vadd.f32 %v4433, 1.0
        %v4466 = vadd.f32 %v4434, 1.0
        %v4467 = vadd.f32 %v4435, 1.0
        %v4468 = vadd.f32 %v4436, 1.0
        %v4469 = vadd.f32 %v4437, 1.0
        %v4470 = vadd.f32 %v4438, 1.0
        %v4471 = vadd.f32 %v4439, 1.0
        %v4472 = vadd.f32 %v4440, 1.0
        %v4473 = vadd.f32 %v4441, 1.0
        %v4474 = vadd.f32 %v4442, 1.0
        %v4475 = vadd.f32 %v4443, 1.0
        %v4476 = vadd.f32 %v4444, 1.0
        %v4477 = vadd.f32 %v4445, 1.0
        %v4478 = vadd.f32 %v4446, 1.0
        %v4479 = vadd.f32 %v4447, 1.0
        %v4480 = vadd.f32 %v4448, 1.0
        %v4481 = vadd.f32 %v4449, 1.0
        %v4482 = vadd.f32 %v4450, 1.0
        %v4483 = vadd.f32 %v4451, 1.0
        %v4484 = vadd.f32 %v4452, 1.0
        %v4485 = vadd.f32 %v4453, 1.0
        %v4486 = vadd.f32 %v4454, 1.0
        %v4487 = vadd.f32 %v4455, 1.0
        %v4488 = vmul.f32 %v4232, %v4456
        %v4489 = vmul.f32 %v4233, %v4457
        %v4490 = vmul.f32 %v4234, %v4458
        %v4491 = vmul.f32 %v4235, %v4459
        %v4492 = vmul.f32 %v4236, %v4460
        %v4493 = vmul.f32 %v4237, %v4461
        %v4494 = vmul.f32 %v4238, %v4462
        %v4495 = vmul.f32 %v4239, %v4463
        %v4496 = vmul.f32 %v4240, %v4464
        %v4497 = vmul.f32 %v4241, %v4465
        %v4498 = vmul.f32 %v4242, %v4466
        %v4499 = vmul.f32 %v4243, %v4467
        %v4500 = vmul.f32 %v4244, %v4468
        %v4501 = vmul.f32 %v4245, %v4469
        %v4502 = vmul.f32 %v4246, %v4470
        %v4503 = vmul.f32 %v4247, %v4471
        %v4504 = vmul.f32 %v4248, %v4472
        %v4505 = vmul.f32 %v4249, %v4473
        %v4506 = vmul.f32 %v4250, %v4474
        %v4507 = vmul.f32 %v4251, %v4475
        %v4508 = vmul.f32 %v4252, %v4476
        %v4509 = vmul.f32 %v4253, %v4477
        %v4510 = vmul.f32 %v4254, %v4478
        %v4511 = vmul.f32 %v4255, %v4479
        %v4512 = vmul.f32 %v4256, %v4480
        %v4513 = vmul.f32 %v4257, %v4481
        %v4514 = vmul.f32 %v4258, %v4482
        %v4515 = vmul.f32 %v4259, %v4483
        %v4516 = vmul.f32 %v4260, %v4484
        %v4517 = vmul.f32 %v4261, %v4485
        %v4518 = vmul.f32 %v4262, %v4486
        %v4519 = vmul.f32 %v4263, %v4487
        %v4520 = vpack.c.bf16 %v4490, %v4488
        %v4521 = vpack.c.bf16 %v4491, %v4489
        %v4522 = vpack.c.bf16 %v4494, %v4492
        %v4523 = vpack.c.bf16 %v4495, %v4493
        %v4524 = vpack.c.bf16 %v4498, %v4496
        %v4525 = vpack.c.bf16 %v4499, %v4497
        %v4526 = vpack.c.bf16 %v4502, %v4500
        %v4527 = vpack.c.bf16 %v4503, %v4501
        %v4528 = vpack.c.bf16 %v4506, %v4504
        %v4529 = vpack.c.bf16 %v4507, %v4505
        %v4530 = vpack.c.bf16 %v4510, %v4508
        %v4531 = vpack.c.bf16 %v4511, %v4509
        %v4532 = vpack.c.bf16 %v4514, %v4512
        %v4533 = vpack.c.bf16 %v4515, %v4513
        %v4534 = vpack.c.bf16 %v4518, %v4516
        %v4535 = vpack.c.bf16 %v4519, %v4517
        %v4536 = vld [vmem:[%s719] sm:$0xf]
        %v4537 = vld [vmem:[%s719 + $0x4] sm:$0xf]
        %v4538 = vld [vmem:[%s719 + $0x8] sm:$0xf]
        %v4539 = vld [vmem:[%s719 + $0xc] sm:$0xf]
        %v4540 = vld [vmem:[%s719 + $0x10] sm:$0xf]
        %v4541 = vld [vmem:[%s719 + $0x14] sm:$0xf]
        %v4542 = vld [vmem:[%s719 + $0x18] sm:$0xf]
        %v4543 = vld [vmem:[%s719 + $0x1c] sm:$0xf]
        %v4544 = vld [vmem:[%s719 + $0x20] sm:$0xf]
        %v4545 = vld [vmem:[%s719 + $0x24] sm:$0xf]
        %v4546 = vld [vmem:[%s719 + $0x28] sm:$0xf]
        %v4547 = vld [vmem:[%s719 + $0x2c] sm:$0xf]
        %v4548 = vld [vmem:[%s719 + $0x30] sm:$0xf]
        %v4549 = vld [vmem:[%s719 + $0x34] sm:$0xf]
        %v4550 = vld [vmem:[%s719 + $0x38] sm:$0xf]
        %v4551 = vld [vmem:[%s719 + $0x3c] sm:$0xf]
        %v4552 = vld [vmem:[%s719 + $0x40] sm:$0xf]
        %v4553 = vld [vmem:[%s719 + $0x44] sm:$0xf]
        %v4554 = vld [vmem:[%s719 + $0x48] sm:$0xf]
        %v4555 = vld [vmem:[%s719 + $0x4c] sm:$0xf]
        %v4556 = vld [vmem:[%s719 + $0x50] sm:$0xf]
        %v4557 = vld [vmem:[%s719 + $0x54] sm:$0xf]
        %v4558 = vld [vmem:[%s719 + $0x58] sm:$0xf]
        %v4559 = vld [vmem:[%s719 + $0x5c] sm:$0xf]
        %v4560 = vld [vmem:[%s719 + $0x60] sm:$0xf]
        %v4561 = vld [vmem:[%s719 + $0x64] sm:$0xf]
        %v4562 = vld [vmem:[%s719 + $0x68] sm:$0xf]
        %v4563 = vld [vmem:[%s719 + $0x6c] sm:$0xf]
        %v4564 = vld [vmem:[%s719 + $0x70] sm:$0xf]
        %v4565 = vld [vmem:[%s719 + $0x74] sm:$0xf]
        %v4566 = vld [vmem:[%s719 + $0x78] sm:$0xf]
        %v4567 = vld [vmem:[%s719 + $0x7c] sm:$0xf]
        %v4568 = vld [vmem:[%s833] sm:$0x1]
        %v4570 = vlaneseq
        %v4571 = vshrl.u32 %v4570, 7
        %v4572 = vsub.s32 0, %v4571
        %v4573 = vrot.slane %v4568, %v4572
        %v4607 = vunpack.c.l.b16 %v4536
        %v4608 = vunpack.c.l.b16 %v4537
        %v4609 = vunpack.c.l.b16 %v4538
        %v4610 = vunpack.c.l.b16 %v4539
        %v4611 = vunpack.c.l.b16 %v4540
        %v4612 = vunpack.c.l.b16 %v4541
        %v4613 = vunpack.c.l.b16 %v4542
        %v4614 = vunpack.c.l.b16 %v4543
        %v4615 = vunpack.c.l.b16 %v4544
        %v4616 = vunpack.c.l.b16 %v4545
        %v4617 = vunpack.c.l.b16 %v4546
        %v4618 = vunpack.c.l.b16 %v4547
        %v4619 = vunpack.c.l.b16 %v4548
        %v4620 = vunpack.c.l.b16 %v4549
        %v4621 = vunpack.c.l.b16 %v4550
        %v4622 = vunpack.c.l.b16 %v4551
        %v4623 = vunpack.c.l.b16 %v4552
        %v4624 = vunpack.c.l.b16 %v4553
        %v4625 = vunpack.c.l.b16 %v4554
        %v4626 = vunpack.c.l.b16 %v4555
        %v4627 = vunpack.c.l.b16 %v4556
        %v4628 = vunpack.c.l.b16 %v4557
        %v4629 = vunpack.c.l.b16 %v4558
        %v4630 = vunpack.c.l.b16 %v4559
        %v4631 = vunpack.c.l.b16 %v4560
        %v4632 = vunpack.c.l.b16 %v4561
        %v4633 = vunpack.c.l.b16 %v4562
        %v4634 = vunpack.c.l.b16 %v4563
        %v4635 = vunpack.c.l.b16 %v4564
        %v4636 = vunpack.c.l.b16 %v4565
        %v4637 = vunpack.c.l.b16 %v4566
        %v4638 = vunpack.c.l.b16 %v4567
        %v4639 = vpack.c.b16 %v4608, %v4607
        %v4640 = vpack.c.b16 %v4610, %v4609
        %v4641 = vpack.c.b16 %v4612, %v4611
        %v4642 = vpack.c.b16 %v4614, %v4613
        %v4643 = vpack.c.b16 %v4616, %v4615
        %v4644 = vpack.c.b16 %v4618, %v4617
        %v4645 = vpack.c.b16 %v4620, %v4619
        %v4646 = vpack.c.b16 %v4622, %v4621
        %v4647 = vpack.c.b16 %v4624, %v4623
        %v4648 = vpack.c.b16 %v4626, %v4625
        %v4649 = vpack.c.b16 %v4628, %v4627
        %v4650 = vpack.c.b16 %v4630, %v4629
        %v4651 = vpack.c.b16 %v4632, %v4631
        %v4652 = vpack.c.b16 %v4634, %v4633
        %v4653 = vpack.c.b16 %v4636, %v4635
        %v4654 = vpack.c.b16 %v4638, %v4637
        %4671 = vmatprep.subr.bf16.mxu0 0
        %4672 = vmatpush1.bf16.msra.mxu0 %v4639
        %4673 = vmatprep.subr.bf16.mxu0 0
        %4674 = vmatpush1.bf16.msra.mxu0 %v4640
        %4675 = vmatprep.subr.bf16.mxu0 0
        %4676 = vmatpush1.bf16.msra.mxu0 %v4641
        %4677 = vmatprep.subr.bf16.mxu0 0
        %4678 = vmatpush1.bf16.msra.mxu0 %v4642
        %4679 = vmatprep.subr.bf16.mxu0 0
        %4680 = vmatpush1.bf16.msra.mxu0 %v4643
        %4681 = vmatprep.subr.bf16.mxu0 0
        %4682 = vmatpush1.bf16.msra.mxu0 %v4644
        %4683 = vmatprep.subr.bf16.mxu0 0
        %4684 = vmatpush1.bf16.msra.mxu0 %v4645
        %4685 = vmatprep.subr.bf16.mxu0 0
        %4686 = vmatpush1.bf16.msra.mxu0 %v4646
        %4687 = vmatprep.subr.bf16.mxu0 0
        %4688 = vmatpush1.bf16.msra.mxu0 %v4647
        %4689 = vmatprep.subr.bf16.mxu0 0
        %4690 = vmatpush1.bf16.msra.mxu0 %v4648
        %4691 = vmatprep.subr.bf16.mxu0 0
        %4692 = vmatpush1.bf16.msra.mxu0 %v4649
        %4693 = vmatprep.subr.bf16.mxu0 0
        %4694 = vmatpush1.bf16.msra.mxu0 %v4650
        %4695 = vmatprep.subr.bf16.mxu0 0
        %4696 = vmatpush1.bf16.msra.mxu0 %v4651
        %4697 = vmatprep.subr.bf16.mxu0 0
        %4698 = vmatpush1.bf16.msra.mxu0 %v4652
        %4699 = vmatprep.subr.bf16.mxu0 0
        %4700 = vmatpush1.bf16.msra.mxu0 %v4653
        %4701 = vmatprep.subr.bf16.mxu0 0
        %4702 = vmatpush1.bf16.msra.mxu0 %v4654
        %4703 = vmatprep.mubr.bf16.mxu0 %v4521
        %4704 = vmatmul.mubr.bf16.gmra.mrb[0].mxu0 %v4520
        %v4705 = vpop.f32.mrb[0].mxu0
        %v4706 = vadd.f32 %v4573, %v4705
        %v4707 = vpop.f32.mrb[0].mxu0
        %v4708 = vpop.f32.mrb[0].mxu0
        %v4709 = vadd.f32 %v4573, %v4708
        %v4710 = vpop.f32.mrb[0].mxu0
        %4711 = vmatprep.mubr.bf16.mxu0 %v4523
        %4712 = vmatmul.mubr.bf16.gmra.mrb[0].mxu0 %v4522
        %v4713 = vpop.f32.mrb[0].mxu0
        %v4714 = vadd.f32 %v4573, %v4713
        %v4715 = vpop.f32.mrb[0].mxu0
        %v4716 = vpop.f32.mrb[0].mxu0
        %v4717 = vadd.f32 %v4573, %v4716
        %v4718 = vpop.f32.mrb[0].mxu0
        %4719 = vmatprep.mubr.bf16.mxu0 %v4525
        %4720 = vmatmul.mubr.bf16.gmra.mrb[0].mxu0 %v4524
        %v4721 = vpop.f32.mrb[0].mxu0
        %v4722 = vadd.f32 %v4573, %v4721
        %v4723 = vpop.f32.mrb[0].mxu0
        %v4724 = vpop.f32.mrb[0].mxu0
        %v4725 = vadd.f32 %v4573, %v4724
        %v4726 = vpop.f32.mrb[0].mxu0
        %4727 = vmatprep.mubr.bf16.mxu0 %v4527
        %4728 = vmatmul.mubr.bf16.gmra.mrb[0].mxu0 %v4526
        %v4729 = vpop.f32.mrb[0].mxu0
        %v4730 = vadd.f32 %v4573, %v4729
        %v4731 = vpop.f32.mrb[0].mxu0
        %v4732 = vpop.f32.mrb[0].mxu0
        %v4733 = vadd.f32 %v4573, %v4732
        %v4734 = vpop.f32.mrb[0].mxu0
        %4735 = vmatprep.mubr.bf16.mxu0 %v4529
        %4736 = vmatmul.mubr.bf16.gmra.mrb[0].mxu0 %v4528
        %v4737 = vpop.f32.mrb[0].mxu0
        %v4738 = vadd.f32 %v4573, %v4737
        %v4739 = vpop.f32.mrb[0].mxu0
        %v4740 = vpop.f32.mrb[0].mxu0
        %v4741 = vadd.f32 %v4573, %v4740
        %v4742 = vpop.f32.mrb[0].mxu0
        %4743 = vmatprep.mubr.bf16.mxu0 %v4531
        %4744 = vmatmul.mubr.bf16.gmra.mrb[0].mxu0 %v4530
        %v4745 = vpop.f32.mrb[0].mxu0
        %v4746 = vadd.f32 %v4573, %v4745
        %v4747 = vpop.f32.mrb[0].mxu0
        %v4748 = vpop.f32.mrb[0].mxu0
        %v4749 = vadd.f32 %v4573, %v4748
        %v4750 = vpop.f32.mrb[0].mxu0
        %4751 = vmatprep.mubr.bf16.mxu0 %v4533
        %4752 = vmatmul.mubr.bf16.gmra.mrb[0].mxu0 %v4532
        %v4753 = vpop.f32.mrb[0].mxu0
        %v4754 = vadd.f32 %v4573, %v4753
        %v4755 = vpop.f32.mrb[0].mxu0
        %v4756 = vpop.f32.mrb[0].mxu0
        %v4757 = vadd.f32 %v4573, %v4756
        %v4758 = vpop.f32.mrb[0].mxu0
        %4759 = vmatprep.mubr.bf16.mxu0 %v4535
        %4760 = vmatmul.mubr.bf16.gmra.mrb[0].mxu0 %v4534
        %v4761 = vpop.f32.mrb[0].mxu0
        %v4762 = vadd.f32 %v4573, %v4761
        %v4763 = vpop.f32.mrb[0].mxu0
        %v4764 = vpop.f32.mrb[0].mxu0
        %v4765 = vadd.f32 %v4573, %v4764
        %v4766 = vpop.f32.mrb[0].mxu0
        %4767 = vdwg.mxu0
        %v4768 = vadd.f32 %v3765, %v4706
        %v4769 = vadd.f32 %v3766, %v4709
        %v4770 = vadd.f32 %v3767, %v4714
        %v4771 = vadd.f32 %v3768, %v4717
        %v4772 = vadd.f32 %v3769, %v4722
        %v4773 = vadd.f32 %v3770, %v4725
        %v4774 = vadd.f32 %v3771, %v4730
        %v4775 = vadd.f32 %v3772, %v4733
        %v4776 = vadd.f32 %v3773, %v4738
        %v4777 = vadd.f32 %v3774, %v4741
        %v4778 = vadd.f32 %v3775, %v4746
        %v4779 = vadd.f32 %v3776, %v4749
        %v4780 = vadd.f32 %v3777, %v4754
        %v4781 = vadd.f32 %v3778, %v4757
        %v4782 = vadd.f32 %v3779, %v4762
        %v4783 = vadd.f32 %v3780, %v4765
        %4784 = vst [vmem:[#allocation2] sm:$0xff] %v4768
        %4785 = vst [vmem:[#allocation2 + $0x8] sm:$0xff] %v4769
        %4786 = vst [vmem:[#allocation2 + $0x10] sm:$0xff] %v4770
        %4787 = vst [vmem:[#allocation2 + $0x18] sm:$0xff] %v4771
        %4788 = vst [vmem:[#allocation2 + $0x20] sm:$0xff] %v4772
        %4789 = vst [vmem:[#allocation2 + $0x28] sm:$0xff] %v4773
        %4790 = vst [vmem:[#allocation2 + $0x30] sm:$0xff] %v4774
        %4791 = vst [vmem:[#allocation2 + $0x38] sm:$0xff] %v4775
        %4792 = vst [vmem:[#allocation2 + $0x40] sm:$0xff] %v4776
        %4793 = vst [vmem:[#allocation2 + $0x48] sm:$0xff] %v4777
        %4794 = vst [vmem:[#allocation2 + $0x50] sm:$0xff] %v4778
        %4795 = vst [vmem:[#allocation2 + $0x58] sm:$0xff] %v4779
        %4796 = vst [vmem:[#allocation2 + $0x60] sm:$0xff] %v4780
        %4797 = vst [vmem:[#allocation2 + $0x68] sm:$0xff] %v4781
        %4798 = vst [vmem:[#allocation2 + $0x70] sm:$0xff] %v4782
        %4799 = vst [vmem:[#allocation2 + $0x78] sm:$0xff] %v4783
        %p4800 = scmp.eq.s32.totalorder %s46, 1
        // Predicated region
        $region113: #{tpu_custom_call.1} parent=79 // pred_check
          %p4801 = pneg %p4800
        $region114: #{tpu_custom_call.1} parent=79 // pred_check_branch
          %4803 = sbr.rel (%p4801) target = $region116
        $region115: #{tpu_custom_call.1} parent=79 // pred_region
          %v4804 = vld [vmem:[%s13] sm:$0x1]
          %v4805 = vld [vmem:[%s14] sm:$0x1]
          %4806 = vadd.xlane.f32.xlu0 %v4768
          %v4807 = vpop.xlane.xlu0 %4806
          %4808 = vadd.xlane.f32.xlu0 %v4769
          %v4809 = vpop.xlane.xlu0 %4808
          %4810 = vadd.xlane.f32.xlu0 %v4770
          %v4811 = vpop.xlane.xlu0 %4810
          %4812 = vadd.xlane.f32.xlu0 %v4771
          %v4813 = vpop.xlane.xlu0 %4812
          %4814 = vadd.xlane.f32.xlu0 %v4772
          %v4815 = vpop.xlane.xlu0 %4814
          %4816 = vadd.xlane.f32.xlu0 %v4773
          %v4817 = vpop.xlane.xlu0 %4816
          %4818 = vadd.xlane.f32.xlu0 %v4774
          %v4819 = vpop.xlane.xlu0 %4818
          %4820 = vadd.xlane.f32.xlu0 %v4775
          %v4821 = vpop.xlane.xlu0 %4820
          %4822 = vadd.xlane.f32.xlu0 %v4776
          %v4823 = vpop.xlane.xlu0 %4822
          %4824 = vadd.xlane.f32.xlu0 %v4777
          %v4825 = vpop.xlane.xlu0 %4824
          %4826 = vadd.xlane.f32.xlu0 %v4778
          %v4827 = vpop.xlane.xlu0 %4826
          %4828 = vadd.xlane.f32.xlu0 %v4779
          %v4829 = vpop.xlane.xlu0 %4828
          %4830 = vadd.xlane.f32.xlu0 %v4780
          %v4831 = vpop.xlane.xlu0 %4830
          %4832 = vadd.xlane.f32.xlu0 %v4781
          %v4833 = vpop.xlane.xlu0 %4832
          %4834 = vadd.xlane.f32.xlu0 %v4782
          %v4835 = vpop.xlane.xlu0 %4834
          %4836 = vadd.xlane.f32.xlu0 %v4783
          %v4837 = vpop.xlane.xlu0 %4836
          %v4838 = vmul.f32 %v4807, %v921
          %v4839 = vmul.f32 %v4809, %v921
          %v4840 = vmul.f32 %v4811, %v921
          %v4841 = vmul.f32 %v4813, %v921
          %v4842 = vmul.f32 %v4815, %v921
          %v4843 = vmul.f32 %v4817, %v921
          %v4844 = vmul.f32 %v4819, %v921
          %v4845 = vmul.f32 %v4821, %v921
          %v4846 = vmul.f32 %v4823, %v921
          %v4847 = vmul.f32 %v4825, %v921
          %v4848 = vmul.f32 %v4827, %v921
          %v4849 = vmul.f32 %v4829, %v921
          %v4850 = vmul.f32 %v4831, %v921
          %v4851 = vmul.f32 %v4833, %v921
          %v4852 = vmul.f32 %v4835, %v921
          %v4853 = vmul.f32 %v4837, %v921
          %v4854 = vsub.f32 %v4768, %v4838
          %v4855 = vsub.f32 %v4769, %v4839
          %v4856 = vsub.f32 %v4770, %v4840
          %v4857 = vsub.f32 %v4771, %v4841
          %v4858 = vsub.f32 %v4772, %v4842
          %v4859 = vsub.f32 %v4773, %v4843
          %v4860 = vsub.f32 %v4774, %v4844
          %v4861 = vsub.f32 %v4775, %v4845
          %v4862 = vsub.f32 %v4776, %v4846
          %v4863 = vsub.f32 %v4777, %v4847
          %v4864 = vsub.f32 %v4778, %v4848
          %v4865 = vsub.f32 %v4779, %v4849
          %v4866 = vsub.f32 %v4780, %v4850
          %v4867 = vsub.f32 %v4781, %v4851
          %v4868 = vsub.f32 %v4782, %v4852
          %v4869 = vsub.f32 %v4783, %v4853
          %v4870 = vmul.f32 %v4854, %v4854
          %v4871 = vmul.f32 %v4855, %v4855
          %v4872 = vmul.f32 %v4856, %v4856
          %v4873 = vmul.f32 %v4857, %v4857
          %v4874 = vmul.f32 %v4858, %v4858
          %v4875 = vmul.f32 %v4859, %v4859
          %v4876 = vmul.f32 %v4860, %v4860
          %v4877 = vmul.f32 %v4861, %v4861
          %v4878 = vmul.f32 %v4862, %v4862
          %v4879 = vmul.f32 %v4863, %v4863
          %v4880 = vmul.f32 %v4864, %v4864
          %v4881 = vmul.f32 %v4865, %v4865
          %v4882 = vmul.f32 %v4866, %v4866
          %v4883 = vmul.f32 %v4867, %v4867
          %v4884 = vmul.f32 %v4868, %v4868
          %v4885 = vmul.f32 %v4869, %v4869
          %4886 = vadd.xlane.f32.xlu0 %v4870
          %v4887 = vpop.xlane.xlu0 %4886
          %4888 = vadd.xlane.f32.xlu0 %v4871
          %v4889 = vpop.xlane.xlu0 %4888
          %4890 = vadd.xlane.f32.xlu0 %v4872
          %v4891 = vpop.xlane.xlu0 %4890
          %4892 = vadd.xlane.f32.xlu0 %v4873
          %v4893 = vpop.xlane.xlu0 %4892
          %4894 = vadd.xlane.f32.xlu0 %v4874
          %v4895 = vpop.xlane.xlu0 %4894
          %4896 = vadd.xlane.f32.xlu0 %v4875
          %v4897 = vpop.xlane.xlu0 %4896
          %4898 = vadd.xlane.f32.xlu0 %v4876
          %v4899 = vpop.xlane.xlu0 %4898
          %4900 = vadd.xlane.f32.xlu0 %v4877
          %v4901 = vpop.xlane.xlu0 %4900
          %4902 = vadd.xlane.f32.xlu0 %v4878
          %v4903 = vpop.xlane.xlu0 %4902
          %4904 = vadd.xlane.f32.xlu0 %v4879
          %v4905 = vpop.xlane.xlu0 %4904
          %4906 = vadd.xlane.f32.xlu0 %v4880
          %v4907 = vpop.xlane.xlu0 %4906
          %4908 = vadd.xlane.f32.xlu0 %v4881
          %v4909 = vpop.xlane.xlu0 %4908
          %4910 = vadd.xlane.f32.xlu0 %v4882
          %v4911 = vpop.xlane.xlu0 %4910
          %4912 = vadd.xlane.f32.xlu0 %v4883
          %v4913 = vpop.xlane.xlu0 %4912
          %4914 = vadd.xlane.f32.xlu0 %v4884
          %v4915 = vpop.xlane.xlu0 %4914
          %4916 = vadd.xlane.f32.xlu0 %v4885
          %v4917 = vpop.xlane.xlu0 %4916
          %v4918 = vmul.f32 %v4887, %v921
          %v4919 = vmul.f32 %v4889, %v921
          %v4920 = vmul.f32 %v4891, %v921
          %v4921 = vmul.f32 %v4893, %v921
          %v4922 = vmul.f32 %v4895, %v921
          %v4923 = vmul.f32 %v4897, %v921
          %v4924 = vmul.f32 %v4899, %v921
          %v4925 = vmul.f32 %v4901, %v921
          %v4926 = vmul.f32 %v4903, %v921
          %v4927 = vmul.f32 %v4905, %v921
          %v4928 = vmul.f32 %v4907, %v921
          %v4929 = vmul.f32 %v4909, %v921
          %v4930 = vmul.f32 %v4911, %v921
          %v4931 = vmul.f32 %v4913, %v921
          %v4932 = vmul.f32 %v4915, %v921
          %v4933 = vmul.f32 %v4917, %v921
          %v4934 = vadd.f32 %v4918, 1e-06
          %v4935 = vadd.f32 %v4919, 1e-06
          %v4936 = vadd.f32 %v4920, 1e-06
          %v4937 = vadd.f32 %v4921, 1e-06
          %v4938 = vadd.f32 %v4922, 1e-06
          %v4939 = vadd.f32 %v4923, 1e-06
          %v4940 = vadd.f32 %v4924, 1e-06
          %v4941 = vadd.f32 %v4925, 1e-06
          %v4942 = vadd.f32 %v4926, 1e-06
          %v4943 = vadd.f32 %v4927, 1e-06
          %v4944 = vadd.f32 %v4928, 1e-06
          %v4945 = vadd.f32 %v4929, 1e-06
          %v4946 = vadd.f32 %v4930, 1e-06
          %v4947 = vadd.f32 %v4931, 1e-06
          %v4948 = vadd.f32 %v4932, 1e-06
          %v4949 = vadd.f32 %v4933, 1e-06
          %v4950 = vrsqrt.pop %v4934
          %v4951 = vrsqrt.pop %v4935
          %v4952 = vrsqrt.pop %v4936
          %v4953 = vrsqrt.pop %v4937
          %v4954 = vrsqrt.pop %v4938
          %v4955 = vrsqrt.pop %v4939
          %v4956 = vrsqrt.pop %v4940
          %v4957 = vrsqrt.pop %v4941
          %v4958 = vrsqrt.pop %v4942
          %v4959 = vrsqrt.pop %v4943
          %v4960 = vrsqrt.pop %v4944
          %v4961 = vrsqrt.pop %v4945
          %v4962 = vrsqrt.pop %v4946
          %v4963 = vrsqrt.pop %v4947
          %v4964 = vrsqrt.pop %v4948
          %v4965 = vrsqrt.pop %v4949
          %v4966 = vmul.f32 %v4854, %v4950
          %v4967 = vmul.f32 %v4855, %v4951
          %v4968 = vmul.f32 %v4856, %v4952
          %v4969 = vmul.f32 %v4857, %v4953
          %v4970 = vmul.f32 %v4858, %v4954
          %v4971 = vmul.f32 %v4859, %v4955
          %v4972 = vmul.f32 %v4860, %v4956
          %v4973 = vmul.f32 %v4861, %v4957
          %v4974 = vmul.f32 %v4862, %v4958
          %v4975 = vmul.f32 %v4863, %v4959
          %v4976 = vmul.f32 %v4864, %v4960
          %v4977 = vmul.f32 %v4865, %v4961
          %v4978 = vmul.f32 %v4866, %v4962
          %v4979 = vmul.f32 %v4867, %v4963
          %v4980 = vmul.f32 %v4868, %v4964
          %v4981 = vmul.f32 %v4869, %v4965
          %v4983 = vlaneseq
          %v4984 = vshrl.u32 %v4983, 7
          %v4985 = vsub.s32 0, %v4984
          %v4986 = vrot.slane %v4804, %v4985
          %v4988 = vmul.f32 %v4966, %v4986
          %v4989 = vmul.f32 %v4967, %v4986
          %v4990 = vmul.f32 %v4968, %v4986
          %v4991 = vmul.f32 %v4969, %v4986
          %v4992 = vmul.f32 %v4970, %v4986
          %v4993 = vmul.f32 %v4971, %v4986
          %v4994 = vmul.f32 %v4972, %v4986
          %v4995 = vmul.f32 %v4973, %v4986
          %v4996 = vmul.f32 %v4974, %v4986
          %v4997 = vmul.f32 %v4975, %v4986
          %v4998 = vmul.f32 %v4976, %v4986
          %v4999 = vmul.f32 %v4977, %v4986
          %v5000 = vmul.f32 %v4978, %v4986
          %v5001 = vmul.f32 %v4979, %v4986
          %v5002 = vmul.f32 %v4980, %v4986
          %v5003 = vmul.f32 %v4981, %v4986
          %v5005 = vlaneseq
          %v5006 = vshrl.u32 %v5005, 7
          %v5007 = vsub.s32 0, %v5006
          %v5008 = vrot.slane %v4805, %v5007
          %v5010 = vadd.f32 %v4988, %v5008
          %v5011 = vadd.f32 %v4989, %v5008
          %v5012 = vadd.f32 %v4990, %v5008
          %v5013 = vadd.f32 %v4991, %v5008
          %v5014 = vadd.f32 %v4992, %v5008
          %v5015 = vadd.f32 %v4993, %v5008
          %v5016 = vadd.f32 %v4994, %v5008
          %v5017 = vadd.f32 %v4995, %v5008
          %v5018 = vadd.f32 %v4996, %v5008
          %v5019 = vadd.f32 %v4997, %v5008
          %v5020 = vadd.f32 %v4998, %v5008
          %v5021 = vadd.f32 %v4999, %v5008
          %v5022 = vadd.f32 %v5000, %v5008
          %v5023 = vadd.f32 %v5001, %v5008
          %v5024 = vadd.f32 %v5002, %v5008
          %v5025 = vadd.f32 %v5003, %v5008
          %5026 = vst [vmem:[%s813] sm:$0xff] %v5010
          %5027 = vst [vmem:[%s813 + $0x8] sm:$0xff] %v5011
          %5028 = vst [vmem:[%s813 + $0x10] sm:$0xff] %v5012
          %5029 = vst [vmem:[%s813 + $0x18] sm:$0xff] %v5013
          %5030 = vst [vmem:[%s813 + $0x20] sm:$0xff] %v5014
          %5031 = vst [vmem:[%s813 + $0x28] sm:$0xff] %v5015
          %5032 = vst [vmem:[%s813 + $0x30] sm:$0xff] %v5016
          %5033 = vst [vmem:[%s813 + $0x38] sm:$0xff] %v5017
          %5034 = vst [vmem:[%s813 + $0x40] sm:$0xff] %v5018
          %5035 = vst [vmem:[%s813 + $0x48] sm:$0xff] %v5019
          %5036 = vst [vmem:[%s813 + $0x50] sm:$0xff] %v5020
          %5037 = vst [vmem:[%s813 + $0x58] sm:$0xff] %v5021
          %5038 = vst [vmem:[%s813 + $0x60] sm:$0xff] %v5022
          %5039 = vst [vmem:[%s813 + $0x68] sm:$0xff] %v5023
          %5040 = vst [vmem:[%s813 + $0x70] sm:$0xff] %v5024
          %5041 = vst [vmem:[%s813 + $0x78] sm:$0xff] %v5025
        $region116: #{tpu_custom_call.1} parent=79 // pred_fallthru
          _
        %s5042 = sand.u32 %s441, 1
        %s5043 = scalar_lea.sflag [#allocation6], %s5042
        %s5044 = sand.u32 %s441, 1
        %s5045 = smul.addr %s5044, 128
        %s5046 = scalar_lea.vmem [#allocation16], %s5045
        // Predicated region
        $region117: #{tpu_custom_call.1} parent=79 // pred_check
          %p5047 = pneg %p451
        $region118: #{tpu_custom_call.1} parent=79 // pred_check_branch
          %5049 = sbr.rel (%p5047) target = $region120
        $region119: #{tpu_custom_call.1} parent=79 // pred_region
          %s5051 = ssub.s32 2048, 2048
          %5052 = vsyncadd %s5043, %s5051
          %s5053 = smul.addr %s45, 16
          %s5054 = smul.addr %s5053, 128
          %s5055 = scalar_lea.hbm %s15, %s5054
          %s5056 = sshll.u32 %s5046, 4
          %s5057 = int_to_ptr.vmem [resolvable:$true] %s5056
          %5062 = dma.vmem_to_hbm [thread:$0]  %s5057, 2048, %s5055, %s5043, 128, 128, 8
        $region120: #{tpu_custom_call.1} parent=79 // pred_fallthru
          _
      $region80: #{tpu_custom_call.1} parent=5 // pred_fallthru
        _
      %p5063 = scmp.le.s32.totalorder 2, %s36
      // Predicated region
      $region121: #{tpu_custom_call.1} parent=5 // pred_check
        %p5064 = pneg %p5063
      $region122: #{tpu_custom_call.1} parent=5 // pred_check_branch
        %5066 = sbr.rel (%p5064) target = $region124
      $region123: #{tpu_custom_call.1} parent=5 // pred_region
        %s5067 = ssub.s32 %s36, 2
        // Predicated region
        $region125: #{tpu_custom_call.1} parent=123 // pred_check
          %p5068 = pneg %p457
        $region126: #{tpu_custom_call.1} parent=123 // pred_check_branch
          %5070 = sbr.rel (%p5068) target = $region128
        $region127: #{tpu_custom_call.1} parent=123 // pred_region
          %s5071 = sand.u32 %s442, 1
          %s5072 = scalar_lea.sflag [#allocation6], %s5071
          %s5073 = sand.u32 %s442, 1
          %s5074 = smul.addr %s5073, 128
          %s5075 = scalar_lea.vmem [#allocation16], %s5074
          %5076 = dma.done %s5072, 2048
        $region128: #{tpu_custom_call.1} parent=123 // pred_fallthru
          _
      $region124: #{tpu_custom_call.1} parent=5 // pred_fallthru
        _
    $region6: #{tpu_custom_call.1} parent=1 // loop_footer
      %s40 = sadd.s32 1, %s36
    $region7: #{tpu_custom_call.1} parent=1 // loop_footer_branch
      %35 = sbr.rel target = $region3
    $region8: #{tpu_custom_call.1} parent=1 // loop_exit
      _
    %5077 = vsyncpa [#allocation5], 1
    %s5078 = scalar_lea.sflag [#allocation5], 1
    %5079 = vsyncpa %s5078, 1
    %5080 = vsyncpa [#allocation8], 1
    %s5081 = scalar_lea.sflag [#allocation8], 1
    %5082 = vsyncpa %s5081, 1
    %5083 = vsyncpa [#allocation11], 1
    %s5084 = scalar_lea.sflag [#allocation11], 1
    %5085 = vsyncpa %s5084, 1
    %5086 = vsyncpa [#allocation14], 1
    %s5087 = scalar_lea.sflag [#allocation14], 1
    %5088 = vsyncpa %s5087, 1
    %5089 = vsyncpa [#allocation6], 1
    %s5090 = scalar_lea.sflag [#allocation6], 1
    %5091 = vsyncpa %s5090, 1

</llo_original>
